<compile_context>
chip_gen: v6e
topology: v6e:2x2x1
jax: 0.10.0
libtpu: 0.0.40
codegen_flags: <defaults>
</compile_context>

<pallas_src>
import math
import jax
import jax.numpy as jnp
from jax import lax
from jax.experimental import pallas as pl
from jax.experimental.pallas import tpu as pltpu

d_model = 96
n_head = 8
d_k = d_model // n_head          # 12
DKP = 128                        # per-head padded width (one lane-aligned slot)
HEAD_W = n_head * DKP            # 1024
TOT_W = 3 * HEAD_W               # 3072 fused Q / K / VFC output lanes
SCALE = 1.0 / math.sqrt(d_k)


def mha_kernel(x_ref, madd_ref, w_ref, b_ref, bout_ref, out_ref):
    bt, seq, _ = x_ref.shape
    m_rows = bt * seq

    # Fused Q / K / (V.Wfc) projection: single bf16 MXU pass, f32 accumulation.
    x_flat = x_ref[...].reshape(m_rows, d_model)
    qkv = jnp.dot(x_flat, w_ref[...], preferred_element_type=jnp.float32)
    qkv = (qkv + b_ref[...]).reshape(bt, seq, TOT_W)

    # Key-side additive mask, broadcast ONCE (hoisted out of the head loop).
    madd = jnp.broadcast_to(madd_ref[...], (bt, seq, seq))

    acc = jnp.zeros((bt, seq, DKP), jnp.float32)
    for h in range(n_head):                       # static unroll; 128-aligned slices
        qh = qkv[:, :, h * DKP:(h + 1) * DKP].astype(jnp.bfloat16)
        kh = qkv[:, :, HEAD_W + h * DKP:HEAD_W + (h + 1) * DKP].astype(jnp.bfloat16)
        xvh = qkv[:, :, 2 * HEAD_W + h * DKP:2 * HEAD_W + (h + 1) * DKP].astype(jnp.bfloat16)

        # s[b,q,k] = sum_d qh[b,q,d] * kh[b,k,d]  (1/sqrt(d_k) pre-folded into Wq)
        s = lax.dot_general(qh, kh, (((2,), (2,)), ((0,), (0,))),
                            preferred_element_type=jnp.float32)        # (BT, L, L)
        s = s + madd
        s = s - jnp.max(s, axis=-1, keepdims=True)
        p = jnp.exp(s)
        p = p * pl.reciprocal(jnp.sum(p, axis=-1, keepdims=True), approx=True)

        # out_h = p @ (x @ Wvfc_h): output projection already folded in.
        acc = acc + lax.dot_general(p.astype(jnp.bfloat16), xvh,
                                    (((2,), (1,)), ((0,), (0,))),
                                    preferred_element_type=jnp.float32)  # (BT, L, 128)

    out_ref[...] = acc[:, :, :d_model] + bout_ref[...]


def _pack_qk(w, b, scale=1.0):
    """(d_model, d_model)/(1, d_model) -> per-head 128-lane slots (d_k real + zero pad)."""
    w3 = jnp.pad((w * scale).reshape(d_model, n_head, d_k),
                 ((0, 0), (0, 0), (0, DKP - d_k)))
    b3 = jnp.pad((b * scale).reshape(1, n_head, d_k),
                 ((0, 0), (0, 0), (0, DKP - d_k)))
    return w3.reshape(d_model, HEAD_W), b3.reshape(1, HEAD_W)


def _pack_vfc(wv, wfc):
    """Fold Wv_h @ Wfc_h into a per-head (d_model, d_model) weight, 128-lane slots."""
    wv3 = wv.reshape(d_model, n_head, d_k)                       # (96, 8, 12)
    wfc3 = wfc.reshape(n_head, d_k, d_model)                     # (8, 12, 96)
    wvfc = jnp.einsum('dhk,hke->hde', wv3, wfc3)                 # (8, 96, 96)
    wvfc = jnp.pad(wvfc, ((0, 0), (0, 0), (0, DKP - d_model)))   # (8, 96, 128)
    return jnp.transpose(wvfc, (1, 0, 2)).reshape(d_model, HEAD_W)


def _pick_b_tile(bs, l_x, target_rows=256, min_steps=2):
    """Largest divisor of bs with b_tile*l_x <= target_rows, but keep >= min_steps
    grid steps when bs allows (v7x has two TensorCores to feed)."""
    divisors = [d for d in range(1, bs + 1) if bs % d == 0]
    want = max(1, target_rows // max(l_x, 1))
    fitting = [d for d in divisors if d <= want] or [1]
    b_tile = max(fitting)
    while bs // b_tile < min_steps and b_tile > 1:
        smaller = [d for d in divisors if d < b_tile]
        b_tile = max(smaller) if smaller else 1
    return b_tile


def multi_head_attention(x_ncl, mask, params):
    """x_ncl: (bs, d_model, l_x), mask: (bs, l_x) with 1 == masked. Returns (bs, d_model, l_x)."""
    bs, dm, l_x = x_ncl.shape
    assert dm == d_model
    wq, bq, wk, bk, wv, bv, wfc, bfc = params

    x = jnp.transpose(x_ncl, (0, 2, 1)).astype(jnp.bfloat16)          # (bs, l_x, d_model)
    m_add = (mask.astype(jnp.float32) * jnp.float32(-1e30)).reshape(bs, 1, l_x)

    # One-time weight packing (constant-folded under jit).
    wq_p, bq_p = _pack_qk(wq, bq, scale=SCALE)     # scale folded into Q
    wk_p, bk_p = _pack_qk(wk, bk)
    w_vfc = _pack_vfc(wv, wfc)
    w_all = jnp.concatenate([wq_p, wk_p, w_vfc], axis=1).astype(jnp.bfloat16)   # (96, 3072)
    b_all = jnp.concatenate(
        [bq_p, bk_p, jnp.zeros((1, HEAD_W), jnp.float32)], axis=1)              # (1, 3072)
    # Softmax rows sum to 1, so the V bias routed through fc is a constant row bias.
    b_out = (bv[0] @ wfc + bfc[0]).reshape(1, d_model).astype(jnp.float32)      # (1, 96)

    b_tile = _pick_b_tile(bs, l_x)
    nb = bs // b_tile
    m_rows = bs * l_x

    flops = (2 * m_rows * d_model * TOT_W
             + n_head * 2 * (2 * bs * l_x * l_x * DKP))
    transcendentals = n_head * bs * l_x * (l_x + 1)      # exp + reciprocal
    bytes_accessed = (2 * (x.size + w_all.size)
                      + 4 * (m_add.size + b_all.size + b_out.size + m_rows * d_model))

    vmem_est = (2 * b_tile * l_x * (d_model * 2 + l_x * 4 + d_model * 4)   # x/mask/out (dbl-buf)
                + w_all.size * 2 + b_all.size * 4 + b_out.size * 4         # single-buffered consts
                + b_tile * l_x * TOT_W * 4                                 # f32 qkv intermediate
                + 4 * b_tile * l_x * l_x * 4                               # live score/p tiles
                + b_tile * l_x * DKP * 4)                                  # accumulator
    vmem_limit = int(min(100 * 1024 * 1024, max(16 * 1024 * 1024, 4 * vmem_est)))

    def call(single_buffer_weights):
        def const_spec(shape):
            idx = lambda b, _n=len(shape): (0,) * _n
            if single_buffer_weights:
                return pl.BlockSpec(shape, idx, pipeline_mode=pl.Buffered(1))
            return pl.BlockSpec(shape, idx)

        return pl.pallas_call(
            mha_kernel,
            out_shape=jax.ShapeDtypeStruct((bs, l_x, d_model), jnp.float32),
            grid_spec=pltpu.PrefetchScalarGridSpec(
                num_scalar_prefetch=0,
                grid=(nb,),
                in_specs=[
                    pl.BlockSpec((b_tile, l_x, d_model), lambda b: (b, 0, 0)),  # x (bf16)
                    pl.BlockSpec((b_tile, 1, l_x), lambda b: (b, 0, 0)),        # additive mask
                    const_spec((d_model, TOT_W)),                               # fused Q/K/VFC weight
                    const_spec((1, TOT_W)),                                     # fused bias
                    const_spec((1, d_model)),                                   # folded output bias
                ],
                out_specs=pl.BlockSpec((b_tile, l_x, d_model), lambda b: (b, 0, 0)),
            ),
            compiler_params=pltpu.CompilerParams(
                dimension_semantics=("parallel",),
                vmem_limit_bytes=vmem_limit),
            cost_estimate=pl.CostEstimate(
                flops=int(flops),
                transcendentals=int(transcendentals),
                bytes_accessed=int(bytes_accessed)),
        )(x, m_add, w_all, b_all, b_out)

    try:
        out = call(single_buffer_weights=True)
    except Exception:
        # Fallback for jax versions that reject pipeline_mode=pl.Buffered(1).
        out = call(single_buffer_weights=False)

    return jnp.transpose(out, (0, 2, 1))                             # (bs, d_model, l_x)


def reference(x_ncl, mask, params):
    """Plain-JAX f32 reproduction of the PyTorch forward (eval mode) for checking."""
    wq, bq, wk, bk, wv, bv, wfc, bfc = params
    bs, dm, l_x = x_ncl.shape
    x = jnp.transpose(x_ncl, (0, 2, 1))                              # (bs, l_x, d_model)
    q = x @ wq + bq[0]
    k = x @ wk + bk[0]
    v = x @ wv + bv[0]

    def split(t):
        return jnp.transpose(t.reshape(bs, l_x, n_head, d_k), (2, 0, 1, 3))

    qh, kh, vh = split(q), split(k), split(v)
    attn = jnp.einsum('hbqd,hbkd->hbqk', qh, kh) * SCALE
    m = mask.astype(jnp.float32)[None, :, None, :]                   # (1, bs, 1, l_x)
    attn = attn * (1.0 - m) + m * (-1e30)
    attn = jax.nn.softmax(attn, axis=-1)
    out = jnp.einsum('hbqk,hbkd->hbqd', attn, vh)                    # (n_head, bs, l_x, d_k)
    out = jnp.transpose(out, (1, 2, 0, 3)).reshape(bs, l_x, d_model)
    out = out @ wfc + bfc[0]
    return jnp.transpose(out, (0, 2, 1))                             # (bs, d_model, l_x)


def init_params(key):
    keys = jax.random.split(key, 8)

    def lin(kw, kb):
        w = jax.random.normal(kw, (d_model, d_model), jnp.float32) * 0.05
        b = jax.random.normal(kb, (1, d_model), jnp.float32) * 0.05
        return w, b

    wq, bq = lin(keys[0], keys[1])
    wk, bk = lin(keys[2], keys[3])
    wv, bv = lin(keys[4], keys[5])
    wfc, bfc = lin(keys[6], keys[7])
    return (wq, bq, wk, bk, wv, bv, wfc, bfc)


if __name__ == "__main__":
    key = jax.random.PRNGKey(0)
    k_x, k_m, k_p = jax.random.split(key, 3)

    bs, l_x = 2, 8
    x = jax.random.normal(k_x, (bs, d_model, l_x), jnp.float32)       # (bs, d_model, l_x)
    # binary mask, 1 == position masked out (as in mask_logits)
    mask = (jax.random.uniform(k_m, (bs, l_x)) < 0.3).astype(jnp.float32)
    # ensure at least one unmasked key per row so softmax is well-defined
    mask = mask.at[:, 0].set(0.0)

    params = init_params(k_p)

    out = jax.block_until_ready(multi_head_attention(x, mask, params))
    ref = jax.block_until_ready(reference(x, mask, params))

    assert out.shape == (bs, d_model, l_x)
    # Tolerance covers bf16 weight/activation storage and the approximate (EUP)
    # softmax reciprocal; all accumulation and softmax math is f32.
    assert jnp.allclose(out, ref, atol=2e-2, rtol=2e-2), "mismatch vs reference"
    print("KERNEL_OK")
</pallas_src>

<mosaic_0001>
module attributes {stable_mosaic.version = 11 : i64} {
  func.func @mha_kernel(%arg0: i32, %arg1: memref<1x8x96xbf16, #tpu.memory_space<vmem>>, %arg2: memref<1x1x8xf32, #tpu.memory_space<vmem>>, %arg3: memref<96x3072xbf16, #tpu.memory_space<vmem>>, %arg4: memref<1x3072xf32, #tpu.memory_space<vmem>>, %arg5: memref<1x96xf32, #tpu.memory_space<vmem>>, %arg6: memref<1x8x96xf32, #tpu.memory_space<vmem>>) attributes {dimension_semantics = [#tpu.dimension_semantics<parallel>], iteration_bounds = array<i64: 2>, scalar_prefetch = 0 : i64, scratch_operands = 0 : i64, tpu.core_type = #tpu.core_type<tc>, window_params = [{transform_indices = @transform_0, window_bounds = array<i64: 1, 8, 96>}, {transform_indices = @transform_1, window_bounds = array<i64: 1, 1, 8>}, {pipeline_mode = #tpu.pipeline_mode<synchronous>, transform_indices = @transform_2, window_bounds = array<i64: 96, 3072>}, {pipeline_mode = #tpu.pipeline_mode<synchronous>, transform_indices = @transform_3, window_bounds = array<i64: 1, 3072>}, {pipeline_mode = #tpu.pipeline_mode<synchronous>, transform_indices = @transform_4, window_bounds = array<i64: 1, 96>}, {transform_indices = @transform_5, window_bounds = array<i64: 1, 8, 96>}]} {
    %c0 = arith.constant 0 : index
    %c0_0 = arith.constant 0 : index
    %c0_1 = arith.constant 0 : index
    %0 = vector.load %arg1[%c0, %c0_0, %c0_1] : memref<1x8x96xbf16, #tpu.memory_space<vmem>>, vector<1x8x96xbf16>
    %1 = vector.shape_cast %0 : vector<1x8x96xbf16> to vector<8x96xbf16>
    %c0_2 = arith.constant 0 : index
    %c0_3 = arith.constant 0 : index
    %2 = vector.load %arg3[%c0_2, %c0_3] : memref<96x3072xbf16, #tpu.memory_space<vmem>>, vector<96x3072xbf16>
    %cst = arith.constant dense<0.000000e+00> : vector<8x3072xf32>
    %3 = tpu.matmul %1, %2, %cst {dimension_numbers = #tpu.dot_dimension_numbers<[1], [0], [0], [1], [0, 0, 1, 1], [], []>} : vector<8x96xbf16>, vector<96x3072xbf16>, vector<8x3072xf32> -> vector<8x3072xf32>
    %c0_4 = arith.constant 0 : index
    %c0_5 = arith.constant 0 : index
    %4 = vector.load %arg4[%c0_4, %c0_5] : memref<1x3072xf32, #tpu.memory_space<vmem>>, vector<1x3072xf32>
    %5 = vector.broadcast %4 : vector<1x3072xf32> to vector<8x3072xf32>
    %6 = arith.addf %3, %5 : vector<8x3072xf32>
    %7 = vector.shape_cast %6 : vector<8x3072xf32> to vector<1x8x3072xf32>
    %c0_6 = arith.constant 0 : index
    %c0_7 = arith.constant 0 : index
    %c0_8 = arith.constant 0 : index
    %8 = vector.load %arg2[%c0_6, %c0_7, %c0_8] : memref<1x1x8xf32, #tpu.memory_space<vmem>>, vector<1x1x8xf32>
    %9 = vector.shape_cast %8 : vector<1x1x8xf32> to vector<1x1x8xf32>
    %10 = vector.broadcast %9 : vector<1x1x8xf32> to vector<1x8x8xf32>
    %cst_9 = arith.constant 0.000000e+00 : f32
    %11 = vector.broadcast %cst_9 : f32 to vector<1x8x128xf32>
    %12 = vector.extract_strided_slice %7 {offsets = [0, 0, 0], sizes = [1, 8, 128], strides = [1, 1, 1]} : vector<1x8x3072xf32> to vector<1x8x128xf32>
    %13 = arith.truncf %12 : vector<1x8x128xf32> to vector<1x8x128xbf16>
    %14 = vector.extract_strided_slice %7 {offsets = [0, 0, 1024], sizes = [1, 8, 128], strides = [1, 1, 1]} : vector<1x8x3072xf32> to vector<1x8x128xf32>
    %15 = arith.truncf %14 : vector<1x8x128xf32> to vector<1x8x128xbf16>
    %16 = vector.extract_strided_slice %7 {offsets = [0, 0, 2048], sizes = [1, 8, 128], strides = [1, 1, 1]} : vector<1x8x3072xf32> to vector<1x8x128xf32>
    %17 = arith.truncf %16 : vector<1x8x128xf32> to vector<1x8x128xbf16>
    %cst_10 = arith.constant dense<0.000000e+00> : vector<1x8x8xf32>
    %18 = tpu.matmul %13, %15, %cst_10 {dimension_numbers = #tpu.dot_dimension_numbers<[2], [2], [1], [1], [0, 0, 0, 1, 1, 1], [0], [0]>} : vector<1x8x128xbf16>, vector<1x8x128xbf16>, vector<1x8x8xf32> -> vector<1x8x8xf32>
    %19 = arith.addf %18, %10 : vector<1x8x8xf32>
    %cst_11 = arith.constant dense<0xFF800000> : vector<1x8xf32>
    %20 = vector.multi_reduction <maximumf>, %19, %cst_11 [2] : vector<1x8x8xf32> to vector<1x8xf32>
    %21 = vector.shape_cast %20 : vector<1x8xf32> to vector<1x8x1xf32>
    %22 = vector.broadcast %21 : vector<1x8x1xf32> to vector<1x8x8xf32>
    %23 = arith.subf %19, %22 : vector<1x8x8xf32>
    %24 = math.exp %23 : vector<1x8x8xf32>
    %cst_12 = arith.constant dense<0.000000e+00> : vector<1x8xf32>
    %25 = vector.multi_reduction <add>, %24, %cst_12 [2] : vector<1x8x8xf32> to vector<1x8xf32>
    %26 = vector.shape_cast %25 : vector<1x8xf32> to vector<1x8x1xf32>
    %27 = tpu.reciprocal %26 {approx = true} : vector<1x8x1xf32> -> vector<1x8x1xf32>
    %28 = vector.broadcast %27 : vector<1x8x1xf32> to vector<1x8x8xf32>
    %29 = arith.mulf %24, %28 : vector<1x8x8xf32>
    %30 = arith.truncf %29 : vector<1x8x8xf32> to vector<1x8x8xbf16>
    %cst_13 = arith.constant dense<0.000000e+00> : vector<1x8x128xf32>
    %31 = tpu.matmul %30, %17, %cst_13 {dimension_numbers = #tpu.dot_dimension_numbers<[2], [1], [1], [2], [0, 0, 0, 1, 1, 2], [0], [0]>} : vector<1x8x8xbf16>, vector<1x8x128xbf16>, vector<1x8x128xf32> -> vector<1x8x128xf32>
    %32 = arith.addf %11, %31 : vector<1x8x128xf32>
    %33 = vector.extract_strided_slice %7 {offsets = [0, 0, 128], sizes = [1, 8, 128], strides = [1, 1, 1]} : vector<1x8x3072xf32> to vector<1x8x128xf32>
    %34 = arith.truncf %33 : vector<1x8x128xf32> to vector<1x8x128xbf16>
    %35 = vector.extract_strided_slice %7 {offsets = [0, 0, 1152], sizes = [1, 8, 128], strides = [1, 1, 1]} : vector<1x8x3072xf32> to vector<1x8x128xf32>
    %36 = arith.truncf %35 : vector<1x8x128xf32> to vector<1x8x128xbf16>
    %37 = vector.extract_strided_slice %7 {offsets = [0, 0, 2176], sizes = [1, 8, 128], strides = [1, 1, 1]} : vector<1x8x3072xf32> to vector<1x8x128xf32>
    %38 = arith.truncf %37 : vector<1x8x128xf32> to vector<1x8x128xbf16>
    %cst_14 = arith.constant dense<0.000000e+00> : vector<1x8x8xf32>
    %39 = tpu.matmul %34, %36, %cst_14 {dimension_numbers = #tpu.dot_dimension_numbers<[2], [2], [1], [1], [0, 0, 0, 1, 1, 1], [0], [0]>} : vector<1x8x128xbf16>, vector<1x8x128xbf16>, vector<1x8x8xf32> -> vector<1x8x8xf32>
    %40 = arith.addf %39, %10 : vector<1x8x8xf32>
    %cst_15 = arith.constant dense<0xFF800000> : vector<1x8xf32>
    %41 = vector.multi_reduction <maximumf>, %40, %cst_15 [2] : vector<1x8x8xf32> to vector<1x8xf32>
    %42 = vector.shape_cast %41 : vector<1x8xf32> to vector<1x8x1xf32>
    %43 = vector.broadcast %42 : vector<1x8x1xf32> to vector<1x8x8xf32>
    %44 = arith.subf %40, %43 : vector<1x8x8xf32>
    %45 = math.exp %44 : vector<1x8x8xf32>
    %cst_16 = arith.constant dense<0.000000e+00> : vector<1x8xf32>
    %46 = vector.multi_reduction <add>, %45, %cst_16 [2] : vector<1x8x8xf32> to vector<1x8xf32>
    %47 = vector.shape_cast %46 : vector<1x8xf32> to vector<1x8x1xf32>
    %48 = tpu.reciprocal %47 {approx = true} : vector<1x8x1xf32> -> vector<1x8x1xf32>
    %49 = vector.broadcast %48 : vector<1x8x1xf32> to vector<1x8x8xf32>
    %50 = arith.mulf %45, %49 : vector<1x8x8xf32>
    %51 = arith.truncf %50 : vector<1x8x8xf32> to vector<1x8x8xbf16>
    %cst_17 = arith.constant dense<0.000000e+00> : vector<1x8x128xf32>
    %52 = tpu.matmul %51, %38, %cst_17 {dimension_numbers = #tpu.dot_dimension_numbers<[2], [1], [1], [2], [0, 0, 0, 1, 1, 2], [0], [0]>} : vector<1x8x8xbf16>, vector<1x8x128xbf16>, vector<1x8x128xf32> -> vector<1x8x128xf32>
    %53 = arith.addf %32, %52 : vector<1x8x128xf32>
    %54 = vector.extract_strided_slice %7 {offsets = [0, 0, 256], sizes = [1, 8, 128], strides = [1, 1, 1]} : vector<1x8x3072xf32> to vector<1x8x128xf32>
    %55 = arith.truncf %54 : vector<1x8x128xf32> to vector<1x8x128xbf16>
    %56 = vector.extract_strided_slice %7 {offsets = [0, 0, 1280], sizes = [1, 8, 128], strides = [1, 1, 1]} : vector<1x8x3072xf32> to vector<1x8x128xf32>
    %57 = arith.truncf %56 : vector<1x8x128xf32> to vector<1x8x128xbf16>
    %58 = vector.extract_strided_slice %7 {offsets = [0, 0, 2304], sizes = [1, 8, 128], strides = [1, 1, 1]} : vector<1x8x3072xf32> to vector<1x8x128xf32>
    %59 = arith.truncf %58 : vector<1x8x128xf32> to vector<1x8x128xbf16>
    %cst_18 = arith.constant dense<0.000000e+00> : vector<1x8x8xf32>
    %60 = tpu.matmul %55, %57, %cst_18 {dimension_numbers = #tpu.dot_dimension_numbers<[2], [2], [1], [1], [0, 0, 0, 1, 1, 1], [0], [0]>} : vector<1x8x128xbf16>, vector<1x8x128xbf16>, vector<1x8x8xf32> -> vector<1x8x8xf32>
    %61 = arith.addf %60, %10 : vector<1x8x8xf32>
    %cst_19 = arith.constant dense<0xFF800000> : vector<1x8xf32>
    %62 = vector.multi_reduction <maximumf>, %61, %cst_19 [2] : vector<1x8x8xf32> to vector<1x8xf32>
    %63 = vector.shape_cast %62 : vector<1x8xf32> to vector<1x8x1xf32>
    %64 = vector.broadcast %63 : vector<1x8x1xf32> to vector<1x8x8xf32>
    %65 = arith.subf %61, %64 : vector<1x8x8xf32>
    %66 = math.exp %65 : vector<1x8x8xf32>
    %cst_20 = arith.constant dense<0.000000e+00> : vector<1x8xf32>
    %67 = vector.multi_reduction <add>, %66, %cst_20 [2] : vector<1x8x8xf32> to vector<1x8xf32>
    %68 = vector.shape_cast %67 : vector<1x8xf32> to vector<1x8x1xf32>
    %69 = tpu.reciprocal %68 {approx = true} : vector<1x8x1xf32> -> vector<1x8x1xf32>
    %70 = vector.broadcast %69 : vector<1x8x1xf32> to vector<1x8x8xf32>
    %71 = arith.mulf %66, %70 : vector<1x8x8xf32>
    %72 = arith.truncf %71 : vector<1x8x8xf32> to vector<1x8x8xbf16>
    %cst_21 = arith.constant dense<0.000000e+00> : vector<1x8x128xf32>
    %73 = tpu.matmul %72, %59, %cst_21 {dimension_numbers = #tpu.dot_dimension_numbers<[2], [1], [1], [2], [0, 0, 0, 1, 1, 2], [0], [0]>} : vector<1x8x8xbf16>, vector<1x8x128xbf16>, vector<1x8x128xf32> -> vector<1x8x128xf32>
    %74 = arith.addf %53, %73 : vector<1x8x128xf32>
    %75 = vector.extract_strided_slice %7 {offsets = [0, 0, 384], sizes = [1, 8, 128], strides = [1, 1, 1]} : vector<1x8x3072xf32> to vector<1x8x128xf32>
    %76 = arith.truncf %75 : vector<1x8x128xf32> to vector<1x8x128xbf16>
    %77 = vector.extract_strided_slice %7 {offsets = [0, 0, 1408], sizes = [1, 8, 128], strides = [1, 1, 1]} : vector<1x8x3072xf32> to vector<1x8x128xf32>
    %78 = arith.truncf %77 : vector<1x8x128xf32> to vector<1x8x128xbf16>
    %79 = vector.extract_strided_slice %7 {offsets = [0, 0, 2432], sizes = [1, 8, 128], strides = [1, 1, 1]} : vector<1x8x3072xf32> to vector<1x8x128xf32>
    %80 = arith.truncf %79 : vector<1x8x128xf32> to vector<1x8x128xbf16>
    %cst_22 = arith.constant dense<0.000000e+00> : vector<1x8x8xf32>
    %81 = tpu.matmul %76, %78, %cst_22 {dimension_numbers = #tpu.dot_dimension_numbers<[2], [2], [1], [1], [0, 0, 0, 1, 1, 1], [0], [0]>} : vector<1x8x128xbf16>, vector<1x8x128xbf16>, vector<1x8x8xf32> -> vector<1x8x8xf32>
    %82 = arith.addf %81, %10 : vector<1x8x8xf32>
    %cst_23 = arith.constant dense<0xFF800000> : vector<1x8xf32>
    %83 = vector.multi_reduction <maximumf>, %82, %cst_23 [2] : vector<1x8x8xf32> to vector<1x8xf32>
    %84 = vector.shape_cast %83 : vector<1x8xf32> to vector<1x8x1xf32>
    %85 = vector.broadcast %84 : vector<1x8x1xf32> to vector<1x8x8xf32>
    %86 = arith.subf %82, %85 : vector<1x8x8xf32>
    %87 = math.exp %86 : vector<1x8x8xf32>
    %cst_24 = arith.constant dense<0.000000e+00> : vector<1x8xf32>
    %88 = vector.multi_reduction <add>, %87, %cst_24 [2] : vector<1x8x8xf32> to vector<1x8xf32>
    %89 = vector.shape_cast %88 : vector<1x8xf32> to vector<1x8x1xf32>
    %90 = tpu.reciprocal %89 {approx = true} : vector<1x8x1xf32> -> vector<1x8x1xf32>
    %91 = vector.broadcast %90 : vector<1x8x1xf32> to vector<1x8x8xf32>
    %92 = arith.mulf %87, %91 : vector<1x8x8xf32>
    %93 = arith.truncf %92 : vector<1x8x8xf32> to vector<1x8x8xbf16>
    %cst_25 = arith.constant dense<0.000000e+00> : vector<1x8x128xf32>
    %94 = tpu.matmul %93, %80, %cst_25 {dimension_numbers = #tpu.dot_dimension_numbers<[2], [1], [1], [2], [0, 0, 0, 1, 1, 2], [0], [0]>} : vector<1x8x8xbf16>, vector<1x8x128xbf16>, vector<1x8x128xf32> -> vector<1x8x128xf32>
    %95 = arith.addf %74, %94 : vector<1x8x128xf32>
    %96 = vector.extract_strided_slice %7 {offsets = [0, 0, 512], sizes = [1, 8, 128], strides = [1, 1, 1]} : vector<1x8x3072xf32> to vector<1x8x128xf32>
    %97 = arith.truncf %96 : vector<1x8x128xf32> to vector<1x8x128xbf16>
    %98 = vector.extract_strided_slice %7 {offsets = [0, 0, 1536], sizes = [1, 8, 128], strides = [1, 1, 1]} : vector<1x8x3072xf32> to vector<1x8x128xf32>
    %99 = arith.truncf %98 : vector<1x8x128xf32> to vector<1x8x128xbf16>
    %100 = vector.extract_strided_slice %7 {offsets = [0, 0, 2560], sizes = [1, 8, 128], strides = [1, 1, 1]} : vector<1x8x3072xf32> to vector<1x8x128xf32>
    %101 = arith.truncf %100 : vector<1x8x128xf32> to vector<1x8x128xbf16>
    %cst_26 = arith.constant dense<0.000000e+00> : vector<1x8x8xf32>
    %102 = tpu.matmul %97, %99, %cst_26 {dimension_numbers = #tpu.dot_dimension_numbers<[2], [2], [1], [1], [0, 0, 0, 1, 1, 1], [0], [0]>} : vector<1x8x128xbf16>, vector<1x8x128xbf16>, vector<1x8x8xf32> -> vector<1x8x8xf32>
    %103 = arith.addf %102, %10 : vector<1x8x8xf32>
    %cst_27 = arith.constant dense<0xFF800000> : vector<1x8xf32>
    %104 = vector.multi_reduction <maximumf>, %103, %cst_27 [2] : vector<1x8x8xf32> to vector<1x8xf32>
    %105 = vector.shape_cast %104 : vector<1x8xf32> to vector<1x8x1xf32>
    %106 = vector.broadcast %105 : vector<1x8x1xf32> to vector<1x8x8xf32>
    %107 = arith.subf %103, %106 : vector<1x8x8xf32>
    %108 = math.exp %107 : vector<1x8x8xf32>
    %cst_28 = arith.constant dense<0.000000e+00> : vector<1x8xf32>
    %109 = vector.multi_reduction <add>, %108, %cst_28 [2] : vector<1x8x8xf32> to vector<1x8xf32>
    %110 = vector.shape_cast %109 : vector<1x8xf32> to vector<1x8x1xf32>
    %111 = tpu.reciprocal %110 {approx = true} : vector<1x8x1xf32> -> vector<1x8x1xf32>
    %112 = vector.broadcast %111 : vector<1x8x1xf32> to vector<1x8x8xf32>
    %113 = arith.mulf %108, %112 : vector<1x8x8xf32>
    %114 = arith.truncf %113 : vector<1x8x8xf32> to vector<1x8x8xbf16>
    %cst_29 = arith.constant dense<0.000000e+00> : vector<1x8x128xf32>
    %115 = tpu.matmul %114, %101, %cst_29 {dimension_numbers = #tpu.dot_dimension_numbers<[2], [1], [1], [2], [0, 0, 0, 1, 1, 2], [0], [0]>} : vector<1x8x8xbf16>, vector<1x8x128xbf16>, vector<1x8x128xf32> -> vector<1x8x128xf32>
    %116 = arith.addf %95, %115 : vector<1x8x128xf32>
    %117 = vector.extract_strided_slice %7 {offsets = [0, 0, 640], sizes = [1, 8, 128], strides = [1, 1, 1]} : vector<1x8x3072xf32> to vector<1x8x128xf32>
    %118 = arith.truncf %117 : vector<1x8x128xf32> to vector<1x8x128xbf16>
    %119 = vector.extract_strided_slice %7 {offsets = [0, 0, 1664], sizes = [1, 8, 128], strides = [1, 1, 1]} : vector<1x8x3072xf32> to vector<1x8x128xf32>
    %120 = arith.truncf %119 : vector<1x8x128xf32> to vector<1x8x128xbf16>
    %121 = vector.extract_strided_slice %7 {offsets = [0, 0, 2688], sizes = [1, 8, 128], strides = [1, 1, 1]} : vector<1x8x3072xf32> to vector<1x8x128xf32>
    %122 = arith.truncf %121 : vector<1x8x128xf32> to vector<1x8x128xbf16>
    %cst_30 = arith.constant dense<0.000000e+00> : vector<1x8x8xf32>
    %123 = tpu.matmul %118, %120, %cst_30 {dimension_numbers = #tpu.dot_dimension_numbers<[2], [2], [1], [1], [0, 0, 0, 1, 1, 1], [0], [0]>} : vector<1x8x128xbf16>, vector<1x8x128xbf16>, vector<1x8x8xf32> -> vector<1x8x8xf32>
    %124 = arith.addf %123, %10 : vector<1x8x8xf32>
    %cst_31 = arith.constant dense<0xFF800000> : vector<1x8xf32>
    %125 = vector.multi_reduction <maximumf>, %124, %cst_31 [2] : vector<1x8x8xf32> to vector<1x8xf32>
    %126 = vector.shape_cast %125 : vector<1x8xf32> to vector<1x8x1xf32>
    %127 = vector.broadcast %126 : vector<1x8x1xf32> to vector<1x8x8xf32>
    %128 = arith.subf %124, %127 : vector<1x8x8xf32>
    %129 = math.exp %128 : vector<1x8x8xf32>
    %cst_32 = arith.constant dense<0.000000e+00> : vector<1x8xf32>
    %130 = vector.multi_reduction <add>, %129, %cst_32 [2] : vector<1x8x8xf32> to vector<1x8xf32>
    %131 = vector.shape_cast %130 : vector<1x8xf32> to vector<1x8x1xf32>
    %132 = tpu.reciprocal %131 {approx = true} : vector<1x8x1xf32> -> vector<1x8x1xf32>
    %133 = vector.broadcast %132 : vector<1x8x1xf32> to vector<1x8x8xf32>
    %134 = arith.mulf %129, %133 : vector<1x8x8xf32>
    %135 = arith.truncf %134 : vector<1x8x8xf32> to vector<1x8x8xbf16>
    %cst_33 = arith.constant dense<0.000000e+00> : vector<1x8x128xf32>
    %136 = tpu.matmul %135, %122, %cst_33 {dimension_numbers = #tpu.dot_dimension_numbers<[2], [1], [1], [2], [0, 0, 0, 1, 1, 2], [0], [0]>} : vector<1x8x8xbf16>, vector<1x8x128xbf16>, vector<1x8x128xf32> -> vector<1x8x128xf32>
    %137 = arith.addf %116, %136 : vector<1x8x128xf32>
    %138 = vector.extract_strided_slice %7 {offsets = [0, 0, 768], sizes = [1, 8, 128], strides = [1, 1, 1]} : vector<1x8x3072xf32> to vector<1x8x128xf32>
    %139 = arith.truncf %138 : vector<1x8x128xf32> to vector<1x8x128xbf16>
    %140 = vector.extract_strided_slice %7 {offsets = [0, 0, 1792], sizes = [1, 8, 128], strides = [1, 1, 1]} : vector<1x8x3072xf32> to vector<1x8x128xf32>
    %141 = arith.truncf %140 : vector<1x8x128xf32> to vector<1x8x128xbf16>
    %142 = vector.extract_strided_slice %7 {offsets = [0, 0, 2816], sizes = [1, 8, 128], strides = [1, 1, 1]} : vector<1x8x3072xf32> to vector<1x8x128xf32>
    %143 = arith.truncf %142 : vector<1x8x128xf32> to vector<1x8x128xbf16>
    %cst_34 = arith.constant dense<0.000000e+00> : vector<1x8x8xf32>
    %144 = tpu.matmul %139, %141, %cst_34 {dimension_numbers = #tpu.dot_dimension_numbers<[2], [2], [1], [1], [0, 0, 0, 1, 1, 1], [0], [0]>} : vector<1x8x128xbf16>, vector<1x8x128xbf16>, vector<1x8x8xf32> -> vector<1x8x8xf32>
    %145 = arith.addf %144, %10 : vector<1x8x8xf32>
    %cst_35 = arith.constant dense<0xFF800000> : vector<1x8xf32>
    %146 = vector.multi_reduction <maximumf>, %145, %cst_35 [2] : vector<1x8x8xf32> to vector<1x8xf32>
    %147 = vector.shape_cast %146 : vector<1x8xf32> to vector<1x8x1xf32>
    %148 = vector.broadcast %147 : vector<1x8x1xf32> to vector<1x8x8xf32>
    %149 = arith.subf %145, %148 : vector<1x8x8xf32>
    %150 = math.exp %149 : vector<1x8x8xf32>
    %cst_36 = arith.constant dense<0.000000e+00> : vector<1x8xf32>
    %151 = vector.multi_reduction <add>, %150, %cst_36 [2] : vector<1x8x8xf32> to vector<1x8xf32>
    %152 = vector.shape_cast %151 : vector<1x8xf32> to vector<1x8x1xf32>
    %153 = tpu.reciprocal %152 {approx = true} : vector<1x8x1xf32> -> vector<1x8x1xf32>
    %154 = vector.broadcast %153 : vector<1x8x1xf32> to vector<1x8x8xf32>
    %155 = arith.mulf %150, %154 : vector<1x8x8xf32>
    %156 = arith.truncf %155 : vector<1x8x8xf32> to vector<1x8x8xbf16>
    %cst_37 = arith.constant dense<0.000000e+00> : vector<1x8x128xf32>
    %157 = tpu.matmul %156, %143, %cst_37 {dimension_numbers = #tpu.dot_dimension_numbers<[2], [1], [1], [2], [0, 0, 0, 1, 1, 2], [0], [0]>} : vector<1x8x8xbf16>, vector<1x8x128xbf16>, vector<1x8x128xf32> -> vector<1x8x128xf32>
    %158 = arith.addf %137, %157 : vector<1x8x128xf32>
    %159 = vector.extract_strided_slice %7 {offsets = [0, 0, 896], sizes = [1, 8, 128], strides = [1, 1, 1]} : vector<1x8x3072xf32> to vector<1x8x128xf32>
    %160 = arith.truncf %159 : vector<1x8x128xf32> to vector<1x8x128xbf16>
    %161 = vector.extract_strided_slice %7 {offsets = [0, 0, 1920], sizes = [1, 8, 128], strides = [1, 1, 1]} : vector<1x8x3072xf32> to vector<1x8x128xf32>
    %162 = arith.truncf %161 : vector<1x8x128xf32> to vector<1x8x128xbf16>
    %163 = vector.extract_strided_slice %7 {offsets = [0, 0, 2944], sizes = [1, 8, 128], strides = [1, 1, 1]} : vector<1x8x3072xf32> to vector<1x8x128xf32>
    %164 = arith.truncf %163 : vector<1x8x128xf32> to vector<1x8x128xbf16>
    %cst_38 = arith.constant dense<0.000000e+00> : vector<1x8x8xf32>
    %165 = tpu.matmul %160, %162, %cst_38 {dimension_numbers = #tpu.dot_dimension_numbers<[2], [2], [1], [1], [0, 0, 0, 1, 1, 1], [0], [0]>} : vector<1x8x128xbf16>, vector<1x8x128xbf16>, vector<1x8x8xf32> -> vector<1x8x8xf32>
    %166 = arith.addf %165, %10 : vector<1x8x8xf32>
    %cst_39 = arith.constant dense<0xFF800000> : vector<1x8xf32>
    %167 = vector.multi_reduction <maximumf>, %166, %cst_39 [2] : vector<1x8x8xf32> to vector<1x8xf32>
    %168 = vector.shape_cast %167 : vector<1x8xf32> to vector<1x8x1xf32>
    %169 = vector.broadcast %168 : vector<1x8x1xf32> to vector<1x8x8xf32>
    %170 = arith.subf %166, %169 : vector<1x8x8xf32>
    %171 = math.exp %170 : vector<1x8x8xf32>
    %cst_40 = arith.constant dense<0.000000e+00> : vector<1x8xf32>
    %172 = vector.multi_reduction <add>, %171, %cst_40 [2] : vector<1x8x8xf32> to vector<1x8xf32>
    %173 = vector.shape_cast %172 : vector<1x8xf32> to vector<1x8x1xf32>
    %174 = tpu.reciprocal %173 {approx = true} : vector<1x8x1xf32> -> vector<1x8x1xf32>
    %175 = vector.broadcast %174 : vector<1x8x1xf32> to vector<1x8x8xf32>
    %176 = arith.mulf %171, %175 : vector<1x8x8xf32>
    %177 = arith.truncf %176 : vector<1x8x8xf32> to vector<1x8x8xbf16>
    %cst_41 = arith.constant dense<0.000000e+00> : vector<1x8x128xf32>
    %178 = tpu.matmul %177, %164, %cst_41 {dimension_numbers = #tpu.dot_dimension_numbers<[2], [1], [1], [2], [0, 0, 0, 1, 1, 2], [0], [0]>} : vector<1x8x8xbf16>, vector<1x8x128xbf16>, vector<1x8x128xf32> -> vector<1x8x128xf32>
    %179 = arith.addf %158, %178 : vector<1x8x128xf32>
    %180 = vector.extract_strided_slice %179 {offsets = [0, 0, 0], sizes = [1, 8, 96], strides = [1, 1, 1]} : vector<1x8x128xf32> to vector<1x8x96xf32>
    %c0_42 = arith.constant 0 : index
    %c0_43 = arith.constant 0 : index
    %181 = vector.load %arg5[%c0_42, %c0_43] : memref<1x96xf32, #tpu.memory_space<vmem>>, vector<1x96xf32>
    %182 = vector.shape_cast %181 : vector<1x96xf32> to vector<1x1x96xf32>
    %183 = vector.broadcast %182 : vector<1x1x96xf32> to vector<1x8x96xf32>
    %184 = arith.addf %180, %183 : vector<1x8x96xf32>
    %c0_44 = arith.constant 0 : index
    %c0_45 = arith.constant 0 : index
    %c0_46 = arith.constant 0 : index
    %185 = vector.load %arg6[%c0_44, %c0_45, %c0_46] : memref<1x8x96xf32, #tpu.memory_space<vmem>>, vector<1x8x96xf32>
    tpu.vector_store %arg6[%c0_44, %c0_45, %c0_46], %184 {strides = array<i32>} : memref<1x8x96xf32, #tpu.memory_space<vmem>>, vector<1x8x96xf32>,
    return
  }
  func.func @transform_0(%arg0: i32) -> (i32, i32, i32) {
    %c0_i32 = arith.constant 0 : i32
    %c0_i32_0 = arith.constant 0 : i32
    %c0_i32_1 = arith.constant 0 : i32
    return %arg0, %c0_i32, %c0_i32_0 : i32, i32, i32
  }
  func.func @transform_1(%arg0: i32) -> (i32, i32, i32) {
    %c0_i32 = arith.constant 0 : i32
    %c0_i32_0 = arith.constant 0 : i32
    %c0_i32_1 = arith.constant 0 : i32
    return %arg0, %c0_i32, %c0_i32_0 : i32, i32, i32
  }
  func.func @transform_2(%arg0: i32) -> (i32, i32) {
    %c0_i32 = arith.constant 0 : i32
    %c0_i32_0 = arith.constant 0 : i32
    %c0_i32_1 = arith.constant 0 : i32
    return %c0_i32, %c0_i32_0 : i32, i32
  }
  func.func @transform_3(%arg0: i32) -> (i32, i32) {
    %c0_i32 = arith.constant 0 : i32
    %c0_i32_0 = arith.constant 0 : i32
    %c0_i32_1 = arith.constant 0 : i32
    return %c0_i32, %c0_i32_0 : i32, i32
  }
  func.func @transform_4(%arg0: i32) -> (i32, i32) {
    %c0_i32 = arith.constant 0 : i32
    %c0_i32_0 = arith.constant 0 : i32
    %c0_i32_1 = arith.constant 0 : i32
    return %c0_i32, %c0_i32_0 : i32, i32
  }
  func.func @transform_5(%arg0: i32) -> (i32, i32, i32) {
    %c0_i32 = arith.constant 0 : i32
    %c0_i32_0 = arith.constant 0 : i32
    %c0_i32_1 = arith.constant 0 : i32
    return %arg0, %c0_i32, %c0_i32_0 : i32, i32, i32
  }
}

module attributes {stable_mosaic.version = 11 : i64} {
  func.func @mha_kernel(%arg0: i32, %arg1: memref<1x8x96xbf16, #tpu.memory_space<vmem>>, %arg2: memref<1x1x8xf32, #tpu.memory_space<vmem>>, %arg3: memref<96x3072xbf16, #tpu.memory_space<vmem>>, %arg4: memref<1x3072xf32, #tpu.memory_space<vmem>>, %arg5: memref<1x96xf32, #tpu.memory_space<vmem>>, %arg6: memref<1x8x96xf32, #tpu.memory_space<vmem>>) attributes {dimension_semantics = [#tpu.dimension_semantics<parallel>], iteration_bounds = array<i64: 2>, scalar_prefetch = 0 : i64, scratch_operands = 0 : i64, tpu.core_type = #tpu.core_type<tc>, window_params = [{transform_indices = @transform_0, window_bounds = array<i64: 1, 8, 96>}, {transform_indices = @transform_1, window_bounds = array<i64: 1, 1, 8>}, {pipeline_mode = #tpu.pipeline_mode<synchronous>, transform_indices = @transform_2, window_bounds = array<i64: 96, 3072>}, {pipeline_mode = #tpu.pipeline_mode<synchronous>, transform_indices = @transform_3, window_bounds = array<i64: 1, 3072>}, {pipeline_mode = #tpu.pipeline_mode<synchronous>, transform_indices = @transform_4, window_bounds = array<i64: 1, 96>}, {transform_indices = @transform_5, window_bounds = array<i64: 1, 8, 96>}]} {
    %c0 = arith.constant 0 : index
    %c0_0 = arith.constant 0 : index
    %c0_1 = arith.constant 0 : index
    %0 = vector.load %arg1[%c0, %c0_0, %c0_1] : memref<1x8x96xbf16, #tpu.memory_space<vmem>>, vector<1x8x96xbf16>
    %1 = vector.shape_cast %0 : vector<1x8x96xbf16> to vector<8x96xbf16>
    %c0_2 = arith.constant 0 : index
    %c0_3 = arith.constant 0 : index
    %2 = vector.load %arg3[%c0_2, %c0_3] : memref<96x3072xbf16, #tpu.memory_space<vmem>>, vector<96x3072xbf16>
    %cst = arith.constant dense<0.000000e+00> : vector<8x3072xf32>
    %3 = tpu.matmul %1, %2, %cst {dimension_numbers = #tpu.dot_dimension_numbers<[1], [0], [0], [1], [0, 0, 1, 1], [], []>} : vector<8x96xbf16>, vector<96x3072xbf16>, vector<8x3072xf32> -> vector<8x3072xf32>
    %c0_4 = arith.constant 0 : index
    %c0_5 = arith.constant 0 : index
    %4 = vector.load %arg4[%c0_4, %c0_5] : memref<1x3072xf32, #tpu.memory_space<vmem>>, vector<1x3072xf32>
    %5 = vector.broadcast %4 : vector<1x3072xf32> to vector<8x3072xf32>
    %6 = arith.addf %3, %5 : vector<8x3072xf32>
    %7 = vector.shape_cast %6 : vector<8x3072xf32> to vector<1x8x3072xf32>
    %c0_6 = arith.constant 0 : index
    %c0_7 = arith.constant 0 : index
    %c0_8 = arith.constant 0 : index
    %8 = vector.load %arg2[%c0_6, %c0_7, %c0_8] : memref<1x1x8xf32, #tpu.memory_space<vmem>>, vector<1x1x8xf32>
    %9 = vector.shape_cast %8 : vector<1x1x8xf32> to vector<1x1x8xf32>
    %10 = vector.broadcast %9 : vector<1x1x8xf32> to vector<1x8x8xf32>
    %cst_9 = arith.constant 0.000000e+00 : f32
    %11 = vector.broadcast %cst_9 : f32 to vector<1x8x128xf32>
    %12 = vector.extract_strided_slice %7 {offsets = [0, 0, 0], sizes = [1, 8, 128], strides = [1, 1, 1]} : vector<1x8x3072xf32> to vector<1x8x128xf32>
    %13 = arith.truncf %12 : vector<1x8x128xf32> to vector<1x8x128xbf16>
    %14 = vector.extract_strided_slice %7 {offsets = [0, 0, 1024], sizes = [1, 8, 128], strides = [1, 1, 1]} : vector<1x8x3072xf32> to vector<1x8x128xf32>
    %15 = arith.truncf %14 : vector<1x8x128xf32> to vector<1x8x128xbf16>
    %16 = vector.extract_strided_slice %7 {offsets = [0, 0, 2048], sizes = [1, 8, 128], strides = [1, 1, 1]} : vector<1x8x3072xf32> to vector<1x8x128xf32>
    %17 = arith.truncf %16 : vector<1x8x128xf32> to vector<1x8x128xbf16>
    %cst_10 = arith.constant dense<0.000000e+00> : vector<1x8x8xf32>
    %18 = tpu.matmul %13, %15, %cst_10 {dimension_numbers = #tpu.dot_dimension_numbers<[2], [2], [1], [1], [0, 0, 0, 1, 1, 1], [0], [0]>} : vector<1x8x128xbf16>, vector<1x8x128xbf16>, vector<1x8x8xf32> -> vector<1x8x8xf32>
    %19 = arith.addf %18, %10 : vector<1x8x8xf32>
    %cst_11 = arith.constant dense<0xFF800000> : vector<1x8xf32>
    %20 = vector.multi_reduction <maximumf>, %19, %cst_11 [2] : vector<1x8x8xf32> to vector<1x8xf32>
    %21 = vector.shape_cast %20 : vector<1x8xf32> to vector<1x8x1xf32>
    %22 = vector.broadcast %21 : vector<1x8x1xf32> to vector<1x8x8xf32>
    %23 = arith.subf %19, %22 : vector<1x8x8xf32>
    %24 = math.exp %23 : vector<1x8x8xf32>
    %cst_12 = arith.constant dense<0.000000e+00> : vector<1x8xf32>
    %25 = vector.multi_reduction <add>, %24, %cst_12 [2] : vector<1x8x8xf32> to vector<1x8xf32>
    %26 = vector.shape_cast %25 : vector<1x8xf32> to vector<1x8x1xf32>
    %27 = tpu.reciprocal %26 {approx = true} : vector<1x8x1xf32> -> vector<1x8x1xf32>
    %28 = vector.broadcast %27 : vector<1x8x1xf32> to vector<1x8x8xf32>
    %29 = arith.mulf %24, %28 : vector<1x8x8xf32>
    %30 = arith.truncf %29 : vector<1x8x8xf32> to vector<1x8x8xbf16>
    %cst_13 = arith.constant dense<0.000000e+00> : vector<1x8x128xf32>
    %31 = tpu.matmul %30, %17, %cst_13 {dimension_numbers = #tpu.dot_dimension_numbers<[2], [1], [1], [2], [0, 0, 0, 1, 1, 2], [0], [0]>} : vector<1x8x8xbf16>, vector<1x8x128xbf16>, vector<1x8x128xf32> -> vector<1x8x128xf32>
    %32 = arith.addf %11, %31 : vector<1x8x128xf32>
    %33 = vector.extract_strided_slice %7 {offsets = [0, 0, 128], sizes = [1, 8, 128], strides = [1, 1, 1]} : vector<1x8x3072xf32> to vector<1x8x128xf32>
    %34 = arith.truncf %33 : vector<1x8x128xf32> to vector<1x8x128xbf16>
    %35 = vector.extract_strided_slice %7 {offsets = [0, 0, 1152], sizes = [1, 8, 128], strides = [1, 1, 1]} : vector<1x8x3072xf32> to vector<1x8x128xf32>
    %36 = arith.truncf %35 : vector<1x8x128xf32> to vector<1x8x128xbf16>
    %37 = vector.extract_strided_slice %7 {offsets = [0, 0, 2176], sizes = [1, 8, 128], strides = [1, 1, 1]} : vector<1x8x3072xf32> to vector<1x8x128xf32>
    %38 = arith.truncf %37 : vector<1x8x128xf32> to vector<1x8x128xbf16>
    %cst_14 = arith.constant dense<0.000000e+00> : vector<1x8x8xf32>
    %39 = tpu.matmul %34, %36, %cst_14 {dimension_numbers = #tpu.dot_dimension_numbers<[2], [2], [1], [1], [0, 0, 0, 1, 1, 1], [0], [0]>} : vector<1x8x128xbf16>, vector<1x8x128xbf16>, vector<1x8x8xf32> -> vector<1x8x8xf32>
    %40 = arith.addf %39, %10 : vector<1x8x8xf32>
    %cst_15 = arith.constant dense<0xFF800000> : vector<1x8xf32>
    %41 = vector.multi_reduction <maximumf>, %40, %cst_15 [2] : vector<1x8x8xf32> to vector<1x8xf32>
    %42 = vector.shape_cast %41 : vector<1x8xf32> to vector<1x8x1xf32>
    %43 = vector.broadcast %42 : vector<1x8x1xf32> to vector<1x8x8xf32>
    %44 = arith.subf %40, %43 : vector<1x8x8xf32>
    %45 = math.exp %44 : vector<1x8x8xf32>
    %cst_16 = arith.constant dense<0.000000e+00> : vector<1x8xf32>
    %46 = vector.multi_reduction <add>, %45, %cst_16 [2] : vector<1x8x8xf32> to vector<1x8xf32>
    %47 = vector.shape_cast %46 : vector<1x8xf32> to vector<1x8x1xf32>
    %48 = tpu.reciprocal %47 {approx = true} : vector<1x8x1xf32> -> vector<1x8x1xf32>
    %49 = vector.broadcast %48 : vector<1x8x1xf32> to vector<1x8x8xf32>
    %50 = arith.mulf %45, %49 : vector<1x8x8xf32>
    %51 = arith.truncf %50 : vector<1x8x8xf32> to vector<1x8x8xbf16>
    %cst_17 = arith.constant dense<0.000000e+00> : vector<1x8x128xf32>
    %52 = tpu.matmul %51, %38, %cst_17 {dimension_numbers = #tpu.dot_dimension_numbers<[2], [1], [1], [2], [0, 0, 0, 1, 1, 2], [0], [0]>} : vector<1x8x8xbf16>, vector<1x8x128xbf16>, vector<1x8x128xf32> -> vector<1x8x128xf32>
    %53 = arith.addf %32, %52 : vector<1x8x128xf32>
    %54 = vector.extract_strided_slice %7 {offsets = [0, 0, 256], sizes = [1, 8, 128], strides = [1, 1, 1]} : vector<1x8x3072xf32> to vector<1x8x128xf32>
    %55 = arith.truncf %54 : vector<1x8x128xf32> to vector<1x8x128xbf16>
    %56 = vector.extract_strided_slice %7 {offsets = [0, 0, 1280], sizes = [1, 8, 128], strides = [1, 1, 1]} : vector<1x8x3072xf32> to vector<1x8x128xf32>
    %57 = arith.truncf %56 : vector<1x8x128xf32> to vector<1x8x128xbf16>
    %58 = vector.extract_strided_slice %7 {offsets = [0, 0, 2304], sizes = [1, 8, 128], strides = [1, 1, 1]} : vector<1x8x3072xf32> to vector<1x8x128xf32>
    %59 = arith.truncf %58 : vector<1x8x128xf32> to vector<1x8x128xbf16>
    %cst_18 = arith.constant dense<0.000000e+00> : vector<1x8x8xf32>
    %60 = tpu.matmul %55, %57, %cst_18 {dimension_numbers = #tpu.dot_dimension_numbers<[2], [2], [1], [1], [0, 0, 0, 1, 1, 1], [0], [0]>} : vector<1x8x128xbf16>, vector<1x8x128xbf16>, vector<1x8x8xf32> -> vector<1x8x8xf32>
    %61 = arith.addf %60, %10 : vector<1x8x8xf32>
    %cst_19 = arith.constant dense<0xFF800000> : vector<1x8xf32>
    %62 = vector.multi_reduction <maximumf>, %61, %cst_19 [2] : vector<1x8x8xf32> to vector<1x8xf32>
    %63 = vector.shape_cast %62 : vector<1x8xf32> to vector<1x8x1xf32>
    %64 = vector.broadcast %63 : vector<1x8x1xf32> to vector<1x8x8xf32>
    %65 = arith.subf %61, %64 : vector<1x8x8xf32>
    %66 = math.exp %65 : vector<1x8x8xf32>
    %cst_20 = arith.constant dense<0.000000e+00> : vector<1x8xf32>
    %67 = vector.multi_reduction <add>, %66, %cst_20 [2] : vector<1x8x8xf32> to vector<1x8xf32>
    %68 = vector.shape_cast %67 : vector<1x8xf32> to vector<1x8x1xf32>
    %69 = tpu.reciprocal %68 {approx = true} : vector<1x8x1xf32> -> vector<1x8x1xf32>
    %70 = vector.broadcast %69 : vector<1x8x1xf32> to vector<1x8x8xf32>
    %71 = arith.mulf %66, %70 : vector<1x8x8xf32>
    %72 = arith.truncf %71 : vector<1x8x8xf32> to vector<1x8x8xbf16>
    %cst_21 = arith.constant dense<0.000000e+00> : vector<1x8x128xf32>
    %73 = tpu.matmul %72, %59, %cst_21 {dimension_numbers = #tpu.dot_dimension_numbers<[2], [1], [1], [2], [0, 0, 0, 1, 1, 2], [0], [0]>} : vector<1x8x8xbf16>, vector<1x8x128xbf16>, vector<1x8x128xf32> -> vector<1x8x128xf32>
    %74 = arith.addf %53, %73 : vector<1x8x128xf32>
    %75 = vector.extract_strided_slice %7 {offsets = [0, 0, 384], sizes = [1, 8, 128], strides = [1, 1, 1]} : vector<1x8x3072xf32> to vector<1x8x128xf32>
    %76 = arith.truncf %75 : vector<1x8x128xf32> to vector<1x8x128xbf16>
    %77 = vector.extract_strided_slice %7 {offsets = [0, 0, 1408], sizes = [1, 8, 128], strides = [1, 1, 1]} : vector<1x8x3072xf32> to vector<1x8x128xf32>
    %78 = arith.truncf %77 : vector<1x8x128xf32> to vector<1x8x128xbf16>
    %79 = vector.extract_strided_slice %7 {offsets = [0, 0, 2432], sizes = [1, 8, 128], strides = [1, 1, 1]} : vector<1x8x3072xf32> to vector<1x8x128xf32>
    %80 = arith.truncf %79 : vector<1x8x128xf32> to vector<1x8x128xbf16>
    %cst_22 = arith.constant dense<0.000000e+00> : vector<1x8x8xf32>
    %81 = tpu.matmul %76, %78, %cst_22 {dimension_numbers = #tpu.dot_dimension_numbers<[2], [2], [1], [1], [0, 0, 0, 1, 1, 1], [0], [0]>} : vector<1x8x128xbf16>, vector<1x8x128xbf16>, vector<1x8x8xf32> -> vector<1x8x8xf32>
    %82 = arith.addf %81, %10 : vector<1x8x8xf32>
    %cst_23 = arith.constant dense<0xFF800000> : vector<1x8xf32>
    %83 = vector.multi_reduction <maximumf>, %82, %cst_23 [2] : vector<1x8x8xf32> to vector<1x8xf32>
    %84 = vector.shape_cast %83 : vector<1x8xf32> to vector<1x8x1xf32>
    %85 = vector.broadcast %84 : vector<1x8x1xf32> to vector<1x8x8xf32>
    %86 = arith.subf %82, %85 : vector<1x8x8xf32>
    %87 = math.exp %86 : vector<1x8x8xf32>
    %cst_24 = arith.constant dense<0.000000e+00> : vector<1x8xf32>
    %88 = vector.multi_reduction <add>, %87, %cst_24 [2] : vector<1x8x8xf32> to vector<1x8xf32>
    %89 = vector.shape_cast %88 : vector<1x8xf32> to vector<1x8x1xf32>
    %90 = tpu.reciprocal %89 {approx = true} : vector<1x8x1xf32> -> vector<1x8x1xf32>
    %91 = vector.broadcast %90 : vector<1x8x1xf32> to vector<1x8x8xf32>
    %92 = arith.mulf %87, %91 : vector<1x8x8xf32>
    %93 = arith.truncf %92 : vector<1x8x8xf32> to vector<1x8x8xbf16>
    %cst_25 = arith.constant dense<0.000000e+00> : vector<1x8x128xf32>
    %94 = tpu.matmul %93, %80, %cst_25 {dimension_numbers = #tpu.dot_dimension_numbers<[2], [1], [1], [2], [0, 0, 0, 1, 1, 2], [0], [0]>} : vector<1x8x8xbf16>, vector<1x8x128xbf16>, vector<1x8x128xf32> -> vector<1x8x128xf32>
    %95 = arith.addf %74, %94 : vector<1x8x128xf32>
    %96 = vector.extract_strided_slice %7 {offsets = [0, 0, 512], sizes = [1, 8, 128], strides = [1, 1, 1]} : vector<1x8x3072xf32> to vector<1x8x128xf32>
    %97 = arith.truncf %96 : vector<1x8x128xf32> to vector<1x8x128xbf16>
    %98 = vector.extract_strided_slice %7 {offsets = [0, 0, 1536], sizes = [1, 8, 128], strides = [1, 1, 1]} : vector<1x8x3072xf32> to vector<1x8x128xf32>
    %99 = arith.truncf %98 : vector<1x8x128xf32> to vector<1x8x128xbf16>
    %100 = vector.extract_strided_slice %7 {offsets = [0, 0, 2560], sizes = [1, 8, 128], strides = [1, 1, 1]} : vector<1x8x3072xf32> to vector<1x8x128xf32>
    %101 = arith.truncf %100 : vector<1x8x128xf32> to vector<1x8x128xbf16>
    %cst_26 = arith.constant dense<0.000000e+00> : vector<1x8x8xf32>
    %102 = tpu.matmul %97, %99, %cst_26 {dimension_numbers = #tpu.dot_dimension_numbers<[2], [2], [1], [1], [0, 0, 0, 1, 1, 1], [0], [0]>} : vector<1x8x128xbf16>, vector<1x8x128xbf16>, vector<1x8x8xf32> -> vector<1x8x8xf32>
    %103 = arith.addf %102, %10 : vector<1x8x8xf32>
    %cst_27 = arith.constant dense<0xFF800000> : vector<1x8xf32>
    %104 = vector.multi_reduction <maximumf>, %103, %cst_27 [2] : vector<1x8x8xf32> to vector<1x8xf32>
    %105 = vector.shape_cast %104 : vector<1x8xf32> to vector<1x8x1xf32>
    %106 = vector.broadcast %105 : vector<1x8x1xf32> to vector<1x8x8xf32>
    %107 = arith.subf %103, %106 : vector<1x8x8xf32>
    %108 = math.exp %107 : vector<1x8x8xf32>
    %cst_28 = arith.constant dense<0.000000e+00> : vector<1x8xf32>
    %109 = vector.multi_reduction <add>, %108, %cst_28 [2] : vector<1x8x8xf32> to vector<1x8xf32>
    %110 = vector.shape_cast %109 : vector<1x8xf32> to vector<1x8x1xf32>
    %111 = tpu.reciprocal %110 {approx = true} : vector<1x8x1xf32> -> vector<1x8x1xf32>
    %112 = vector.broadcast %111 : vector<1x8x1xf32> to vector<1x8x8xf32>
    %113 = arith.mulf %108, %112 : vector<1x8x8xf32>
    %114 = arith.truncf %113 : vector<1x8x8xf32> to vector<1x8x8xbf16>
    %cst_29 = arith.constant dense<0.000000e+00> : vector<1x8x128xf32>
    %115 = tpu.matmul %114, %101, %cst_29 {dimension_numbers = #tpu.dot_dimension_numbers<[2], [1], [1], [2], [0, 0, 0, 1, 1, 2], [0], [0]>} : vector<1x8x8xbf16>, vector<1x8x128xbf16>, vector<1x8x128xf32> -> vector<1x8x128xf32>
    %116 = arith.addf %95, %115 : vector<1x8x128xf32>
    %117 = vector.extract_strided_slice %7 {offsets = [0, 0, 640], sizes = [1, 8, 128], strides = [1, 1, 1]} : vector<1x8x3072xf32> to vector<1x8x128xf32>
    %118 = arith.truncf %117 : vector<1x8x128xf32> to vector<1x8x128xbf16>
    %119 = vector.extract_strided_slice %7 {offsets = [0, 0, 1664], sizes = [1, 8, 128], strides = [1, 1, 1]} : vector<1x8x3072xf32> to vector<1x8x128xf32>
    %120 = arith.truncf %119 : vector<1x8x128xf32> to vector<1x8x128xbf16>
    %121 = vector.extract_strided_slice %7 {offsets = [0, 0, 2688], sizes = [1, 8, 128], strides = [1, 1, 1]} : vector<1x8x3072xf32> to vector<1x8x128xf32>
    %122 = arith.truncf %121 : vector<1x8x128xf32> to vector<1x8x128xbf16>
    %cst_30 = arith.constant dense<0.000000e+00> : vector<1x8x8xf32>
    %123 = tpu.matmul %118, %120, %cst_30 {dimension_numbers = #tpu.dot_dimension_numbers<[2], [2], [1], [1], [0, 0, 0, 1, 1, 1], [0], [0]>} : vector<1x8x128xbf16>, vector<1x8x128xbf16>, vector<1x8x8xf32> -> vector<1x8x8xf32>
    %124 = arith.addf %123, %10 : vector<1x8x8xf32>
    %cst_31 = arith.constant dense<0xFF800000> : vector<1x8xf32>
    %125 = vector.multi_reduction <maximumf>, %124, %cst_31 [2] : vector<1x8x8xf32> to vector<1x8xf32>
    %126 = vector.shape_cast %125 : vector<1x8xf32> to vector<1x8x1xf32>
    %127 = vector.broadcast %126 : vector<1x8x1xf32> to vector<1x8x8xf32>
    %128 = arith.subf %124, %127 : vector<1x8x8xf32>
    %129 = math.exp %128 : vector<1x8x8xf32>
    %cst_32 = arith.constant dense<0.000000e+00> : vector<1x8xf32>
    %130 = vector.multi_reduction <add>, %129, %cst_32 [2] : vector<1x8x8xf32> to vector<1x8xf32>
    %131 = vector.shape_cast %130 : vector<1x8xf32> to vector<1x8x1xf32>
    %132 = tpu.reciprocal %131 {approx = true} : vector<1x8x1xf32> -> vector<1x8x1xf32>
    %133 = vector.broadcast %132 : vector<1x8x1xf32> to vector<1x8x8xf32>
    %134 = arith.mulf %129, %133 : vector<1x8x8xf32>
    %135 = arith.truncf %134 : vector<1x8x8xf32> to vector<1x8x8xbf16>
    %cst_33 = arith.constant dense<0.000000e+00> : vector<1x8x128xf32>
    %136 = tpu.matmul %135, %122, %cst_33 {dimension_numbers = #tpu.dot_dimension_numbers<[2], [1], [1], [2], [0, 0, 0, 1, 1, 2], [0], [0]>} : vector<1x8x8xbf16>, vector<1x8x128xbf16>, vector<1x8x128xf32> -> vector<1x8x128xf32>
    %137 = arith.addf %116, %136 : vector<1x8x128xf32>
    %138 = vector.extract_strided_slice %7 {offsets = [0, 0, 768], sizes = [1, 8, 128], strides = [1, 1, 1]} : vector<1x8x3072xf32> to vector<1x8x128xf32>
    %139 = arith.truncf %138 : vector<1x8x128xf32> to vector<1x8x128xbf16>
    %140 = vector.extract_strided_slice %7 {offsets = [0, 0, 1792], sizes = [1, 8, 128], strides = [1, 1, 1]} : vector<1x8x3072xf32> to vector<1x8x128xf32>
    %141 = arith.truncf %140 : vector<1x8x128xf32> to vector<1x8x128xbf16>
    %142 = vector.extract_strided_slice %7 {offsets = [0, 0, 2816], sizes = [1, 8, 128], strides = [1, 1, 1]} : vector<1x8x3072xf32> to vector<1x8x128xf32>
    %143 = arith.truncf %142 : vector<1x8x128xf32> to vector<1x8x128xbf16>
    %cst_34 = arith.constant dense<0.000000e+00> : vector<1x8x8xf32>
    %144 = tpu.matmul %139, %141, %cst_34 {dimension_numbers = #tpu.dot_dimension_numbers<[2], [2], [1], [1], [0, 0, 0, 1, 1, 1], [0], [0]>} : vector<1x8x128xbf16>, vector<1x8x128xbf16>, vector<1x8x8xf32> -> vector<1x8x8xf32>
    %145 = arith.addf %144, %10 : vector<1x8x8xf32>
    %cst_35 = arith.constant dense<0xFF800000> : vector<1x8xf32>
    %146 = vector.multi_reduction <maximumf>, %145, %cst_35 [2] : vector<1x8x8xf32> to vector<1x8xf32>
    %147 = vector.shape_cast %146 : vector<1x8xf32> to vector<1x8x1xf32>
    %148 = vector.broadcast %147 : vector<1x8x1xf32> to vector<1x8x8xf32>
    %149 = arith.subf %145, %148 : vector<1x8x8xf32>
    %150 = math.exp %149 : vector<1x8x8xf32>
    %cst_36 = arith.constant dense<0.000000e+00> : vector<1x8xf32>
    %151 = vector.multi_reduction <add>, %150, %cst_36 [2] : vector<1x8x8xf32> to vector<1x8xf32>
    %152 = vector.shape_cast %151 : vector<1x8xf32> to vector<1x8x1xf32>
    %153 = tpu.reciprocal %152 {approx = true} : vector<1x8x1xf32> -> vector<1x8x1xf32>
    %154 = vector.broadcast %153 : vector<1x8x1xf32> to vector<1x8x8xf32>
    %155 = arith.mulf %150, %154 : vector<1x8x8xf32>
    %156 = arith.truncf %155 : vector<1x8x8xf32> to vector<1x8x8xbf16>
    %cst_37 = arith.constant dense<0.000000e+00> : vector<1x8x128xf32>
    %157 = tpu.matmul %156, %143, %cst_37 {dimension_numbers = #tpu.dot_dimension_numbers<[2], [1], [1], [2], [0, 0, 0, 1, 1, 2], [0], [0]>} : vector<1x8x8xbf16>, vector<1x8x128xbf16>, vector<1x8x128xf32> -> vector<1x8x128xf32>
    %158 = arith.addf %137, %157 : vector<1x8x128xf32>
    %159 = vector.extract_strided_slice %7 {offsets = [0, 0, 896], sizes = [1, 8, 128], strides = [1, 1, 1]} : vector<1x8x3072xf32> to vector<1x8x128xf32>
    %160 = arith.truncf %159 : vector<1x8x128xf32> to vector<1x8x128xbf16>
    %161 = vector.extract_strided_slice %7 {offsets = [0, 0, 1920], sizes = [1, 8, 128], strides = [1, 1, 1]} : vector<1x8x3072xf32> to vector<1x8x128xf32>
    %162 = arith.truncf %161 : vector<1x8x128xf32> to vector<1x8x128xbf16>
    %163 = vector.extract_strided_slice %7 {offsets = [0, 0, 2944], sizes = [1, 8, 128], strides = [1, 1, 1]} : vector<1x8x3072xf32> to vector<1x8x128xf32>
    %164 = arith.truncf %163 : vector<1x8x128xf32> to vector<1x8x128xbf16>
    %cst_38 = arith.constant dense<0.000000e+00> : vector<1x8x8xf32>
    %165 = tpu.matmul %160, %162, %cst_38 {dimension_numbers = #tpu.dot_dimension_numbers<[2], [2], [1], [1], [0, 0, 0, 1, 1, 1], [0], [0]>} : vector<1x8x128xbf16>, vector<1x8x128xbf16>, vector<1x8x8xf32> -> vector<1x8x8xf32>
    %166 = arith.addf %165, %10 : vector<1x8x8xf32>
    %cst_39 = arith.constant dense<0xFF800000> : vector<1x8xf32>
    %167 = vector.multi_reduction <maximumf>, %166, %cst_39 [2] : vector<1x8x8xf32> to vector<1x8xf32>
    %168 = vector.shape_cast %167 : vector<1x8xf32> to vector<1x8x1xf32>
    %169 = vector.broadcast %168 : vector<1x8x1xf32> to vector<1x8x8xf32>
    %170 = arith.subf %166, %169 : vector<1x8x8xf32>
    %171 = math.exp %170 : vector<1x8x8xf32>
    %cst_40 = arith.constant dense<0.000000e+00> : vector<1x8xf32>
    %172 = vector.multi_reduction <add>, %171, %cst_40 [2] : vector<1x8x8xf32> to vector<1x8xf32>
    %173 = vector.shape_cast %172 : vector<1x8xf32> to vector<1x8x1xf32>
    %174 = tpu.reciprocal %173 {approx = true} : vector<1x8x1xf32> -> vector<1x8x1xf32>
    %175 = vector.broadcast %174 : vector<1x8x1xf32> to vector<1x8x8xf32>
    %176 = arith.mulf %171, %175 : vector<1x8x8xf32>
    %177 = arith.truncf %176 : vector<1x8x8xf32> to vector<1x8x8xbf16>
    %cst_41 = arith.constant dense<0.000000e+00> : vector<1x8x128xf32>
    %178 = tpu.matmul %177, %164, %cst_41 {dimension_numbers = #tpu.dot_dimension_numbers<[2], [1], [1], [2], [0, 0, 0, 1, 1, 2], [0], [0]>} : vector<1x8x8xbf16>, vector<1x8x128xbf16>, vector<1x8x128xf32> -> vector<1x8x128xf32>
    %179 = arith.addf %158, %178 : vector<1x8x128xf32>
    %180 = vector.extract_strided_slice %179 {offsets = [0, 0, 0], sizes = [1, 8, 96], strides = [1, 1, 1]} : vector<1x8x128xf32> to vector<1x8x96xf32>
    %c0_42 = arith.constant 0 : index
    %c0_43 = arith.constant 0 : index
    %181 = vector.load %arg5[%c0_42, %c0_43] : memref<1x96xf32, #tpu.memory_space<vmem>>, vector<1x96xf32>
    %182 = vector.shape_cast %181 : vector<1x96xf32> to vector<1x1x96xf32>
    %183 = vector.broadcast %182 : vector<1x1x96xf32> to vector<1x8x96xf32>
    %184 = arith.addf %180, %183 : vector<1x8x96xf32>
    %c0_44 = arith.constant 0 : index
    %c0_45 = arith.constant 0 : index
    %c0_46 = arith.constant 0 : index
    %185 = vector.load %arg6[%c0_44, %c0_45, %c0_46] : memref<1x8x96xf32, #tpu.memory_space<vmem>>, vector<1x8x96xf32>
    tpu.vector_store %arg6[%c0_44, %c0_45, %c0_46], %184 {strides = array<i32>} : memref<1x8x96xf32, #tpu.memory_space<vmem>>, vector<1x8x96xf32>,
    return
  }
  func.func @transform_0(%arg0: i32) -> (i32, i32, i32) {
    %c0_i32 = arith.constant 0 : i32
    %c0_i32_0 = arith.constant 0 : i32
    %c0_i32_1 = arith.constant 0 : i32
    return %arg0, %c0_i32, %c0_i32_0 : i32, i32, i32
  }
  func.func @transform_1(%arg0: i32) -> (i32, i32, i32) {
    %c0_i32 = arith.constant 0 : i32
    %c0_i32_0 = arith.constant 0 : i32
    %c0_i32_1 = arith.constant 0 : i32
    return %arg0, %c0_i32, %c0_i32_0 : i32, i32, i32
  }
  func.func @transform_2(%arg0: i32) -> (i32, i32) {
    %c0_i32 = arith.constant 0 : i32
    %c0_i32_0 = arith.constant 0 : i32
    %c0_i32_1 = arith.constant 0 : i32
    return %c0_i32, %c0_i32_0 : i32, i32
  }
  func.func @transform_3(%arg0: i32) -> (i32, i32) {
    %c0_i32 = arith.constant 0 : i32
    %c0_i32_0 = arith.constant 0 : i32
    %c0_i32_1 = arith.constant 0 : i32
    return %c0_i32, %c0_i32_0 : i32, i32
  }
  func.func @transform_4(%arg0: i32) -> (i32, i32) {
    %c0_i32 = arith.constant 0 : i32
    %c0_i32_0 = arith.constant 0 : i32
    %c0_i32_1 = arith.constant 0 : i32
    return %c0_i32, %c0_i32_0 : i32, i32
  }
  func.func @transform_5(%arg0: i32) -> (i32, i32, i32) {
    %c0_i32 = arith.constant 0 : i32
    %c0_i32_0 = arith.constant 0 : i32
    %c0_i32_1 = arith.constant 0 : i32
    return %arg0, %c0_i32, %c0_i32_0 : i32, i32, i32
  }
}

</mosaic_0001>

<llo_original>
// kernel: tpu_custom_call.1
$region0: #{tpu_custom_call.1}
  #allocation0 [shape = 'u32[]', space=smem, size = 0x4, offset = 0x4, fixed_abs, tag = 'smem constant byte address 0x4 - core index']
  #allocation1 [shape = 'u32[144,128]{1,0:T(1,128)}', space=vmem, size = 0x12000, scoped, tag = 'internal scratch']
  %s0 = inlined_call_operand.hbm [shape: bf16[2,8,96], index: 0, kind: input, shape index: {}]
  %s1 = inlined_call_operand.hbm [shape: f32[2,1,8], index: 1, kind: input, shape index: {}]
  %s2 = inlined_call_operand.hbm [shape: bf16[96,3072], index: 2, kind: input, shape index: {}]
  %s3 = inlined_call_operand.hbm [shape: f32[1,3072], index: 3, kind: input, shape index: {}]
  %s4 = inlined_call_operand.vmem [shape: f32[1,96], index: 4, kind: input, shape index: {}]
  %s5 = inlined_call_operand.hbm [shape: f32[2,8,96], index: 5, kind: output, shape index: {}]
  %s6 = sld [smem:[#allocation0]]
  $region69: #{tpu_custom_call.1} parent=0
    _
  %s8 = ssub.s32 1, %s6
  %s9 = scalar_select 0, %s8, %s6
  $region1: #{tpu_custom_call.1} parent=0
    #allocation2 [shape = 'u8[4096]{0}', space=vmem, size = 0x1000, scoped, tag = 'input window, operand 0']
    #allocation3 [shape = 's32[2]{0}', space=sflag, size = 0x8, scoped, tag = 'scoped memory for tpu_custom_call.1']
    #allocation4 [shape = 's32[2]{0}', space=sflag, size = 0x8, scoped, tag = 'scoped memory for tpu_custom_call.1']
    #allocation5 [shape = 'u8[1024]{0}', space=vmem, size = 0x400, scoped, tag = 'input window, operand 1']
    #allocation6 [shape = 's32[2]{0}', space=sflag, size = 0x8, scoped, tag = 'scoped memory for tpu_custom_call.1']
    #allocation7 [shape = 'u8[589824]{0}', space=vmem, size = 0x90000, scoped, tag = 'input window, operand 2, single buffered']
    #allocation8 [shape = 'u8[12288]{0}', space=vmem, size = 0x3000, scoped, tag = 'input window, operand 3, single buffered']
    #allocation9 [shape = 's32[1]{0}', space=sflag, size = 0x4, scoped, tag = 'scoped memory for tpu_custom_call.1']
    #allocation10 [shape = 'u8[8192]{0}', space=vmem, size = 0x2000, scoped, tag = 'output window, operand 0']
    %10 = vsyncpa [#allocation3], 0
    %s11 = scalar_lea.sflag [#allocation3], 1
    %12 = vsyncpa %s11, 0
    %13 = vsyncpa [#allocation6], 0
    %s14 = scalar_lea.sflag [#allocation6], 1
    %15 = vsyncpa %s14, 0
    %16 = vsyncpa [#allocation9], 0
    %17 = vsyncpa [#allocation4], 0
    %s18 = scalar_lea.sflag [#allocation4], 1
    %19 = vsyncpa %s18, 0
    loop: start=0, step=1, limit=4
    $region2: #{tpu_custom_call.1} parent=1 // loop_pre_header
      _
    $region3: #{tpu_custom_call.1} parent=1 // loop_header
      %s21 = sphi 0, %s25
      %p22 = scmp.ge.s32.totalorder %s21, 4
      %s31 = sphi 0, %s33
      %s34 = sphi 0, %s31
      %s35 = sphi 0, %s34
      %s51 = sphi 0, %s35
      %s57 = sphi 0, %s59
      %s60 = sphi 0, %s57
      %s61 = sphi 0, %s60
      %s77 = sphi 0, %s61
      %s81 = sphi 0, %s81
      %s83 = sphi 0, %s81
      %s84 = sphi 0, %s83
      %s98 = sphi 0, %s84
      %s102 = sphi 0, %s102
      %s104 = sphi 0, %s102
      %s105 = sphi 0, %s104
      %s119 = sphi 0, %s105
      %s123 = sphi 0, %s123
      %s125 = sphi 0, %s123
      %s126 = sphi 0, %s125
      %s140 = sphi 0, %s126
      %s146 = sphi 0, %s148
      %s149 = sphi 0, %s146
      %s150 = sphi 0, %s149
      %s166 = sphi 0, %s150
    $region4: #{tpu_custom_call.1} parent=1 // loop_header_branch
      %24 = sbr.rel (%p22) target = $region8
    $region5: #{tpu_custom_call.1} parent=1 // loop_body
      %s26 = ssub.s32 %s21, 1
      %s27 = ssub.s32 %s21, 2
      %s28 = sadd.s32 %s21, 1
      %s29 = ssub.s32 %s21, %s28
      %p30 = scmp.eq.s32.totalorder %s29, 0
      %s32 = sadd.s32 %s31, 1
      %s33 = scalar_select %p30, %s31, %s32
      %p36 = pneg %p30
      %p37 = scmp.eq.s32.totalorder %s21, 1
      %p38 = por %p36, %p37
      %p39 = scmp.ne.s32.totalorder %s31, %s34
      %p40 = scmp.eq.s32.totalorder %s21, 0
      %p41 = por %p39, %p40
      %p42 = scmp.ne.s32.totalorder %s31, %s34
      %p43 = scmp.eq.s32.totalorder %s26, 1
      %p44 = por %p42, %p43
      %p45 = scmp.ne.s32.totalorder %s34, %s35
      %p46 = scmp.eq.s32.totalorder %s26, 0
      %p47 = por %p45, %p46
      %p48 = scmp.ne.s32.totalorder %s34, %s35
      %p49 = scmp.eq.s32.totalorder %s27, 1
      %p50 = por %p48, %p49
      %p52 = scmp.ne.s32.totalorder %s35, %s51
      %p53 = scmp.eq.s32.totalorder %s27, 0
      %p54 = por %p52, %p53
      %s55 = ssub.s32 %s21, %s28
      %p56 = scmp.eq.s32.totalorder %s55, 0
      %s58 = sadd.s32 %s57, 1
      %s59 = scalar_select %p56, %s57, %s58
      %p62 = pneg %p56
      %p63 = scmp.eq.s32.totalorder %s21, 1
      %p64 = por %p62, %p63
      %p65 = scmp.ne.s32.totalorder %s57, %s60
      %p66 = scmp.eq.s32.totalorder %s21, 0
      %p67 = por %p65, %p66
      %p68 = scmp.ne.s32.totalorder %s57, %s60
      %p69 = scmp.eq.s32.totalorder %s26, 1
      %p70 = por %p68, %p69
      %p71 = scmp.ne.s32.totalorder %s60, %s61
      %p72 = scmp.eq.s32.totalorder %s26, 0
      %p73 = por %p71, %p72
      %p74 = scmp.ne.s32.totalorder %s60, %s61
      %p75 = scmp.eq.s32.totalorder %s27, 1
      %p76 = por %p74, %p75
      %p78 = scmp.ne.s32.totalorder %s61, %s77
      %p79 = scmp.eq.s32.totalorder %s27, 0
      %p80 = por %p78, %p79
      %s82 = sadd.s32 %s81, 1
      %p85 = scmp.eq.s32.totalorder %s21, 1
      %p86 = scmp.ne.s32.totalorder %s81, %s83
      %p87 = scmp.eq.s32.totalorder %s21, 0
      %p88 = por %p86, %p87
      %p89 = scmp.ne.s32.totalorder %s81, %s83
      %p90 = scmp.eq.s32.totalorder %s26, 1
      %p91 = por %p89, %p90
      %p92 = scmp.ne.s32.totalorder %s83, %s84
      %p93 = scmp.eq.s32.totalorder %s26, 0
      %p94 = por %p92, %p93
      %p95 = scmp.ne.s32.totalorder %s83, %s84
      %p96 = scmp.eq.s32.totalorder %s27, 1
      %p97 = por %p95, %p96
      %p99 = scmp.ne.s32.totalorder %s84, %s98
      %p100 = scmp.eq.s32.totalorder %s27, 0
      %p101 = por %p99, %p100
      %s103 = sadd.s32 %s102, 1
      %p106 = scmp.eq.s32.totalorder %s21, 1
      %p107 = scmp.ne.s32.totalorder %s102, %s104
      %p108 = scmp.eq.s32.totalorder %s21, 0
      %p109 = por %p107, %p108
      %p110 = scmp.ne.s32.totalorder %s102, %s104
      %p111 = scmp.eq.s32.totalorder %s26, 1
      %p112 = por %p110, %p111
      %p113 = scmp.ne.s32.totalorder %s104, %s105
      %p114 = scmp.eq.s32.totalorder %s26, 0
      %p115 = por %p113, %p114
      %p116 = scmp.ne.s32.totalorder %s104, %s105
      %p117 = scmp.eq.s32.totalorder %s27, 1
      %p118 = por %p116, %p117
      %p120 = scmp.ne.s32.totalorder %s105, %s119
      %p121 = scmp.eq.s32.totalorder %s27, 0
      %p122 = por %p120, %p121
      %s124 = sadd.s32 %s123, 1
      %p127 = scmp.eq.s32.totalorder %s21, 1
      %p128 = scmp.ne.s32.totalorder %s123, %s125
      %p129 = scmp.eq.s32.totalorder %s21, 0
      %p130 = por %p128, %p129
      %p131 = scmp.ne.s32.totalorder %s123, %s125
      %p132 = scmp.eq.s32.totalorder %s26, 1
      %p133 = por %p131, %p132
      %p134 = scmp.ne.s32.totalorder %s125, %s126
      %p135 = scmp.eq.s32.totalorder %s26, 0
      %p136 = por %p134, %p135
      %p137 = scmp.ne.s32.totalorder %s125, %s126
      %p138 = scmp.eq.s32.totalorder %s27, 1
      %p139 = por %p137, %p138
      %p141 = scmp.ne.s32.totalorder %s126, %s140
      %p142 = scmp.eq.s32.totalorder %s27, 0
      %p143 = por %p141, %p142
      %s144 = ssub.s32 %s21, %s28
      %p145 = scmp.eq.s32.totalorder %s144, 0
      %s147 = sadd.s32 %s146, 1
      %s148 = scalar_select %p145, %s146, %s147
      %p151 = pneg %p145
      %p152 = scmp.eq.s32.totalorder %s21, 1
      %p153 = por %p151, %p152
      %p154 = scmp.ne.s32.totalorder %s146, %s149
      %p155 = scmp.eq.s32.totalorder %s21, 0
      %p156 = por %p154, %p155
      %p157 = scmp.ne.s32.totalorder %s146, %s149
      %p158 = scmp.eq.s32.totalorder %s26, 1
      %p159 = por %p157, %p158
      %p160 = scmp.ne.s32.totalorder %s149, %s150
      %p161 = scmp.eq.s32.totalorder %s26, 0
      %p162 = por %p160, %p161
      %p163 = scmp.ne.s32.totalorder %s149, %s150
      %p164 = scmp.eq.s32.totalorder %s27, 1
      %p165 = por %p163, %p164
      %p167 = scmp.ne.s32.totalorder %s150, %s166
      %p168 = scmp.eq.s32.totalorder %s27, 0
      %p169 = por %p167, %p168
      %p170 = scmp.le.s32.totalorder 1, %s21
      %p171 = scmp.lt.s32.totalorder %s21, 3
      %p172 = pnand %p170, %p171
      %p173 = pneg %p172
      // Predicated region
      $region9: #{tpu_custom_call.1} parent=5 // pred_check
        _
      $region10: #{tpu_custom_call.1} parent=5 // pred_check_branch
        %175 = sbr.rel (%p172) target = $region12
      $region11: #{tpu_custom_call.1} parent=5 // pred_region
        %s176 = ssub.s32 %s21, 1
        // Predicated region
        $region13: #{tpu_custom_call.1} parent=11 // pred_check
          %p177 = pneg %p94
        $region14: #{tpu_custom_call.1} parent=11 // pred_check_branch
          %179 = sbr.rel (%p177) target = $region16
        $region15: #{tpu_custom_call.1} parent=11 // pred_region
          %s181 = ssub.s32 18432, 18432
          %182 = vsyncadd [#allocation6], %s181
          %s183 = sshll.u32 [#allocation7], 4
          %s184 = int_to_ptr.vmem [resolvable:$true] %s183
          %189 = dma.hbm_to_vmem [thread:$0]  %s2, 18432, %s184, [#allocation6], 1536, 1536, 96
        $region16: #{tpu_custom_call.1} parent=11 // pred_fallthru
          _
        // Predicated region
        $region17: #{tpu_custom_call.1} parent=11 // pred_check
          %p190 = pneg %p115
        $region18: #{tpu_custom_call.1} parent=11 // pred_check_branch
          %192 = sbr.rel (%p190) target = $region20
        $region19: #{tpu_custom_call.1} parent=11 // pred_region
          %s194 = ssub.s32 384, 384
          %195 = vsyncadd [#allocation9], %s194
          %s197 = sshll.u32 [#allocation8], 4
          %s198 = int_to_ptr.vmem [resolvable:$true] %s197
          %200 = dma.hbm_to_vmem [thread:$0]  %s3, 384, %s198, [#allocation9]
        $region20: #{tpu_custom_call.1} parent=11 // pred_fallthru
          _
        // Predicated region
        $region21: #{tpu_custom_call.1} parent=11 // pred_check
          %p201 = pneg %p136
        $region22: #{tpu_custom_call.1} parent=11 // pred_check_branch
          %203 = sbr.rel (%p201) target = $region24
        $region23: #{tpu_custom_call.1} parent=11 // pred_region
          _
        $region24: #{tpu_custom_call.1} parent=11 // pred_fallthru
          _
      $region12: #{tpu_custom_call.1} parent=5 // pred_fallthru
        _
      %p204 = scmp.lt.s32.totalorder %s21, 2
      // Predicated region
      $region25: #{tpu_custom_call.1} parent=5 // pred_check
        %p205 = pneg %p204
      $region26: #{tpu_custom_call.1} parent=5 // pred_check_branch
        %207 = sbr.rel (%p205) target = $region28
      $region27: #{tpu_custom_call.1} parent=5 // pred_region
        // Predicated region
        $region29: #{tpu_custom_call.1} parent=27 // pred_check
          %p208 = pneg %p41
        $region30: #{tpu_custom_call.1} parent=27 // pred_check_branch
          %210 = sbr.rel (%p208) target = $region32
        $region31: #{tpu_custom_call.1} parent=27 // pred_region
          %s211 = sand.u32 %s31, 1
          %s212 = scalar_lea.sflag [#allocation3], %s211
          %s213 = sand.u32 %s31, 1
          %s214 = smul.addr %s213, 4
          %s215 = scalar_lea.vmem [#allocation2], %s214
          %s217 = ssub.s32 64, 64
          %218 = vsyncadd %s212, %s217
          %s219 = smul.addr %s21, 64
          %s220 = scalar_lea.hbm %s0, %s219
          %s222 = sshll.u32 %s215, 4
          %s223 = int_to_ptr.vmem [resolvable:$true] %s222
          %225 = dma.hbm_to_vmem [thread:$0]  %s220, 64, %s223, %s212
        $region32: #{tpu_custom_call.1} parent=27 // pred_fallthru
          _
        // Predicated region
        $region33: #{tpu_custom_call.1} parent=27 // pred_check
          %p226 = pneg %p67
        $region34: #{tpu_custom_call.1} parent=27 // pred_check_branch
          %228 = sbr.rel (%p226) target = $region36
        $region35: #{tpu_custom_call.1} parent=27 // pred_region
          %s229 = sand.u32 %s21, 1
          %s230 = scalar_lea.sflag [#allocation6], %s229
          %s231 = sand.u32 %s57, 1
          %s232 = scalar_lea.vmem [#allocation5], %s231
          %s234 = ssub.s32 16, 16
          %235 = vsyncadd %s230, %s234
          %s236 = smul.addr %s21, 16
          %s237 = scalar_lea.hbm %s1, %s236
          %s239 = sshll.u32 %s232, 4
          %s240 = int_to_ptr.vmem [resolvable:$true] %s239
          %242 = dma.hbm_to_vmem [thread:$0]  %s237, 16, %s240, %s230
        $region36: #{tpu_custom_call.1} parent=27 // pred_fallthru
          _
      $region28: #{tpu_custom_call.1} parent=5 // pred_fallthru
        _
      %p243 = scmp.le.s32.totalorder 1, %s21
      %p244 = scmp.lt.s32.totalorder %s21, 3
      %p245 = pnand %p243, %p244
      %p246 = pneg %p245
      // Predicated region
      $region37: #{tpu_custom_call.1} parent=5 // pred_check
        _
      $region38: #{tpu_custom_call.1} parent=5 // pred_check_branch
        %248 = sbr.rel (%p245) target = $region40
      $region39: #{tpu_custom_call.1} parent=5 // pred_region
        %s249 = ssub.s32 %s21, 1
        %s250 = sand.u32 %s34, 1
        %s251 = scalar_lea.sflag [#allocation3], %s250
        %s252 = sand.u32 %s34, 1
        %s253 = smul.addr %s252, 4
        %s254 = scalar_lea.vmem [#allocation2], %s253
        // Predicated region
        $region41: #{tpu_custom_call.1} parent=39 // pred_check
          %p255 = pneg %p47
        $region42: #{tpu_custom_call.1} parent=39 // pred_check_branch
          %257 = sbr.rel (%p255) target = $region44
        $region43: #{tpu_custom_call.1} parent=39 // pred_region
          %258 = dma.done %s251, 64
        $region44: #{tpu_custom_call.1} parent=39 // pred_fallthru
          _
        %s259 = sand.u32 %s26, 1
        %s260 = scalar_lea.sflag [#allocation6], %s259
        %s261 = sand.u32 %s60, 1
        %s262 = scalar_lea.vmem [#allocation5], %s261
        // Predicated region
        $region45: #{tpu_custom_call.1} parent=39 // pred_check
          %p263 = pneg %p73
        $region46: #{tpu_custom_call.1} parent=39 // pred_check_branch
          %265 = sbr.rel (%p263) target = $region48
        $region47: #{tpu_custom_call.1} parent=39 // pred_region
          %266 = dma.done %s260, 16
        $region48: #{tpu_custom_call.1} parent=39 // pred_fallthru
          _
        // Predicated region
        $region49: #{tpu_custom_call.1} parent=39 // pred_check
          %p267 = pneg %p94
        $region50: #{tpu_custom_call.1} parent=39 // pred_check_branch
          %269 = sbr.rel (%p267) target = $region52
        $region51: #{tpu_custom_call.1} parent=39 // pred_region
          %270 = dma.done [#allocation6], 18432
        $region52: #{tpu_custom_call.1} parent=39 // pred_fallthru
          _
        // Predicated region
        $region53: #{tpu_custom_call.1} parent=39 // pred_check
          %p271 = pneg %p115
        $region54: #{tpu_custom_call.1} parent=39 // pred_check_branch
          %273 = sbr.rel (%p271) target = $region56
        $region55: #{tpu_custom_call.1} parent=39 // pred_region
          %274 = dma.done [#allocation9], 384
        $region56: #{tpu_custom_call.1} parent=39 // pred_fallthru
          _
        %s275 = sand.u32 %s34, 1
        %s276 = scalar_lea.sflag [#allocation3], %s275
        %s277 = sand.u32 %s34, 1
        %s278 = smul.addr %s277, 4
        %s279 = scalar_lea.vmem [#allocation2], %s278
        %p280 = pneg %p47
        %p281 = pneg %p44
        %s282 = sand.u32 %s26, 1
        %s283 = scalar_lea.sflag [#allocation6], %s282
        %s284 = sand.u32 %s60, 1
        %s285 = scalar_lea.vmem [#allocation5], %s284
        %p286 = pneg %p73
        %p287 = pneg %p70
        %p288 = pneg %p94
        %p289 = pneg %p91
        %p290 = pneg %p115
        %p291 = pneg %p112
        %p292 = pneg %p136
        %p293 = pneg %p133
        %p294 = pneg %p162
        %p295 = pneg %p159
        %s296 = sand.u32 %s149, 1
        %s297 = scalar_lea.sflag [#allocation4], %s296
        %s298 = sand.u32 %s149, 1
        %s299 = smul.addr %s298, 8
        %s300 = scalar_lea.vmem [#allocation10], %s299
        %v302 = vld [vmem:[%s254] sm:$0xf]
        %v303 = vld [vmem:[#allocation7] sm:$0xff]
        %v304 = vld [vmem:[#allocation7 + $0x8] sm:$0xff]
        %v305 = vld [vmem:[#allocation7 + $0x10] sm:$0xff]
        %v306 = vld [vmem:[#allocation7 + $0x18] sm:$0xff]
        %v307 = vld [vmem:[#allocation7 + $0x20] sm:$0xff]
        %v308 = vld [vmem:[#allocation7 + $0x28] sm:$0xff]
        %v309 = vld [vmem:[#allocation7 + $0x30] sm:$0xff]
        %v310 = vld [vmem:[#allocation7 + $0x38] sm:$0xff]
        %v311 = vld [vmem:[#allocation7 + $0x40] sm:$0xff]
        %v312 = vld [vmem:[#allocation7 + $0x48] sm:$0xff]
        %v313 = vld [vmem:[#allocation7 + $0x50] sm:$0xff]
        %v314 = vld [vmem:[#allocation7 + $0x58] sm:$0xff]
        %v315 = vld [vmem:[#allocation7 + $0x60] sm:$0xff]
        %v316 = vld [vmem:[#allocation7 + $0x68] sm:$0xff]
        %v317 = vld [vmem:[#allocation7 + $0x70] sm:$0xff]
        %v318 = vld [vmem:[#allocation7 + $0x78] sm:$0xff]
        %v319 = vld [vmem:[#allocation7 + $0x80] sm:$0xff]
        %v320 = vld [vmem:[#allocation7 + $0x88] sm:$0xff]
        %v321 = vld [vmem:[#allocation7 + $0x90] sm:$0xff]
        %v322 = vld [vmem:[#allocation7 + $0x98] sm:$0xff]
        %v323 = vld [vmem:[#allocation7 + $0xa0] sm:$0xff]
        %v324 = vld [vmem:[#allocation7 + $0xa8] sm:$0xff]
        %v325 = vld [vmem:[#allocation7 + $0xb0] sm:$0xff]
        %v326 = vld [vmem:[#allocation7 + $0xb8] sm:$0xff]
        %v327 = vld [vmem:[#allocation7 + $0xc0] sm:$0xff]
        %v328 = vld [vmem:[#allocation7 + $0xc8] sm:$0xff]
        %v329 = vld [vmem:[#allocation7 + $0xd0] sm:$0xff]
        %v330 = vld [vmem:[#allocation7 + $0xd8] sm:$0xff]
        %v331 = vld [vmem:[#allocation7 + $0xe0] sm:$0xff]
        %v332 = vld [vmem:[#allocation7 + $0xe8] sm:$0xff]
        %v333 = vld [vmem:[#allocation7 + $0xf0] sm:$0xff]
        %v334 = vld [vmem:[#allocation7 + $0xf8] sm:$0xff]
        %v335 = vld [vmem:[#allocation7 + $0x100] sm:$0xff]
        %v336 = vld [vmem:[#allocation7 + $0x108] sm:$0xff]
        %v337 = vld [vmem:[#allocation7 + $0x110] sm:$0xff]
        %v338 = vld [vmem:[#allocation7 + $0x118] sm:$0xff]
        %v339 = vld [vmem:[#allocation7 + $0x120] sm:$0xff]
        %v340 = vld [vmem:[#allocation7 + $0x128] sm:$0xff]
        %v341 = vld [vmem:[#allocation7 + $0x130] sm:$0xff]
        %v342 = vld [vmem:[#allocation7 + $0x138] sm:$0xff]
        %v343 = vld [vmem:[#allocation7 + $0x140] sm:$0xff]
        %v344 = vld [vmem:[#allocation7 + $0x148] sm:$0xff]
        %v345 = vld [vmem:[#allocation7 + $0x150] sm:$0xff]
        %v346 = vld [vmem:[#allocation7 + $0x158] sm:$0xff]
        %v347 = vld [vmem:[#allocation7 + $0x160] sm:$0xff]
        %v348 = vld [vmem:[#allocation7 + $0x168] sm:$0xff]
        %v349 = vld [vmem:[#allocation7 + $0x170] sm:$0xff]
        %v350 = vld [vmem:[#allocation7 + $0x178] sm:$0xff]
        %v351 = vld [vmem:[#allocation7 + $0x180] sm:$0xff]
        %v352 = vld [vmem:[#allocation7 + $0x188] sm:$0xff]
        %v353 = vld [vmem:[#allocation7 + $0x190] sm:$0xff]
        %v354 = vld [vmem:[#allocation7 + $0x198] sm:$0xff]
        %v355 = vld [vmem:[#allocation7 + $0x1a0] sm:$0xff]
        %v356 = vld [vmem:[#allocation7 + $0x1a8] sm:$0xff]
        %v357 = vld [vmem:[#allocation7 + $0x1b0] sm:$0xff]
        %v358 = vld [vmem:[#allocation7 + $0x1b8] sm:$0xff]
        %v359 = vld [vmem:[#allocation7 + $0x1c0] sm:$0xff]
        %v360 = vld [vmem:[#allocation7 + $0x1c8] sm:$0xff]
        %v361 = vld [vmem:[#allocation7 + $0x1d0] sm:$0xff]
        %v362 = vld [vmem:[#allocation7 + $0x1d8] sm:$0xff]
        %v363 = vld [vmem:[#allocation7 + $0x1e0] sm:$0xff]
        %v364 = vld [vmem:[#allocation7 + $0x1e8] sm:$0xff]
        %v365 = vld [vmem:[#allocation7 + $0x1f0] sm:$0xff]
        %v366 = vld [vmem:[#allocation7 + $0x1f8] sm:$0xff]
        %v367 = vld [vmem:[#allocation7 + $0x200] sm:$0xff]
        %v368 = vld [vmem:[#allocation7 + $0x208] sm:$0xff]
        %v369 = vld [vmem:[#allocation7 + $0x210] sm:$0xff]
        %v370 = vld [vmem:[#allocation7 + $0x218] sm:$0xff]
        %v371 = vld [vmem:[#allocation7 + $0x220] sm:$0xff]
        %v372 = vld [vmem:[#allocation7 + $0x228] sm:$0xff]
        %v373 = vld [vmem:[#allocation7 + $0x230] sm:$0xff]
        %v374 = vld [vmem:[#allocation7 + $0x238] sm:$0xff]
        %v375 = vld [vmem:[#allocation7 + $0x240] sm:$0xff]
        %v376 = vld [vmem:[#allocation7 + $0x248] sm:$0xff]
        %v377 = vld [vmem:[#allocation7 + $0x250] sm:$0xff]
        %v378 = vld [vmem:[#allocation7 + $0x258] sm:$0xff]
        %v379 = vld [vmem:[#allocation7 + $0x260] sm:$0xff]
        %v380 = vld [vmem:[#allocation7 + $0x268] sm:$0xff]
        %v381 = vld [vmem:[#allocation7 + $0x270] sm:$0xff]
        %v382 = vld [vmem:[#allocation7 + $0x278] sm:$0xff]
        %v383 = vld [vmem:[#allocation7 + $0x280] sm:$0xff]
        %v384 = vld [vmem:[#allocation7 + $0x288] sm:$0xff]
        %v385 = vld [vmem:[#allocation7 + $0x290] sm:$0xff]
        %v386 = vld [vmem:[#allocation7 + $0x298] sm:$0xff]
        %v387 = vld [vmem:[#allocation7 + $0x2a0] sm:$0xff]
        %v388 = vld [vmem:[#allocation7 + $0x2a8] sm:$0xff]
        %v389 = vld [vmem:[#allocation7 + $0x2b0] sm:$0xff]
        %v390 = vld [vmem:[#allocation7 + $0x2b8] sm:$0xff]
        %v391 = vld [vmem:[#allocation7 + $0x2c0] sm:$0xff]
        %v392 = vld [vmem:[#allocation7 + $0x2c8] sm:$0xff]
        %v393 = vld [vmem:[#allocation7 + $0x2d0] sm:$0xff]
        %v394 = vld [vmem:[#allocation7 + $0x2d8] sm:$0xff]
        %v395 = vld [vmem:[#allocation7 + $0x2e0] sm:$0xff]
        %v396 = vld [vmem:[#allocation7 + $0x2e8] sm:$0xff]
        %v397 = vld [vmem:[#allocation7 + $0x2f0] sm:$0xff]
        %v398 = vld [vmem:[#allocation7 + $0x2f8] sm:$0xff]
        %v399 = vld [vmem:[#allocation7 + $0x300] sm:$0xff]
        %v400 = vld [vmem:[#allocation7 + $0x308] sm:$0xff]
        %v401 = vld [vmem:[#allocation7 + $0x310] sm:$0xff]
        %v402 = vld [vmem:[#allocation7 + $0x318] sm:$0xff]
        %v403 = vld [vmem:[#allocation7 + $0x320] sm:$0xff]
        %v404 = vld [vmem:[#allocation7 + $0x328] sm:$0xff]
        %v405 = vld [vmem:[#allocation7 + $0x330] sm:$0xff]
        %v406 = vld [vmem:[#allocation7 + $0x338] sm:$0xff]
        %v407 = vld [vmem:[#allocation7 + $0x340] sm:$0xff]
        %v408 = vld [vmem:[#allocation7 + $0x348] sm:$0xff]
        %v409 = vld [vmem:[#allocation7 + $0x350] sm:$0xff]
        %v410 = vld [vmem:[#allocation7 + $0x358] sm:$0xff]
        %v411 = vld [vmem:[#allocation7 + $0x360] sm:$0xff]
        %v412 = vld [vmem:[#allocation7 + $0x368] sm:$0xff]
        %v413 = vld [vmem:[#allocation7 + $0x370] sm:$0xff]
        %v414 = vld [vmem:[#allocation7 + $0x378] sm:$0xff]
        %v415 = vld [vmem:[#allocation7 + $0x380] sm:$0xff]
        %v416 = vld [vmem:[#allocation7 + $0x388] sm:$0xff]
        %v417 = vld [vmem:[#allocation7 + $0x390] sm:$0xff]
        %v418 = vld [vmem:[#allocation7 + $0x398] sm:$0xff]
        %v419 = vld [vmem:[#allocation7 + $0x3a0] sm:$0xff]
        %v420 = vld [vmem:[#allocation7 + $0x3a8] sm:$0xff]
        %v421 = vld [vmem:[#allocation7 + $0x3b0] sm:$0xff]
        %v422 = vld [vmem:[#allocation7 + $0x3b8] sm:$0xff]
        %v423 = vld [vmem:[#allocation7 + $0x3c0] sm:$0xff]
        %v424 = vld [vmem:[#allocation7 + $0x3c8] sm:$0xff]
        %v425 = vld [vmem:[#allocation7 + $0x3d0] sm:$0xff]
        %v426 = vld [vmem:[#allocation7 + $0x3d8] sm:$0xff]
        %v427 = vld [vmem:[#allocation7 + $0x3e0] sm:$0xff]
        %v428 = vld [vmem:[#allocation7 + $0x3e8] sm:$0xff]
        %v429 = vld [vmem:[#allocation7 + $0x3f0] sm:$0xff]
        %v430 = vld [vmem:[#allocation7 + $0x3f8] sm:$0xff]
        %v431 = vld [vmem:[#allocation7 + $0x400] sm:$0xff]
        %v432 = vld [vmem:[#allocation7 + $0x408] sm:$0xff]
        %v433 = vld [vmem:[#allocation7 + $0x410] sm:$0xff]
        %v434 = vld [vmem:[#allocation7 + $0x418] sm:$0xff]
        %v435 = vld [vmem:[#allocation7 + $0x420] sm:$0xff]
        %v436 = vld [vmem:[#allocation7 + $0x428] sm:$0xff]
        %v437 = vld [vmem:[#allocation7 + $0x430] sm:$0xff]
        %v438 = vld [vmem:[#allocation7 + $0x438] sm:$0xff]
        %v439 = vld [vmem:[#allocation7 + $0x440] sm:$0xff]
        %v440 = vld [vmem:[#allocation7 + $0x448] sm:$0xff]
        %v441 = vld [vmem:[#allocation7 + $0x450] sm:$0xff]
        %v442 = vld [vmem:[#allocation7 + $0x458] sm:$0xff]
        %v443 = vld [vmem:[#allocation7 + $0x460] sm:$0xff]
        %v444 = vld [vmem:[#allocation7 + $0x468] sm:$0xff]
        %v445 = vld [vmem:[#allocation7 + $0x470] sm:$0xff]
        %v446 = vld [vmem:[#allocation7 + $0x478] sm:$0xff]
        %v447 = vld [vmem:[#allocation8] sm:$0xff]
        %v448 = vld [vmem:[#allocation8 + $0x8] sm:$0xff]
        %v449 = vld [vmem:[#allocation8 + $0x10] sm:$0xff]
        %v453 = vlaneseq
        %v454 = vshrl.u32 %v453, 7
        %v455 = vsub.s32 0, %v454
        %v456 = vrot.slane %v447, %v455
        %v457 = vlaneseq
        %v458 = vshrl.u32 %v457, 7
        %v459 = vsub.s32 1, %v458
        %v460 = vrot.slane %v447, %v459
        %v461 = vlaneseq
        %v462 = vshrl.u32 %v461, 7
        %v463 = vsub.s32 2, %v462
        %v464 = vrot.slane %v447, %v463
        %v465 = vlaneseq
        %v466 = vshrl.u32 %v465, 7
        %v467 = vsub.s32 3, %v466
        %v468 = vrot.slane %v447, %v467
        %v469 = vlaneseq
        %v470 = vshrl.u32 %v469, 7
        %v471 = vsub.s32 4, %v470
        %v472 = vrot.slane %v447, %v471
        %v473 = vlaneseq
        %v474 = vshrl.u32 %v473, 7
        %v475 = vsub.s32 5, %v474
        %v476 = vrot.slane %v447, %v475
        %v477 = vlaneseq
        %v478 = vshrl.u32 %v477, 7
        %v479 = vsub.s32 6, %v478
        %v480 = vrot.slane %v447, %v479
        %v481 = vlaneseq
        %v482 = vshrl.u32 %v481, 7
        %v483 = vsub.s32 7, %v482
        %v484 = vrot.slane %v447, %v483
        %v485 = vlaneseq
        %v486 = vshrl.u32 %v485, 7
        %v487 = vsub.s32 0, %v486
        %v488 = vrot.slane %v448, %v487
        %v489 = vlaneseq
        %v490 = vshrl.u32 %v489, 7
        %v491 = vsub.s32 1, %v490
        %v492 = vrot.slane %v448, %v491
        %v493 = vlaneseq
        %v494 = vshrl.u32 %v493, 7
        %v495 = vsub.s32 2, %v494
        %v496 = vrot.slane %v448, %v495
        %v497 = vlaneseq
        %v498 = vshrl.u32 %v497, 7
        %v499 = vsub.s32 3, %v498
        %v500 = vrot.slane %v448, %v499
        %v501 = vlaneseq
        %v502 = vshrl.u32 %v501, 7
        %v503 = vsub.s32 4, %v502
        %v504 = vrot.slane %v448, %v503
        %v505 = vlaneseq
        %v506 = vshrl.u32 %v505, 7
        %v507 = vsub.s32 5, %v506
        %v508 = vrot.slane %v448, %v507
        %v509 = vlaneseq
        %v510 = vshrl.u32 %v509, 7
        %v511 = vsub.s32 6, %v510
        %v512 = vrot.slane %v448, %v511
        %v513 = vlaneseq
        %v514 = vshrl.u32 %v513, 7
        %v515 = vsub.s32 7, %v514
        %v516 = vrot.slane %v448, %v515
        %v517 = vlaneseq
        %v518 = vshrl.u32 %v517, 7
        %v519 = vsub.s32 0, %v518
        %v520 = vrot.slane %v449, %v519
        %v521 = vlaneseq
        %v522 = vshrl.u32 %v521, 7
        %v523 = vsub.s32 1, %v522
        %v524 = vrot.slane %v449, %v523
        %v525 = vlaneseq
        %v526 = vshrl.u32 %v525, 7
        %v527 = vsub.s32 2, %v526
        %v528 = vrot.slane %v449, %v527
        %v529 = vlaneseq
        %v530 = vshrl.u32 %v529, 7
        %v531 = vsub.s32 3, %v530
        %v532 = vrot.slane %v449, %v531
        %v533 = vlaneseq
        %v534 = vshrl.u32 %v533, 7
        %v535 = vsub.s32 4, %v534
        %v536 = vrot.slane %v449, %v535
        %v537 = vlaneseq
        %v538 = vshrl.u32 %v537, 7
        %v539 = vsub.s32 5, %v538
        %v540 = vrot.slane %v449, %v539
        %v541 = vlaneseq
        %v542 = vshrl.u32 %v541, 7
        %v543 = vsub.s32 6, %v542
        %v544 = vrot.slane %v449, %v543
        %v545 = vlaneseq
        %v546 = vshrl.u32 %v545, 7
        %v547 = vsub.s32 7, %v546
        %v548 = vrot.slane %v449, %v547
        %v717 = vunpack.c.l.b16 %v303
        %v718 = vunpack.c.h.b16 %v303
        %v719 = vunpack.c.l.b16 %v304
        %v720 = vunpack.c.h.b16 %v304
        %v721 = vunpack.c.l.b16 %v305
        %v722 = vunpack.c.h.b16 %v305
        %v723 = vunpack.c.l.b16 %v306
        %v724 = vunpack.c.h.b16 %v306
        %v725 = vunpack.c.l.b16 %v307
        %v726 = vunpack.c.h.b16 %v307
        %v727 = vunpack.c.l.b16 %v308
        %v728 = vunpack.c.h.b16 %v308
        %v729 = vunpack.c.l.b16 %v309
        %v730 = vunpack.c.h.b16 %v309
        %v731 = vunpack.c.l.b16 %v310
        %v732 = vunpack.c.h.b16 %v310
        %v733 = vunpack.c.l.b16 %v311
        %v734 = vunpack.c.h.b16 %v311
        %v735 = vunpack.c.l.b16 %v312
        %v736 = vunpack.c.h.b16 %v312
        %v737 = vunpack.c.l.b16 %v313
        %v738 = vunpack.c.h.b16 %v313
        %v739 = vunpack.c.l.b16 %v314
        %v740 = vunpack.c.h.b16 %v314
        %v741 = vunpack.c.l.b16 %v315
        %v742 = vunpack.c.h.b16 %v315
        %v743 = vunpack.c.l.b16 %v316
        %v744 = vunpack.c.h.b16 %v316
        %v745 = vunpack.c.l.b16 %v317
        %v746 = vunpack.c.h.b16 %v317
        %v747 = vunpack.c.l.b16 %v318
        %v748 = vunpack.c.h.b16 %v318
        %v749 = vunpack.c.l.b16 %v319
        %v750 = vunpack.c.h.b16 %v319
        %v751 = vunpack.c.l.b16 %v320
        %v752 = vunpack.c.h.b16 %v320
        %v753 = vunpack.c.l.b16 %v321
        %v754 = vunpack.c.h.b16 %v321
        %v755 = vunpack.c.l.b16 %v322
        %v756 = vunpack.c.h.b16 %v322
        %v757 = vunpack.c.l.b16 %v323
        %v758 = vunpack.c.h.b16 %v323
        %v759 = vunpack.c.l.b16 %v324
        %v760 = vunpack.c.h.b16 %v324
        %v761 = vunpack.c.l.b16 %v325
        %v762 = vunpack.c.h.b16 %v325
        %v763 = vunpack.c.l.b16 %v326
        %v764 = vunpack.c.h.b16 %v326
        %v765 = vunpack.c.l.b16 %v327
        %v766 = vunpack.c.h.b16 %v327
        %v767 = vunpack.c.l.b16 %v328
        %v768 = vunpack.c.h.b16 %v328
        %v769 = vunpack.c.l.b16 %v329
        %v770 = vunpack.c.h.b16 %v329
        %v771 = vunpack.c.l.b16 %v330
        %v772 = vunpack.c.h.b16 %v330
        %v773 = vunpack.c.l.b16 %v331
        %v774 = vunpack.c.h.b16 %v331
        %v775 = vunpack.c.l.b16 %v332
        %v776 = vunpack.c.h.b16 %v332
        %v777 = vunpack.c.l.b16 %v333
        %v778 = vunpack.c.h.b16 %v333
        %v779 = vunpack.c.l.b16 %v334
        %v780 = vunpack.c.h.b16 %v334
        %v781 = vunpack.c.l.b16 %v335
        %v782 = vunpack.c.h.b16 %v335
        %v783 = vunpack.c.l.b16 %v336
        %v784 = vunpack.c.h.b16 %v336
        %v785 = vunpack.c.l.b16 %v337
        %v786 = vunpack.c.h.b16 %v337
        %v787 = vunpack.c.l.b16 %v338
        %v788 = vunpack.c.h.b16 %v338
        %v789 = vunpack.c.l.b16 %v339
        %v790 = vunpack.c.h.b16 %v339
        %v791 = vunpack.c.l.b16 %v340
        %v792 = vunpack.c.h.b16 %v340
        %v793 = vunpack.c.l.b16 %v341
        %v794 = vunpack.c.h.b16 %v341
        %v795 = vunpack.c.l.b16 %v342
        %v796 = vunpack.c.h.b16 %v342
        %v797 = vunpack.c.l.b16 %v343
        %v798 = vunpack.c.h.b16 %v343
        %v799 = vunpack.c.l.b16 %v344
        %v800 = vunpack.c.h.b16 %v344
        %v801 = vunpack.c.l.b16 %v345
        %v802 = vunpack.c.h.b16 %v345
        %v803 = vunpack.c.l.b16 %v346
        %v804 = vunpack.c.h.b16 %v346
        %v805 = vunpack.c.l.b16 %v347
        %v806 = vunpack.c.h.b16 %v347
        %v807 = vunpack.c.l.b16 %v348
        %v808 = vunpack.c.h.b16 %v348
        %v809 = vunpack.c.l.b16 %v349
        %v810 = vunpack.c.h.b16 %v349
        %v811 = vunpack.c.l.b16 %v350
        %v812 = vunpack.c.h.b16 %v350
        %v813 = vunpack.c.l.b16 %v351
        %v814 = vunpack.c.h.b16 %v351
        %v815 = vunpack.c.l.b16 %v352
        %v816 = vunpack.c.h.b16 %v352
        %v817 = vunpack.c.l.b16 %v353
        %v818 = vunpack.c.h.b16 %v353
        %v819 = vunpack.c.l.b16 %v354
        %v820 = vunpack.c.h.b16 %v354
        %v821 = vunpack.c.l.b16 %v355
        %v822 = vunpack.c.h.b16 %v355
        %v823 = vunpack.c.l.b16 %v356
        %v824 = vunpack.c.h.b16 %v356
        %v825 = vunpack.c.l.b16 %v357
        %v826 = vunpack.c.h.b16 %v357
        %v827 = vunpack.c.l.b16 %v358
        %v828 = vunpack.c.h.b16 %v358
        %v829 = vunpack.c.l.b16 %v359
        %v830 = vunpack.c.h.b16 %v359
        %v831 = vunpack.c.l.b16 %v360
        %v832 = vunpack.c.h.b16 %v360
        %v833 = vunpack.c.l.b16 %v361
        %v834 = vunpack.c.h.b16 %v361
        %v835 = vunpack.c.l.b16 %v362
        %v836 = vunpack.c.h.b16 %v362
        %v837 = vunpack.c.l.b16 %v363
        %v838 = vunpack.c.h.b16 %v363
        %v839 = vunpack.c.l.b16 %v364
        %v840 = vunpack.c.h.b16 %v364
        %v841 = vunpack.c.l.b16 %v365
        %v842 = vunpack.c.h.b16 %v365
        %v843 = vunpack.c.l.b16 %v366
        %v844 = vunpack.c.h.b16 %v366
        %v845 = vunpack.c.l.b16 %v367
        %v846 = vunpack.c.h.b16 %v367
        %v847 = vunpack.c.l.b16 %v368
        %v848 = vunpack.c.h.b16 %v368
        %v849 = vunpack.c.l.b16 %v369
        %v850 = vunpack.c.h.b16 %v369
        %v851 = vunpack.c.l.b16 %v370
        %v852 = vunpack.c.h.b16 %v370
        %v853 = vunpack.c.l.b16 %v371
        %v854 = vunpack.c.h.b16 %v371
        %v855 = vunpack.c.l.b16 %v372
        %v856 = vunpack.c.h.b16 %v372
        %v857 = vunpack.c.l.b16 %v373
        %v858 = vunpack.c.h.b16 %v373
        %v859 = vunpack.c.l.b16 %v374
        %v860 = vunpack.c.h.b16 %v374
        %v861 = vunpack.c.l.b16 %v375
        %v862 = vunpack.c.h.b16 %v375
        %v863 = vunpack.c.l.b16 %v376
        %v864 = vunpack.c.h.b16 %v376
        %v865 = vunpack.c.l.b16 %v377
        %v866 = vunpack.c.h.b16 %v377
        %v867 = vunpack.c.l.b16 %v378
        %v868 = vunpack.c.h.b16 %v378
        %v869 = vunpack.c.l.b16 %v379
        %v870 = vunpack.c.h.b16 %v379
        %v871 = vunpack.c.l.b16 %v380
        %v872 = vunpack.c.h.b16 %v380
        %v873 = vunpack.c.l.b16 %v381
        %v874 = vunpack.c.h.b16 %v381
        %v875 = vunpack.c.l.b16 %v382
        %v876 = vunpack.c.h.b16 %v382
        %v877 = vunpack.c.l.b16 %v383
        %v878 = vunpack.c.h.b16 %v383
        %v879 = vunpack.c.l.b16 %v384
        %v880 = vunpack.c.h.b16 %v384
        %v881 = vunpack.c.l.b16 %v385
        %v882 = vunpack.c.h.b16 %v385
        %v883 = vunpack.c.l.b16 %v386
        %v884 = vunpack.c.h.b16 %v386
        %v885 = vunpack.c.l.b16 %v387
        %v886 = vunpack.c.h.b16 %v387
        %v887 = vunpack.c.l.b16 %v388
        %v888 = vunpack.c.h.b16 %v388
        %v889 = vunpack.c.l.b16 %v389
        %v890 = vunpack.c.h.b16 %v389
        %v891 = vunpack.c.l.b16 %v390
        %v892 = vunpack.c.h.b16 %v390
        %v893 = vunpack.c.l.b16 %v391
        %v894 = vunpack.c.h.b16 %v391
        %v895 = vunpack.c.l.b16 %v392
        %v896 = vunpack.c.h.b16 %v392
        %v897 = vunpack.c.l.b16 %v393
        %v898 = vunpack.c.h.b16 %v393
        %v899 = vunpack.c.l.b16 %v394
        %v900 = vunpack.c.h.b16 %v394
        %v901 = vunpack.c.l.b16 %v395
        %v902 = vunpack.c.h.b16 %v395
        %v903 = vunpack.c.l.b16 %v396
        %v904 = vunpack.c.h.b16 %v396
        %v905 = vunpack.c.l.b16 %v397
        %v906 = vunpack.c.h.b16 %v397
        %v907 = vunpack.c.l.b16 %v398
        %v908 = vunpack.c.h.b16 %v398
        %v909 = vunpack.c.l.b16 %v399
        %v910 = vunpack.c.h.b16 %v399
        %v911 = vunpack.c.l.b16 %v400
        %v912 = vunpack.c.h.b16 %v400
        %v913 = vunpack.c.l.b16 %v401
        %v914 = vunpack.c.h.b16 %v401
        %v915 = vunpack.c.l.b16 %v402
        %v916 = vunpack.c.h.b16 %v402
        %v917 = vunpack.c.l.b16 %v403
        %v918 = vunpack.c.h.b16 %v403
        %v919 = vunpack.c.l.b16 %v404
        %v920 = vunpack.c.h.b16 %v404
        %v921 = vunpack.c.l.b16 %v405
        %v922 = vunpack.c.h.b16 %v405
        %v923 = vunpack.c.l.b16 %v406
        %v924 = vunpack.c.h.b16 %v406
        %v925 = vunpack.c.l.b16 %v407
        %v926 = vunpack.c.h.b16 %v407
        %v927 = vunpack.c.l.b16 %v408
        %v928 = vunpack.c.h.b16 %v408
        %v929 = vunpack.c.l.b16 %v409
        %v930 = vunpack.c.h.b16 %v409
        %v931 = vunpack.c.l.b16 %v410
        %v932 = vunpack.c.h.b16 %v410
        %v933 = vunpack.c.l.b16 %v411
        %v934 = vunpack.c.h.b16 %v411
        %v935 = vunpack.c.l.b16 %v412
        %v936 = vunpack.c.h.b16 %v412
        %v937 = vunpack.c.l.b16 %v413
        %v938 = vunpack.c.h.b16 %v413
        %v939 = vunpack.c.l.b16 %v414
        %v940 = vunpack.c.h.b16 %v414
        %v941 = vunpack.c.l.b16 %v415
        %v942 = vunpack.c.h.b16 %v415
        %v943 = vunpack.c.l.b16 %v416
        %v944 = vunpack.c.h.b16 %v416
        %v945 = vunpack.c.l.b16 %v417
        %v946 = vunpack.c.h.b16 %v417
        %v947 = vunpack.c.l.b16 %v418
        %v948 = vunpack.c.h.b16 %v418
        %v949 = vunpack.c.l.b16 %v419
        %v950 = vunpack.c.h.b16 %v419
        %v951 = vunpack.c.l.b16 %v420
        %v952 = vunpack.c.h.b16 %v420
        %v953 = vunpack.c.l.b16 %v421
        %v954 = vunpack.c.h.b16 %v421
        %v955 = vunpack.c.l.b16 %v422
        %v956 = vunpack.c.h.b16 %v422
        %v957 = vunpack.c.l.b16 %v423
        %v958 = vunpack.c.h.b16 %v423
        %v959 = vunpack.c.l.b16 %v424
        %v960 = vunpack.c.h.b16 %v424
        %v961 = vunpack.c.l.b16 %v425
        %v962 = vunpack.c.h.b16 %v425
        %v963 = vunpack.c.l.b16 %v426
        %v964 = vunpack.c.h.b16 %v426
        %v965 = vunpack.c.l.b16 %v427
        %v966 = vunpack.c.h.b16 %v427
        %v967 = vunpack.c.l.b16 %v428
        %v968 = vunpack.c.h.b16 %v428
        %v969 = vunpack.c.l.b16 %v429
        %v970 = vunpack.c.h.b16 %v429
        %v971 = vunpack.c.l.b16 %v430
        %v972 = vunpack.c.h.b16 %v430
        %v973 = vunpack.c.l.b16 %v431
        %v974 = vunpack.c.h.b16 %v431
        %v975 = vunpack.c.l.b16 %v432
        %v976 = vunpack.c.h.b16 %v432
        %v977 = vunpack.c.l.b16 %v433
        %v978 = vunpack.c.h.b16 %v433
        %v979 = vunpack.c.l.b16 %v434
        %v980 = vunpack.c.h.b16 %v434
        %v981 = vunpack.c.l.b16 %v435
        %v982 = vunpack.c.h.b16 %v435
        %v983 = vunpack.c.l.b16 %v436
        %v984 = vunpack.c.h.b16 %v436
        %v985 = vunpack.c.l.b16 %v437
        %v986 = vunpack.c.h.b16 %v437
        %v987 = vunpack.c.l.b16 %v438
        %v988 = vunpack.c.h.b16 %v438
        %v989 = vunpack.c.l.b16 %v439
        %v990 = vunpack.c.h.b16 %v439
        %v991 = vunpack.c.l.b16 %v440
        %v992 = vunpack.c.h.b16 %v440
        %v993 = vunpack.c.l.b16 %v441
        %v994 = vunpack.c.h.b16 %v441
        %v995 = vunpack.c.l.b16 %v442
        %v996 = vunpack.c.h.b16 %v442
        %v997 = vunpack.c.l.b16 %v443
        %v998 = vunpack.c.h.b16 %v443
        %v999 = vunpack.c.l.b16 %v444
        %v1000 = vunpack.c.h.b16 %v444
        %v1001 = vunpack.c.l.b16 %v445
        %v1002 = vunpack.c.h.b16 %v445
        %v1003 = vunpack.c.l.b16 %v446
        %v1004 = vunpack.c.h.b16 %v446
        %v1005 = vpack.c.b16 %v741, %v717
        %v1006 = vpack.c.b16 %v742, %v718
        %v1007 = vpack.c.b16 %v743, %v719
        %v1008 = vpack.c.b16 %v744, %v720
        %v1009 = vpack.c.b16 %v745, %v721
        %v1010 = vpack.c.b16 %v746, %v722
        %v1011 = vpack.c.b16 %v747, %v723
        %v1012 = vpack.c.b16 %v748, %v724
        %v1013 = vpack.c.b16 %v749, %v725
        %v1014 = vpack.c.b16 %v750, %v726
        %v1015 = vpack.c.b16 %v751, %v727
        %v1016 = vpack.c.b16 %v752, %v728
        %v1017 = vpack.c.b16 %v753, %v729
        %v1018 = vpack.c.b16 %v754, %v730
        %v1019 = vpack.c.b16 %v755, %v731
        %v1020 = vpack.c.b16 %v756, %v732
        %v1021 = vpack.c.b16 %v757, %v733
        %v1022 = vpack.c.b16 %v758, %v734
        %v1023 = vpack.c.b16 %v759, %v735
        %v1024 = vpack.c.b16 %v760, %v736
        %v1025 = vpack.c.b16 %v761, %v737
        %v1026 = vpack.c.b16 %v762, %v738
        %v1027 = vpack.c.b16 %v763, %v739
        %v1028 = vpack.c.b16 %v764, %v740
        %v1029 = vpack.c.b16 %v789, %v765
        %v1030 = vpack.c.b16 %v790, %v766
        %v1031 = vpack.c.b16 %v791, %v767
        %v1032 = vpack.c.b16 %v792, %v768
        %v1033 = vpack.c.b16 %v793, %v769
        %v1034 = vpack.c.b16 %v794, %v770
        %v1035 = vpack.c.b16 %v795, %v771
        %v1036 = vpack.c.b16 %v796, %v772
        %v1037 = vpack.c.b16 %v797, %v773
        %v1038 = vpack.c.b16 %v798, %v774
        %v1039 = vpack.c.b16 %v799, %v775
        %v1040 = vpack.c.b16 %v800, %v776
        %v1041 = vpack.c.b16 %v801, %v777
        %v1042 = vpack.c.b16 %v802, %v778
        %v1043 = vpack.c.b16 %v803, %v779
        %v1044 = vpack.c.b16 %v804, %v780
        %v1045 = vpack.c.b16 %v805, %v781
        %v1046 = vpack.c.b16 %v806, %v782
        %v1047 = vpack.c.b16 %v807, %v783
        %v1048 = vpack.c.b16 %v808, %v784
        %v1049 = vpack.c.b16 %v809, %v785
        %v1050 = vpack.c.b16 %v810, %v786
        %v1051 = vpack.c.b16 %v811, %v787
        %v1052 = vpack.c.b16 %v812, %v788
        %v1053 = vpack.c.b16 %v837, %v813
        %v1054 = vpack.c.b16 %v838, %v814
        %v1055 = vpack.c.b16 %v839, %v815
        %v1056 = vpack.c.b16 %v840, %v816
        %v1057 = vpack.c.b16 %v841, %v817
        %v1058 = vpack.c.b16 %v842, %v818
        %v1059 = vpack.c.b16 %v843, %v819
        %v1060 = vpack.c.b16 %v844, %v820
        %v1061 = vpack.c.b16 %v845, %v821
        %v1062 = vpack.c.b16 %v846, %v822
        %v1063 = vpack.c.b16 %v847, %v823
        %v1064 = vpack.c.b16 %v848, %v824
        %v1065 = vpack.c.b16 %v849, %v825
        %v1066 = vpack.c.b16 %v850, %v826
        %v1067 = vpack.c.b16 %v851, %v827
        %v1068 = vpack.c.b16 %v852, %v828
        %v1069 = vpack.c.b16 %v853, %v829
        %v1070 = vpack.c.b16 %v854, %v830
        %v1071 = vpack.c.b16 %v855, %v831
        %v1072 = vpack.c.b16 %v856, %v832
        %v1073 = vpack.c.b16 %v857, %v833
        %v1074 = vpack.c.b16 %v858, %v834
        %v1075 = vpack.c.b16 %v859, %v835
        %v1076 = vpack.c.b16 %v860, %v836
        %v1077 = vpack.c.b16 %v885, %v861
        %v1078 = vpack.c.b16 %v886, %v862
        %v1079 = vpack.c.b16 %v887, %v863
        %v1080 = vpack.c.b16 %v888, %v864
        %v1081 = vpack.c.b16 %v889, %v865
        %v1082 = vpack.c.b16 %v890, %v866
        %v1083 = vpack.c.b16 %v891, %v867
        %v1084 = vpack.c.b16 %v892, %v868
        %v1085 = vpack.c.b16 %v893, %v869
        %v1086 = vpack.c.b16 %v894, %v870
        %v1087 = vpack.c.b16 %v895, %v871
        %v1088 = vpack.c.b16 %v896, %v872
        %v1089 = vpack.c.b16 %v897, %v873
        %v1090 = vpack.c.b16 %v898, %v874
        %v1091 = vpack.c.b16 %v899, %v875
        %v1092 = vpack.c.b16 %v900, %v876
        %v1093 = vpack.c.b16 %v901, %v877
        %v1094 = vpack.c.b16 %v902, %v878
        %v1095 = vpack.c.b16 %v903, %v879
        %v1096 = vpack.c.b16 %v904, %v880
        %v1097 = vpack.c.b16 %v905, %v881
        %v1098 = vpack.c.b16 %v906, %v882
        %v1099 = vpack.c.b16 %v907, %v883
        %v1100 = vpack.c.b16 %v908, %v884
        %v1101 = vpack.c.b16 %v933, %v909
        %v1102 = vpack.c.b16 %v934, %v910
        %v1103 = vpack.c.b16 %v935, %v911
        %v1104 = vpack.c.b16 %v936, %v912
        %v1105 = vpack.c.b16 %v937, %v913
        %v1106 = vpack.c.b16 %v938, %v914
        %v1107 = vpack.c.b16 %v939, %v915
        %v1108 = vpack.c.b16 %v940, %v916
        %v1109 = vpack.c.b16 %v941, %v917
        %v1110 = vpack.c.b16 %v942, %v918
        %v1111 = vpack.c.b16 %v943, %v919
        %v1112 = vpack.c.b16 %v944, %v920
        %v1113 = vpack.c.b16 %v945, %v921
        %v1114 = vpack.c.b16 %v946, %v922
        %v1115 = vpack.c.b16 %v947, %v923
        %v1116 = vpack.c.b16 %v948, %v924
        %v1117 = vpack.c.b16 %v949, %v925
        %v1118 = vpack.c.b16 %v950, %v926
        %v1119 = vpack.c.b16 %v951, %v927
        %v1120 = vpack.c.b16 %v952, %v928
        %v1121 = vpack.c.b16 %v953, %v929
        %v1122 = vpack.c.b16 %v954, %v930
        %v1123 = vpack.c.b16 %v955, %v931
        %v1124 = vpack.c.b16 %v956, %v932
        %v1125 = vpack.c.b16 %v981, %v957
        %v1126 = vpack.c.b16 %v982, %v958
        %v1127 = vpack.c.b16 %v983, %v959
        %v1128 = vpack.c.b16 %v984, %v960
        %v1129 = vpack.c.b16 %v985, %v961
        %v1130 = vpack.c.b16 %v986, %v962
        %v1131 = vpack.c.b16 %v987, %v963
        %v1132 = vpack.c.b16 %v988, %v964
        %v1133 = vpack.c.b16 %v989, %v965
        %v1134 = vpack.c.b16 %v990, %v966
        %v1135 = vpack.c.b16 %v991, %v967
        %v1136 = vpack.c.b16 %v992, %v968
        %v1137 = vpack.c.b16 %v993, %v969
        %v1138 = vpack.c.b16 %v994, %v970
        %v1139 = vpack.c.b16 %v995, %v971
        %v1140 = vpack.c.b16 %v996, %v972
        %v1141 = vpack.c.b16 %v997, %v973
        %v1142 = vpack.c.b16 %v998, %v974
        %v1143 = vpack.c.b16 %v999, %v975
        %v1144 = vpack.c.b16 %v1000, %v976
        %v1145 = vpack.c.b16 %v1001, %v977
        %v1146 = vpack.c.b16 %v1002, %v978
        %v1147 = vpack.c.b16 %v1003, %v979
        %v1148 = vpack.c.b16 %v1004, %v980
        %vm1293 = vcmask 785408
        %v1295 = vsel %vm1293, %v302, 0
        %1297 = vmatprep.subr.bf16.mxu0 0
        %1298 = vmatpush1.bf16.msra.mxu0 0
        %1299 = vmatprep.subr.bf16.mxu0 0
        %1300 = vmatpush1.bf16.msra.mxu0 0
        %1301 = vmatprep.subr.bf16.mxu0 %v1126
        %1302 = vmatpush1.bf16.msra.mxu0 %v1125
        %1303 = vmatprep.subr.bf16.mxu0 %v1102
        %1304 = vmatpush1.bf16.msra.mxu0 %v1101
        %1305 = vmatprep.subr.bf16.mxu0 %v1078
        %1306 = vmatpush1.bf16.msra.mxu0 %v1077
        %1307 = vmatprep.subr.bf16.mxu0 %v1054
        %1308 = vmatpush1.bf16.msra.mxu0 %v1053
        %1309 = vmatprep.subr.bf16.mxu0 %v1030
        %1310 = vmatpush1.bf16.msra.mxu0 %v1029
        %1311 = vmatprep.subr.bf16.mxu0 %v1006
        %1312 = vmatpush1.bf16.msra.mxu0 %v1005
        %1313 = vmatprep.subr.bf16.mxu0 0
        %1314 = vmatpush2.bf16.msra.mxu0 0
        %1315 = vmatprep.subr.bf16.mxu0 0
        %1316 = vmatpush2.bf16.msra.mxu0 0
        %1317 = vmatprep.subr.bf16.mxu0 0
        %1318 = vmatpush2.bf16.msra.mxu0 0
        %1319 = vmatprep.subr.bf16.mxu0 0
        %1320 = vmatpush2.bf16.msra.mxu0 0
        %1321 = vmatprep.subr.bf16.mxu0 0
        %1322 = vmatpush2.bf16.msra.mxu0 0
        %1323 = vmatprep.subr.bf16.mxu0 0
        %1324 = vmatpush2.bf16.msra.mxu0 0
        %1325 = vmatprep.subr.bf16.mxu0 0
        %1326 = vmatpush2.bf16.msra.mxu0 0
        %1327 = vmatprep.subr.bf16.mxu0 0
        %1328 = vmatpush2.bf16.msra.mxu0 0
        %1329 = vmatprep.mubr.bf16.mxu0 0
        %1330 = vmatmul.mubr.bf16.gmra.mxu0 %v1295
        %v1331 = vpop.f32.mrf.mxu0
        %v1332 = vadd.f32 %v456, %v1331
        %v1333 = vpop.f32.mrf.mxu0
        %v1334 = vadd.f32 %v460, %v1333
        %v1335 = vpop.f32.mrf.mxu0
        %v1336 = vpop.f32.mrf.mxu0
        %1337 = vdwg.mxu0
        %1338 = vmatprep.subr.bf16.mxu0 0
        %1339 = vmatpush1.bf16.msra.mxu0 0
        %1340 = vmatprep.subr.bf16.mxu0 0
        %1341 = vmatpush1.bf16.msra.mxu0 0
        %1342 = vmatprep.subr.bf16.mxu0 %v1128
        %1343 = vmatpush1.bf16.msra.mxu0 %v1127
        %1344 = vmatprep.subr.bf16.mxu0 %v1104
        %1345 = vmatpush1.bf16.msra.mxu0 %v1103
        %1346 = vmatprep.subr.bf16.mxu0 %v1080
        %1347 = vmatpush1.bf16.msra.mxu0 %v1079
        %1348 = vmatprep.subr.bf16.mxu0 %v1056
        %1349 = vmatpush1.bf16.msra.mxu0 %v1055
        %1350 = vmatprep.subr.bf16.mxu0 %v1032
        %1351 = vmatpush1.bf16.msra.mxu0 %v1031
        %1352 = vmatprep.subr.bf16.mxu0 %v1008
        %1353 = vmatpush1.bf16.msra.mxu0 %v1007
        %1354 = vmatprep.subr.bf16.mxu0 0
        %1355 = vmatpush2.bf16.msra.mxu0 0
        %1356 = vmatprep.subr.bf16.mxu0 0
        %1357 = vmatpush2.bf16.msra.mxu0 0
        %1358 = vmatprep.subr.bf16.mxu0 0
        %1359 = vmatpush2.bf16.msra.mxu0 0
        %1360 = vmatprep.subr.bf16.mxu0 0
        %1361 = vmatpush2.bf16.msra.mxu0 0
        %1362 = vmatprep.subr.bf16.mxu0 0
        %1363 = vmatpush2.bf16.msra.mxu0 0
        %1364 = vmatprep.subr.bf16.mxu0 0
        %1365 = vmatpush2.bf16.msra.mxu0 0
        %1366 = vmatprep.subr.bf16.mxu0 0
        %1367 = vmatpush2.bf16.msra.mxu0 0
        %1368 = vmatprep.subr.bf16.mxu0 0
        %1369 = vmatpush2.bf16.msra.mxu0 0
        %1370 = vmatprep.mubr.bf16.mxu0 0
        %1371 = vmatmul.mubr.bf16.gmra.mxu0 %v1295
        %v1372 = vpop.f32.mrf.mxu0
        %v1373 = vadd.f32 %v464, %v1372
        %v1374 = vpop.f32.mrf.mxu0
        %v1375 = vadd.f32 %v468, %v1374
        %v1376 = vpop.f32.mrf.mxu0
        %v1377 = vpop.f32.mrf.mxu0
        %1378 = vdwg.mxu0
        %1379 = vmatprep.subr.bf16.mxu0 0
        %1380 = vmatpush1.bf16.msra.mxu0 0
        %1381 = vmatprep.subr.bf16.mxu0 0
        %1382 = vmatpush1.bf16.msra.mxu0 0
        %1383 = vmatprep.subr.bf16.mxu0 %v1130
        %1384 = vmatpush1.bf16.msra.mxu0 %v1129
        %1385 = vmatprep.subr.bf16.mxu0 %v1106
        %1386 = vmatpush1.bf16.msra.mxu0 %v1105
        %1387 = vmatprep.subr.bf16.mxu0 %v1082
        %1388 = vmatpush1.bf16.msra.mxu0 %v1081
        %1389 = vmatprep.subr.bf16.mxu0 %v1058
        %1390 = vmatpush1.bf16.msra.mxu0 %v1057
        %1391 = vmatprep.subr.bf16.mxu0 %v1034
        %1392 = vmatpush1.bf16.msra.mxu0 %v1033
        %1393 = vmatprep.subr.bf16.mxu0 %v1010
        %1394 = vmatpush1.bf16.msra.mxu0 %v1009
        %1395 = vmatprep.subr.bf16.mxu0 0
        %1396 = vmatpush2.bf16.msra.mxu0 0
        %1397 = vmatprep.subr.bf16.mxu0 0
        %1398 = vmatpush2.bf16.msra.mxu0 0
        %1399 = vmatprep.subr.bf16.mxu0 0
        %1400 = vmatpush2.bf16.msra.mxu0 0
        %1401 = vmatprep.subr.bf16.mxu0 0
        %1402 = vmatpush2.bf16.msra.mxu0 0
        %1403 = vmatprep.subr.bf16.mxu0 0
        %1404 = vmatpush2.bf16.msra.mxu0 0
        %1405 = vmatprep.subr.bf16.mxu0 0
        %1406 = vmatpush2.bf16.msra.mxu0 0
        %1407 = vmatprep.subr.bf16.mxu0 0
        %1408 = vmatpush2.bf16.msra.mxu0 0
        %1409 = vmatprep.subr.bf16.mxu0 0
        %1410 = vmatpush2.bf16.msra.mxu0 0
        %1411 = vmatprep.mubr.bf16.mxu0 0
        %1412 = vmatmul.mubr.bf16.gmra.mxu0 %v1295
        %v1413 = vpop.f32.mrf.mxu0
        %v1414 = vadd.f32 %v472, %v1413
        %v1415 = vpop.f32.mrf.mxu0
        %v1416 = vadd.f32 %v476, %v1415
        %v1417 = vpop.f32.mrf.mxu0
        %v1418 = vpop.f32.mrf.mxu0
        %1419 = vdwg.mxu0
        %1420 = vmatprep.subr.bf16.mxu0 0
        %1421 = vmatpush1.bf16.msra.mxu0 0
        %1422 = vmatprep.subr.bf16.mxu0 0
        %1423 = vmatpush1.bf16.msra.mxu0 0
        %1424 = vmatprep.subr.bf16.mxu0 %v1132
        %1425 = vmatpush1.bf16.msra.mxu0 %v1131
        %1426 = vmatprep.subr.bf16.mxu0 %v1108
        %1427 = vmatpush1.bf16.msra.mxu0 %v1107
        %1428 = vmatprep.subr.bf16.mxu0 %v1084
        %1429 = vmatpush1.bf16.msra.mxu0 %v1083
        %1430 = vmatprep.subr.bf16.mxu0 %v1060
        %1431 = vmatpush1.bf16.msra.mxu0 %v1059
        %1432 = vmatprep.subr.bf16.mxu0 %v1036
        %1433 = vmatpush1.bf16.msra.mxu0 %v1035
        %1434 = vmatprep.subr.bf16.mxu0 %v1012
        %1435 = vmatpush1.bf16.msra.mxu0 %v1011
        %1436 = vmatprep.subr.bf16.mxu0 0
        %1437 = vmatpush2.bf16.msra.mxu0 0
        %1438 = vmatprep.subr.bf16.mxu0 0
        %1439 = vmatpush2.bf16.msra.mxu0 0
        %1440 = vmatprep.subr.bf16.mxu0 0
        %1441 = vmatpush2.bf16.msra.mxu0 0
        %1442 = vmatprep.subr.bf16.mxu0 0
        %1443 = vmatpush2.bf16.msra.mxu0 0
        %1444 = vmatprep.subr.bf16.mxu0 0
        %1445 = vmatpush2.bf16.msra.mxu0 0
        %1446 = vmatprep.subr.bf16.mxu0 0
        %1447 = vmatpush2.bf16.msra.mxu0 0
        %1448 = vmatprep.subr.bf16.mxu0 0
        %1449 = vmatpush2.bf16.msra.mxu0 0
        %1450 = vmatprep.subr.bf16.mxu0 0
        %1451 = vmatpush2.bf16.msra.mxu0 0
        %1452 = vmatprep.mubr.bf16.mxu0 0
        %1453 = vmatmul.mubr.bf16.gmra.mxu0 %v1295
        %v1454 = vpop.f32.mrf.mxu0
        %v1455 = vadd.f32 %v480, %v1454
        %v1456 = vpop.f32.mrf.mxu0
        %v1457 = vadd.f32 %v484, %v1456
        %v1458 = vpop.f32.mrf.mxu0
        %v1459 = vpop.f32.mrf.mxu0
        %1460 = vdwg.mxu0
        %1461 = vmatprep.subr.bf16.mxu0 0
        %1462 = vmatpush1.bf16.msra.mxu0 0
        %1463 = vmatprep.subr.bf16.mxu0 0
        %1464 = vmatpush1.bf16.msra.mxu0 0
        %1465 = vmatprep.subr.bf16.mxu0 %v1134
        %1466 = vmatpush1.bf16.msra.mxu0 %v1133
        %1467 = vmatprep.subr.bf16.mxu0 %v1110
        %1468 = vmatpush1.bf16.msra.mxu0 %v1109
        %1469 = vmatprep.subr.bf16.mxu0 %v1086
        %1470 = vmatpush1.bf16.msra.mxu0 %v1085
        %1471 = vmatprep.subr.bf16.mxu0 %v1062
        %1472 = vmatpush1.bf16.msra.mxu0 %v1061
        %1473 = vmatprep.subr.bf16.mxu0 %v1038
        %1474 = vmatpush1.bf16.msra.mxu0 %v1037
        %1475 = vmatprep.subr.bf16.mxu0 %v1014
        %1476 = vmatpush1.bf16.msra.mxu0 %v1013
        %1477 = vmatprep.subr.bf16.mxu0 0
        %1478 = vmatpush2.bf16.msra.mxu0 0
        %1479 = vmatprep.subr.bf16.mxu0 0
        %1480 = vmatpush2.bf16.msra.mxu0 0
        %1481 = vmatprep.subr.bf16.mxu0 0
        %1482 = vmatpush2.bf16.msra.mxu0 0
        %1483 = vmatprep.subr.bf16.mxu0 0
        %1484 = vmatpush2.bf16.msra.mxu0 0
        %1485 = vmatprep.subr.bf16.mxu0 0
        %1486 = vmatpush2.bf16.msra.mxu0 0
        %1487 = vmatprep.subr.bf16.mxu0 0
        %1488 = vmatpush2.bf16.msra.mxu0 0
        %1489 = vmatprep.subr.bf16.mxu0 0
        %1490 = vmatpush2.bf16.msra.mxu0 0
        %1491 = vmatprep.subr.bf16.mxu0 0
        %1492 = vmatpush2.bf16.msra.mxu0 0
        %1493 = vmatprep.mubr.bf16.mxu0 0
        %1494 = vmatmul.mubr.bf16.gmra.mxu0 %v1295
        %v1495 = vpop.f32.mrf.mxu0
        %v1496 = vadd.f32 %v488, %v1495
        %v1497 = vpop.f32.mrf.mxu0
        %v1498 = vadd.f32 %v492, %v1497
        %v1499 = vpop.f32.mrf.mxu0
        %v1500 = vpop.f32.mrf.mxu0
        %1501 = vdwg.mxu0
        %1502 = vmatprep.subr.bf16.mxu0 0
        %1503 = vmatpush1.bf16.msra.mxu0 0
        %1504 = vmatprep.subr.bf16.mxu0 0
        %1505 = vmatpush1.bf16.msra.mxu0 0
        %1506 = vmatprep.subr.bf16.mxu0 %v1136
        %1507 = vmatpush1.bf16.msra.mxu0 %v1135
        %1508 = vmatprep.subr.bf16.mxu0 %v1112
        %1509 = vmatpush1.bf16.msra.mxu0 %v1111
        %1510 = vmatprep.subr.bf16.mxu0 %v1088
        %1511 = vmatpush1.bf16.msra.mxu0 %v1087
        %1512 = vmatprep.subr.bf16.mxu0 %v1064
        %1513 = vmatpush1.bf16.msra.mxu0 %v1063
        %1514 = vmatprep.subr.bf16.mxu0 %v1040
        %1515 = vmatpush1.bf16.msra.mxu0 %v1039
        %1516 = vmatprep.subr.bf16.mxu0 %v1016
        %1517 = vmatpush1.bf16.msra.mxu0 %v1015
        %1518 = vmatprep.subr.bf16.mxu0 0
        %1519 = vmatpush2.bf16.msra.mxu0 0
        %1520 = vmatprep.subr.bf16.mxu0 0
        %1521 = vmatpush2.bf16.msra.mxu0 0
        %1522 = vmatprep.subr.bf16.mxu0 0
        %1523 = vmatpush2.bf16.msra.mxu0 0
        %1524 = vmatprep.subr.bf16.mxu0 0
        %1525 = vmatpush2.bf16.msra.mxu0 0
        %1526 = vmatprep.subr.bf16.mxu0 0
        %1527 = vmatpush2.bf16.msra.mxu0 0
        %1528 = vmatprep.subr.bf16.mxu0 0
        %1529 = vmatpush2.bf16.msra.mxu0 0
        %1530 = vmatprep.subr.bf16.mxu0 0
        %1531 = vmatpush2.bf16.msra.mxu0 0
        %1532 = vmatprep.subr.bf16.mxu0 0
        %1533 = vmatpush2.bf16.msra.mxu0 0
        %1534 = vmatprep.mubr.bf16.mxu0 0
        %1535 = vmatmul.mubr.bf16.gmra.mxu0 %v1295
        %v1536 = vpop.f32.mrf.mxu0
        %v1537 = vadd.f32 %v496, %v1536
        %v1538 = vpop.f32.mrf.mxu0
        %v1539 = vadd.f32 %v500, %v1538
        %v1540 = vpop.f32.mrf.mxu0
        %v1541 = vpop.f32.mrf.mxu0
        %1542 = vdwg.mxu0
        %1543 = vmatprep.subr.bf16.mxu0 0
        %1544 = vmatpush1.bf16.msra.mxu0 0
        %1545 = vmatprep.subr.bf16.mxu0 0
        %1546 = vmatpush1.bf16.msra.mxu0 0
        %1547 = vmatprep.subr.bf16.mxu0 %v1138
        %1548 = vmatpush1.bf16.msra.mxu0 %v1137
        %1549 = vmatprep.subr.bf16.mxu0 %v1114
        %1550 = vmatpush1.bf16.msra.mxu0 %v1113
        %1551 = vmatprep.subr.bf16.mxu0 %v1090
        %1552 = vmatpush1.bf16.msra.mxu0 %v1089
        %1553 = vmatprep.subr.bf16.mxu0 %v1066
        %1554 = vmatpush1.bf16.msra.mxu0 %v1065
        %1555 = vmatprep.subr.bf16.mxu0 %v1042
        %1556 = vmatpush1.bf16.msra.mxu0 %v1041
        %1557 = vmatprep.subr.bf16.mxu0 %v1018
        %1558 = vmatpush1.bf16.msra.mxu0 %v1017
        %1559 = vmatprep.subr.bf16.mxu0 0
        %1560 = vmatpush2.bf16.msra.mxu0 0
        %1561 = vmatprep.subr.bf16.mxu0 0
        %1562 = vmatpush2.bf16.msra.mxu0 0
        %1563 = vmatprep.subr.bf16.mxu0 0
        %1564 = vmatpush2.bf16.msra.mxu0 0
        %1565 = vmatprep.subr.bf16.mxu0 0
        %1566 = vmatpush2.bf16.msra.mxu0 0
        %1567 = vmatprep.subr.bf16.mxu0 0
        %1568 = vmatpush2.bf16.msra.mxu0 0
        %1569 = vmatprep.subr.bf16.mxu0 0
        %1570 = vmatpush2.bf16.msra.mxu0 0
        %1571 = vmatprep.subr.bf16.mxu0 0
        %1572 = vmatpush2.bf16.msra.mxu0 0
        %1573 = vmatprep.subr.bf16.mxu0 0
        %1574 = vmatpush2.bf16.msra.mxu0 0
        %1575 = vmatprep.mubr.bf16.mxu0 0
        %1576 = vmatmul.mubr.bf16.gmra.mxu0 %v1295
        %v1577 = vpop.f32.mrf.mxu0
        %v1578 = vadd.f32 %v504, %v1577
        %v1579 = vpop.f32.mrf.mxu0
        %v1580 = vadd.f32 %v508, %v1579
        %v1581 = vpop.f32.mrf.mxu0
        %v1582 = vpop.f32.mrf.mxu0
        %1583 = vdwg.mxu0
        %1584 = vmatprep.subr.bf16.mxu0 0
        %1585 = vmatpush1.bf16.msra.mxu0 0
        %1586 = vmatprep.subr.bf16.mxu0 0
        %1587 = vmatpush1.bf16.msra.mxu0 0
        %1588 = vmatprep.subr.bf16.mxu0 %v1140
        %1589 = vmatpush1.bf16.msra.mxu0 %v1139
        %1590 = vmatprep.subr.bf16.mxu0 %v1116
        %1591 = vmatpush1.bf16.msra.mxu0 %v1115
        %1592 = vmatprep.subr.bf16.mxu0 %v1092
        %1593 = vmatpush1.bf16.msra.mxu0 %v1091
        %1594 = vmatprep.subr.bf16.mxu0 %v1068
        %1595 = vmatpush1.bf16.msra.mxu0 %v1067
        %1596 = vmatprep.subr.bf16.mxu0 %v1044
        %1597 = vmatpush1.bf16.msra.mxu0 %v1043
        %1598 = vmatprep.subr.bf16.mxu0 %v1020
        %1599 = vmatpush1.bf16.msra.mxu0 %v1019
        %1600 = vmatprep.subr.bf16.mxu0 0
        %1601 = vmatpush2.bf16.msra.mxu0 0
        %1602 = vmatprep.subr.bf16.mxu0 0
        %1603 = vmatpush2.bf16.msra.mxu0 0
        %1604 = vmatprep.subr.bf16.mxu0 0
        %1605 = vmatpush2.bf16.msra.mxu0 0
        %1606 = vmatprep.subr.bf16.mxu0 0
        %1607 = vmatpush2.bf16.msra.mxu0 0
        %1608 = vmatprep.subr.bf16.mxu0 0
        %1609 = vmatpush2.bf16.msra.mxu0 0
        %1610 = vmatprep.subr.bf16.mxu0 0
        %1611 = vmatpush2.bf16.msra.mxu0 0
        %1612 = vmatprep.subr.bf16.mxu0 0
        %1613 = vmatpush2.bf16.msra.mxu0 0
        %1614 = vmatprep.subr.bf16.mxu0 0
        %1615 = vmatpush2.bf16.msra.mxu0 0
        %1616 = vmatprep.mubr.bf16.mxu0 0
        %1617 = vmatmul.mubr.bf16.gmra.mxu0 %v1295
        %v1618 = vpop.f32.mrf.mxu0
        %v1619 = vadd.f32 %v512, %v1618
        %v1620 = vpop.f32.mrf.mxu0
        %v1621 = vadd.f32 %v516, %v1620
        %v1622 = vpop.f32.mrf.mxu0
        %v1623 = vpop.f32.mrf.mxu0
        %1624 = vdwg.mxu0
        %1625 = vmatprep.subr.bf16.mxu0 0
        %1626 = vmatpush1.bf16.msra.mxu0 0
        %1627 = vmatprep.subr.bf16.mxu0 0
        %1628 = vmatpush1.bf16.msra.mxu0 0
        %1629 = vmatprep.subr.bf16.mxu0 %v1142
        %1630 = vmatpush1.bf16.msra.mxu0 %v1141
        %1631 = vmatprep.subr.bf16.mxu0 %v1118
        %1632 = vmatpush1.bf16.msra.mxu0 %v1117
        %1633 = vmatprep.subr.bf16.mxu0 %v1094
        %1634 = vmatpush1.bf16.msra.mxu0 %v1093
        %1635 = vmatprep.subr.bf16.mxu0 %v1070
        %1636 = vmatpush1.bf16.msra.mxu0 %v1069
        %1637 = vmatprep.subr.bf16.mxu0 %v1046
        %1638 = vmatpush1.bf16.msra.mxu0 %v1045
        %1639 = vmatprep.subr.bf16.mxu0 %v1022
        %1640 = vmatpush1.bf16.msra.mxu0 %v1021
        %1641 = vmatprep.subr.bf16.mxu0 0
        %1642 = vmatpush2.bf16.msra.mxu0 0
        %1643 = vmatprep.subr.bf16.mxu0 0
        %1644 = vmatpush2.bf16.msra.mxu0 0
        %1645 = vmatprep.subr.bf16.mxu0 0
        %1646 = vmatpush2.bf16.msra.mxu0 0
        %1647 = vmatprep.subr.bf16.mxu0 0
        %1648 = vmatpush2.bf16.msra.mxu0 0
        %1649 = vmatprep.subr.bf16.mxu0 0
        %1650 = vmatpush2.bf16.msra.mxu0 0
        %1651 = vmatprep.subr.bf16.mxu0 0
        %1652 = vmatpush2.bf16.msra.mxu0 0
        %1653 = vmatprep.subr.bf16.mxu0 0
        %1654 = vmatpush2.bf16.msra.mxu0 0
        %1655 = vmatprep.subr.bf16.mxu0 0
        %1656 = vmatpush2.bf16.msra.mxu0 0
        %1657 = vmatprep.mubr.bf16.mxu0 0
        %1658 = vmatmul.mubr.bf16.gmra.mxu0 %v1295
        %v1659 = vpop.f32.mrf.mxu0
        %v1660 = vadd.f32 %v520, %v1659
        %v1661 = vpop.f32.mrf.mxu0
        %v1662 = vadd.f32 %v524, %v1661
        %v1663 = vpop.f32.mrf.mxu0
        %v1664 = vpop.f32.mrf.mxu0
        %1665 = vdwg.mxu0
        %1666 = vmatprep.subr.bf16.mxu0 0
        %1667 = vmatpush1.bf16.msra.mxu0 0
        %1668 = vmatprep.subr.bf16.mxu0 0
        %1669 = vmatpush1.bf16.msra.mxu0 0
        %1670 = vmatprep.subr.bf16.mxu0 %v1144
        %1671 = vmatpush1.bf16.msra.mxu0 %v1143
        %1672 = vmatprep.subr.bf16.mxu0 %v1120
        %1673 = vmatpush1.bf16.msra.mxu0 %v1119
        %1674 = vmatprep.subr.bf16.mxu0 %v1096
        %1675 = vmatpush1.bf16.msra.mxu0 %v1095
        %1676 = vmatprep.subr.bf16.mxu0 %v1072
        %1677 = vmatpush1.bf16.msra.mxu0 %v1071
        %1678 = vmatprep.subr.bf16.mxu0 %v1048
        %1679 = vmatpush1.bf16.msra.mxu0 %v1047
        %1680 = vmatprep.subr.bf16.mxu0 %v1024
        %1681 = vmatpush1.bf16.msra.mxu0 %v1023
        %1682 = vmatprep.subr.bf16.mxu0 0
        %1683 = vmatpush2.bf16.msra.mxu0 0
        %1684 = vmatprep.subr.bf16.mxu0 0
        %1685 = vmatpush2.bf16.msra.mxu0 0
        %1686 = vmatprep.subr.bf16.mxu0 0
        %1687 = vmatpush2.bf16.msra.mxu0 0
        %1688 = vmatprep.subr.bf16.mxu0 0
        %1689 = vmatpush2.bf16.msra.mxu0 0
        %1690 = vmatprep.subr.bf16.mxu0 0
        %1691 = vmatpush2.bf16.msra.mxu0 0
        %1692 = vmatprep.subr.bf16.mxu0 0
        %1693 = vmatpush2.bf16.msra.mxu0 0
        %1694 = vmatprep.subr.bf16.mxu0 0
        %1695 = vmatpush2.bf16.msra.mxu0 0
        %1696 = vmatprep.subr.bf16.mxu0 0
        %1697 = vmatpush2.bf16.msra.mxu0 0
        %1698 = vmatprep.mubr.bf16.mxu0 0
        %1699 = vmatmul.mubr.bf16.gmra.mxu0 %v1295
        %v1700 = vpop.f32.mrf.mxu0
        %v1701 = vadd.f32 %v528, %v1700
        %v1702 = vpop.f32.mrf.mxu0
        %v1703 = vadd.f32 %v532, %v1702
        %v1704 = vpop.f32.mrf.mxu0
        %v1705 = vpop.f32.mrf.mxu0
        %1706 = vdwg.mxu0
        %1707 = vmatprep.subr.bf16.mxu0 0
        %1708 = vmatpush1.bf16.msra.mxu0 0
        %1709 = vmatprep.subr.bf16.mxu0 0
        %1710 = vmatpush1.bf16.msra.mxu0 0
        %1711 = vmatprep.subr.bf16.mxu0 %v1146
        %1712 = vmatpush1.bf16.msra.mxu0 %v1145
        %1713 = vmatprep.subr.bf16.mxu0 %v1122
        %1714 = vmatpush1.bf16.msra.mxu0 %v1121
        %1715 = vmatprep.subr.bf16.mxu0 %v1098
        %1716 = vmatpush1.bf16.msra.mxu0 %v1097
        %1717 = vmatprep.subr.bf16.mxu0 %v1074
        %1718 = vmatpush1.bf16.msra.mxu0 %v1073
        %1719 = vmatprep.subr.bf16.mxu0 %v1050
        %1720 = vmatpush1.bf16.msra.mxu0 %v1049
        %1721 = vmatprep.subr.bf16.mxu0 %v1026
        %1722 = vmatpush1.bf16.msra.mxu0 %v1025
        %1723 = vmatprep.subr.bf16.mxu0 0
        %1724 = vmatpush2.bf16.msra.mxu0 0
        %1725 = vmatprep.subr.bf16.mxu0 0
        %1726 = vmatpush2.bf16.msra.mxu0 0
        %1727 = vmatprep.subr.bf16.mxu0 0
        %1728 = vmatpush2.bf16.msra.mxu0 0
        %1729 = vmatprep.subr.bf16.mxu0 0
        %1730 = vmatpush2.bf16.msra.mxu0 0
        %1731 = vmatprep.subr.bf16.mxu0 0
        %1732 = vmatpush2.bf16.msra.mxu0 0
        %1733 = vmatprep.subr.bf16.mxu0 0
        %1734 = vmatpush2.bf16.msra.mxu0 0
        %1735 = vmatprep.subr.bf16.mxu0 0
        %1736 = vmatpush2.bf16.msra.mxu0 0
        %1737 = vmatprep.subr.bf16.mxu0 0
        %1738 = vmatpush2.bf16.msra.mxu0 0
        %1739 = vmatprep.mubr.bf16.mxu0 0
        %1740 = vmatmul.mubr.bf16.gmra.mxu0 %v1295
        %v1741 = vpop.f32.mrf.mxu0
        %v1742 = vadd.f32 %v536, %v1741
        %v1743 = vpop.f32.mrf.mxu0
        %v1744 = vadd.f32 %v540, %v1743
        %v1745 = vpop.f32.mrf.mxu0
        %v1746 = vpop.f32.mrf.mxu0
        %1747 = vdwg.mxu0
        %1748 = vmatprep.subr.bf16.mxu0 0
        %1749 = vmatpush1.bf16.msra.mxu0 0
        %1750 = vmatprep.subr.bf16.mxu0 0
        %1751 = vmatpush1.bf16.msra.mxu0 0
        %1752 = vmatprep.subr.bf16.mxu0 %v1148
        %1753 = vmatpush1.bf16.msra.mxu0 %v1147
        %1754 = vmatprep.subr.bf16.mxu0 %v1124
        %1755 = vmatpush1.bf16.msra.mxu0 %v1123
        %1756 = vmatprep.subr.bf16.mxu0 %v1100
        %1757 = vmatpush1.bf16.msra.mxu0 %v1099
        %1758 = vmatprep.subr.bf16.mxu0 %v1076
        %1759 = vmatpush1.bf16.msra.mxu0 %v1075
        %1760 = vmatprep.subr.bf16.mxu0 %v1052
        %1761 = vmatpush1.bf16.msra.mxu0 %v1051
        %1762 = vmatprep.subr.bf16.mxu0 %v1028
        %1763 = vmatpush1.bf16.msra.mxu0 %v1027
        %1764 = vmatprep.subr.bf16.mxu0 0
        %1765 = vmatpush2.bf16.msra.mxu0 0
        %1766 = vmatprep.subr.bf16.mxu0 0
        %1767 = vmatpush2.bf16.msra.mxu0 0
        %1768 = vmatprep.subr.bf16.mxu0 0
        %1769 = vmatpush2.bf16.msra.mxu0 0
        %1770 = vmatprep.subr.bf16.mxu0 0
        %1771 = vmatpush2.bf16.msra.mxu0 0
        %1772 = vmatprep.subr.bf16.mxu0 0
        %1773 = vmatpush2.bf16.msra.mxu0 0
        %1774 = vmatprep.subr.bf16.mxu0 0
        %1775 = vmatpush2.bf16.msra.mxu0 0
        %1776 = vmatprep.subr.bf16.mxu0 0
        %1777 = vmatpush2.bf16.msra.mxu0 0
        %1778 = vmatprep.subr.bf16.mxu0 0
        %1779 = vmatpush2.bf16.msra.mxu0 0
        %1780 = vmatprep.mubr.bf16.mxu0 0
        %1781 = vmatmul.mubr.bf16.gmra.mxu0 %v1295
        %v1782 = vpop.f32.mrf.mxu0
        %v1783 = vadd.f32 %v544, %v1782
        %v1784 = vpop.f32.mrf.mxu0
        %v1785 = vadd.f32 %v548, %v1784
        %v1786 = vpop.f32.mrf.mxu0
        %v1787 = vpop.f32.mrf.mxu0
        %1788 = vdwg.mxu0
        %v1789 = vld [vmem:[%s262] sm:$0x1]
        %v1791 = vlaneseq
        %v1792 = vshrl.u32 %v1791, 7
        %v1793 = vsub.s32 0, %v1792
        %v1794 = vrot.slane %v1789, %v1793
        %v1796 = vpack.c.bf16 %v1332, %v1332
        %v1797 = vpack.c.bf16 %v1496, %v1496
        %v1798 = vpack.c.bf16 %v1660, %v1660
        %1799 = vmatprep.subr.bf16.mxu0 0
        %1800 = vmatpush1.bf16.xpose.msra.mxu0 0
        %1801 = vmatprep.subr.bf16.mxu0 0
        %1802 = vmatpush1.bf16.xpose.msra.mxu0 0
        %1803 = vmatprep.subr.bf16.mxu0 0
        %1804 = vmatpush1.bf16.xpose.msra.mxu0 0
        %1805 = vmatprep.subr.bf16.mxu0 0
        %1806 = vmatpush1.bf16.xpose.msra.mxu0 0
        %1807 = vmatprep.subr.bf16.mxu0 0
        %1808 = vmatpush1.bf16.xpose.msra.mxu0 0
        %1809 = vmatprep.subr.bf16.mxu0 0
        %1810 = vmatpush1.bf16.xpose.msra.mxu0 0
        %1811 = vmatprep.subr.bf16.mxu0 0
        %1812 = vmatpush1.bf16.xpose.msra.mxu0 0
        %1813 = vmatprep.subr.bf16.mxu0 0
        %1814 = vmatpush1.bf16.xpose.msra.mxu0 %v1797
        %1815 = vmatprep.subr.bf16.mxu0 0
        %1816 = vmatpush2.bf16.xpose.msra.mxu0 0
        %1817 = vmatprep.subr.bf16.mxu0 0
        %1818 = vmatpush2.bf16.xpose.msra.mxu0 0
        %1819 = vmatprep.subr.bf16.mxu0 0
        %1820 = vmatpush2.bf16.xpose.msra.mxu0 0
        %1821 = vmatprep.subr.bf16.mxu0 0
        %1822 = vmatpush2.bf16.xpose.msra.mxu0 0
        %1823 = vmatprep.subr.bf16.mxu0 0
        %1824 = vmatpush2.bf16.xpose.msra.mxu0 0
        %1825 = vmatprep.subr.bf16.mxu0 0
        %1826 = vmatpush2.bf16.xpose.msra.mxu0 0
        %1827 = vmatprep.subr.bf16.mxu0 0
        %1828 = vmatpush2.bf16.xpose.msra.mxu0 0
        %1829 = vmatprep.subr.bf16.mxu0 0
        %1830 = vmatpush2.bf16.xpose.msra.mxu0 0
        %1831 = vmatprep.mubr.bf16.mxu0 0
        %1832 = vmatmul.mubr.bf16.gmra.mxu0 %v1796
        %v1833 = vpop.f32.mrf.mxu0
        %v1834 = vadd.f32 %v1794, %v1833
        %v1835 = vpop.f32.mrf.mxu0
        %v1836 = vpop.f32.mrf.mxu0
        %v1837 = vpop.f32.mrf.mxu0
        %1838 = vdwg.mxu0
        %vm1839 = vcmask 64512
        %v1840 = vsel %vm1839, %v1834, -inf
        %1841 = vmax.xlane.f32.xlu0 %v1840
        %v1842 = vpop.xlane.xlu0 %1841
        %v1843 = vsub.f32 %v1834, %v1842
        %v1844 = vmul.f32 %v1843, 1.442695
        %v1845 = vpow.pop %v1844
        %v1846 = vsel %vm1839, %v1845, 0.0
        %1847 = vadd.xlane.f32.xlu0 %v1846
        %v1848 = vpop.xlane.xlu0 %1847
        %v1849 = vrcp.pop %v1848
        %v1850 = vmul.f32 %v1845, %v1849
        %v1851 = vpack.c.bf16 %v1850, %v1850
        %v1852 = vpack.c.bf16 %v1334, %v1334
        %v1853 = vpack.c.bf16 %v1498, %v1498
        %v1854 = vpack.c.bf16 %v1662, %v1662
        %1855 = vmatprep.subr.bf16.mxu0 0
        %1856 = vmatpush1.bf16.xpose.msra.mxu0 0
        %1857 = vmatprep.subr.bf16.mxu0 0
        %1858 = vmatpush1.bf16.xpose.msra.mxu0 0
        %1859 = vmatprep.subr.bf16.mxu0 0
        %1860 = vmatpush1.bf16.xpose.msra.mxu0 0
        %1861 = vmatprep.subr.bf16.mxu0 0
        %1862 = vmatpush1.bf16.xpose.msra.mxu0 0
        %1863 = vmatprep.subr.bf16.mxu0 0
        %1864 = vmatpush1.bf16.xpose.msra.mxu0 0
        %1865 = vmatprep.subr.bf16.mxu0 0
        %1866 = vmatpush1.bf16.xpose.msra.mxu0 0
        %1867 = vmatprep.subr.bf16.mxu0 0
        %1868 = vmatpush1.bf16.xpose.msra.mxu0 0
        %1869 = vmatprep.subr.bf16.mxu0 0
        %1870 = vmatpush1.bf16.xpose.msra.mxu0 %v1853
        %1871 = vmatprep.subr.bf16.mxu0 0
        %1872 = vmatpush2.bf16.xpose.msra.mxu0 0
        %1873 = vmatprep.subr.bf16.mxu0 0
        %1874 = vmatpush2.bf16.xpose.msra.mxu0 0
        %1875 = vmatprep.subr.bf16.mxu0 0
        %1876 = vmatpush2.bf16.xpose.msra.mxu0 0
        %1877 = vmatprep.subr.bf16.mxu0 0
        %1878 = vmatpush2.bf16.xpose.msra.mxu0 0
        %1879 = vmatprep.subr.bf16.mxu0 0
        %1880 = vmatpush2.bf16.xpose.msra.mxu0 0
        %1881 = vmatprep.subr.bf16.mxu0 0
        %1882 = vmatpush2.bf16.xpose.msra.mxu0 0
        %1883 = vmatprep.subr.bf16.mxu0 0
        %1884 = vmatpush2.bf16.xpose.msra.mxu0 0
        %1885 = vmatprep.subr.bf16.mxu0 0
        %1886 = vmatpush2.bf16.xpose.msra.mxu0 0
        %1887 = vmatprep.mubr.bf16.mxu0 0
        %1888 = vmatmul.mubr.bf16.gmra.mxu0 %v1852
        %v1889 = vpop.f32.mrf.mxu0
        %v1890 = vadd.f32 %v1794, %v1889
        %v1891 = vpop.f32.mrf.mxu0
        %v1892 = vpop.f32.mrf.mxu0
        %v1893 = vpop.f32.mrf.mxu0
        %1894 = vdwg.mxu0
        %v1895 = vsel %vm1839, %v1890, -inf
        %1896 = vmax.xlane.f32.xlu0 %v1895
        %v1897 = vpop.xlane.xlu0 %1896
        %v1898 = vsub.f32 %v1890, %v1897
        %v1899 = vmul.f32 %v1898, 1.442695
        %v1900 = vpow.pop %v1899
        %v1901 = vsel %vm1839, %v1900, 0.0
        %1902 = vadd.xlane.f32.xlu0 %v1901
        %v1903 = vpop.xlane.xlu0 %1902
        %v1904 = vrcp.pop %v1903
        %v1905 = vmul.f32 %v1900, %v1904
        %v1906 = vpack.c.bf16 %v1905, %v1905
        %v1908 = vsel %vm1839, %v1906, 0
        %vm1910 = vcmask 1043456
        %v1912 = vsel %vm1910, %v1854, 0
        %1914 = vmatprep.subr.bf16.mxu0 0
        %1915 = vmatpush1.bf16.msra.mxu0 0
        %1916 = vmatprep.subr.bf16.mxu0 0
        %1917 = vmatpush1.bf16.msra.mxu0 0
        %1918 = vmatprep.subr.bf16.mxu0 0
        %1919 = vmatpush1.bf16.msra.mxu0 0
        %1920 = vmatprep.subr.bf16.mxu0 0
        %1921 = vmatpush1.bf16.msra.mxu0 0
        %1922 = vmatprep.subr.bf16.mxu0 0
        %1923 = vmatpush1.bf16.msra.mxu0 0
        %1924 = vmatprep.subr.bf16.mxu0 0
        %1925 = vmatpush1.bf16.msra.mxu0 0
        %1926 = vmatprep.subr.bf16.mxu0 0
        %1927 = vmatpush1.bf16.msra.mxu0 0
        %1928 = vmatprep.subr.bf16.mxu0 0
        %1929 = vmatpush1.bf16.msra.mxu0 %v1912
        %1930 = vmatprep.subr.bf16.mxu0 0
        %1931 = vmatpush2.bf16.msra.mxu0 0
        %1932 = vmatprep.subr.bf16.mxu0 0
        %1933 = vmatpush2.bf16.msra.mxu0 0
        %1934 = vmatprep.subr.bf16.mxu0 0
        %1935 = vmatpush2.bf16.msra.mxu0 0
        %1936 = vmatprep.subr.bf16.mxu0 0
        %1937 = vmatpush2.bf16.msra.mxu0 0
        %1938 = vmatprep.subr.bf16.mxu0 0
        %1939 = vmatpush2.bf16.msra.mxu0 0
        %1940 = vmatprep.subr.bf16.mxu0 0
        %1941 = vmatpush2.bf16.msra.mxu0 0
        %1942 = vmatprep.subr.bf16.mxu0 0
        %1943 = vmatpush2.bf16.msra.mxu0 0
        %1944 = vmatprep.subr.bf16.mxu0 0
        %1945 = vmatpush2.bf16.msra.mxu0 0
        %1946 = vmatprep.mubr.bf16.mxu0 0
        %1947 = vmatmul.mubr.bf16.gmra.mxu0 %v1908
        %v1948 = vpop.f32.mrf.mxu0
        %v1949 = vadd.f32 0.0, %v1948
        %v1950 = vpop.f32.mrf.mxu0
        %v1951 = vpop.f32.mrf.mxu0
        %v1952 = vpop.f32.mrf.mxu0
        %1953 = vdwg.mxu0
        %v1955 = vsel %vm1839, %v1851, 0
        %v1958 = vsel %vm1910, %v1798, 0
        %1960 = vmatprep.subr.bf16.mxu0 0
        %1961 = vmatpush1.bf16.msra.mxu0 0
        %1962 = vmatprep.subr.bf16.mxu0 0
        %1963 = vmatpush1.bf16.msra.mxu0 0
        %1964 = vmatprep.subr.bf16.mxu0 0
        %1965 = vmatpush1.bf16.msra.mxu0 0
        %1966 = vmatprep.subr.bf16.mxu0 0
        %1967 = vmatpush1.bf16.msra.mxu0 0
        %1968 = vmatprep.subr.bf16.mxu0 0
        %1969 = vmatpush1.bf16.msra.mxu0 0
        %1970 = vmatprep.subr.bf16.mxu0 0
        %1971 = vmatpush1.bf16.msra.mxu0 0
        %1972 = vmatprep.subr.bf16.mxu0 0
        %1973 = vmatpush1.bf16.msra.mxu0 0
        %1974 = vmatprep.subr.bf16.mxu0 0
        %1975 = vmatpush1.bf16.msra.mxu0 %v1958
        %1976 = vmatprep.subr.bf16.mxu0 0
        %1977 = vmatpush2.bf16.msra.mxu0 0
        %1978 = vmatprep.subr.bf16.mxu0 0
        %1979 = vmatpush2.bf16.msra.mxu0 0
        %1980 = vmatprep.subr.bf16.mxu0 0
        %1981 = vmatpush2.bf16.msra.mxu0 0
        %1982 = vmatprep.subr.bf16.mxu0 0
        %1983 = vmatpush2.bf16.msra.mxu0 0
        %1984 = vmatprep.subr.bf16.mxu0 0
        %1985 = vmatpush2.bf16.msra.mxu0 0
        %1986 = vmatprep.subr.bf16.mxu0 0
        %1987 = vmatpush2.bf16.msra.mxu0 0
        %1988 = vmatprep.subr.bf16.mxu0 0
        %1989 = vmatpush2.bf16.msra.mxu0 0
        %1990 = vmatprep.subr.bf16.mxu0 0
        %1991 = vmatpush2.bf16.msra.mxu0 0
        %1992 = vmatprep.mubr.bf16.mxu0 0
        %1993 = vmatmul.mubr.bf16.gmra.mxu0 %v1955
        %v1994 = vpop.f32.mrf.mxu0
        %v1995 = vadd.f32 %v1949, %v1994
        %v1996 = vpop.f32.mrf.mxu0
        %v1997 = vpop.f32.mrf.mxu0
        %v1998 = vpop.f32.mrf.mxu0
        %1999 = vdwg.mxu0
        %v2000 = vpack.c.bf16 %v1373, %v1373
        %v2001 = vpack.c.bf16 %v1537, %v1537
        %v2002 = vpack.c.bf16 %v1701, %v1701
        %2003 = vmatprep.subr.bf16.mxu0 0
        %2004 = vmatpush1.bf16.xpose.msra.mxu0 0
        %2005 = vmatprep.subr.bf16.mxu0 0
        %2006 = vmatpush1.bf16.xpose.msra.mxu0 0
        %2007 = vmatprep.subr.bf16.mxu0 0
        %2008 = vmatpush1.bf16.xpose.msra.mxu0 0
        %2009 = vmatprep.subr.bf16.mxu0 0
        %2010 = vmatpush1.bf16.xpose.msra.mxu0 0
        %2011 = vmatprep.subr.bf16.mxu0 0
        %2012 = vmatpush1.bf16.xpose.msra.mxu0 0
        %2013 = vmatprep.subr.bf16.mxu0 0
        %2014 = vmatpush1.bf16.xpose.msra.mxu0 0
        %2015 = vmatprep.subr.bf16.mxu0 0
        %2016 = vmatpush1.bf16.xpose.msra.mxu0 0
        %2017 = vmatprep.subr.bf16.mxu0 0
        %2018 = vmatpush1.bf16.xpose.msra.mxu0 %v2001
        %2019 = vmatprep.subr.bf16.mxu0 0
        %2020 = vmatpush2.bf16.xpose.msra.mxu0 0
        %2021 = vmatprep.subr.bf16.mxu0 0
        %2022 = vmatpush2.bf16.xpose.msra.mxu0 0
        %2023 = vmatprep.subr.bf16.mxu0 0
        %2024 = vmatpush2.bf16.xpose.msra.mxu0 0
        %2025 = vmatprep.subr.bf16.mxu0 0
        %2026 = vmatpush2.bf16.xpose.msra.mxu0 0
        %2027 = vmatprep.subr.bf16.mxu0 0
        %2028 = vmatpush2.bf16.xpose.msra.mxu0 0
        %2029 = vmatprep.subr.bf16.mxu0 0
        %2030 = vmatpush2.bf16.xpose.msra.mxu0 0
        %2031 = vmatprep.subr.bf16.mxu0 0
        %2032 = vmatpush2.bf16.xpose.msra.mxu0 0
        %2033 = vmatprep.subr.bf16.mxu0 0
        %2034 = vmatpush2.bf16.xpose.msra.mxu0 0
        %2035 = vmatprep.mubr.bf16.mxu0 0
        %2036 = vmatmul.mubr.bf16.gmra.mxu0 %v2000
        %v2037 = vpop.f32.mrf.mxu0
        %v2038 = vadd.f32 %v1794, %v2037
        %v2039 = vpop.f32.mrf.mxu0
        %v2040 = vpop.f32.mrf.mxu0
        %v2041 = vpop.f32.mrf.mxu0
        %2042 = vdwg.mxu0
        %v2043 = vsel %vm1839, %v2038, -inf
        %2044 = vmax.xlane.f32.xlu0 %v2043
        %v2045 = vpop.xlane.xlu0 %2044
        %v2046 = vsub.f32 %v2038, %v2045
        %v2047 = vmul.f32 %v2046, 1.442695
        %v2048 = vpow.pop %v2047
        %v2049 = vsel %vm1839, %v2048, 0.0
        %2050 = vadd.xlane.f32.xlu0 %v2049
        %v2051 = vpop.xlane.xlu0 %2050
        %v2052 = vrcp.pop %v2051
        %v2053 = vmul.f32 %v2048, %v2052
        %v2054 = vpack.c.bf16 %v2053, %v2053
        %v2056 = vsel %vm1839, %v2054, 0
        %v2059 = vsel %vm1910, %v2002, 0
        %2061 = vmatprep.subr.bf16.mxu0 0
        %2062 = vmatpush1.bf16.msra.mxu0 0
        %2063 = vmatprep.subr.bf16.mxu0 0
        %2064 = vmatpush1.bf16.msra.mxu0 0
        %2065 = vmatprep.subr.bf16.mxu0 0
        %2066 = vmatpush1.bf16.msra.mxu0 0
        %2067 = vmatprep.subr.bf16.mxu0 0
        %2068 = vmatpush1.bf16.msra.mxu0 0
        %2069 = vmatprep.subr.bf16.mxu0 0
        %2070 = vmatpush1.bf16.msra.mxu0 0
        %2071 = vmatprep.subr.bf16.mxu0 0
        %2072 = vmatpush1.bf16.msra.mxu0 0
        %2073 = vmatprep.subr.bf16.mxu0 0
        %2074 = vmatpush1.bf16.msra.mxu0 0
        %2075 = vmatprep.subr.bf16.mxu0 0
        %2076 = vmatpush1.bf16.msra.mxu0 %v2059
        %2077 = vmatprep.subr.bf16.mxu0 0
        %2078 = vmatpush2.bf16.msra.mxu0 0
        %2079 = vmatprep.subr.bf16.mxu0 0
        %2080 = vmatpush2.bf16.msra.mxu0 0
        %2081 = vmatprep.subr.bf16.mxu0 0
        %2082 = vmatpush2.bf16.msra.mxu0 0
        %2083 = vmatprep.subr.bf16.mxu0 0
        %2084 = vmatpush2.bf16.msra.mxu0 0
        %2085 = vmatprep.subr.bf16.mxu0 0
        %2086 = vmatpush2.bf16.msra.mxu0 0
        %2087 = vmatprep.subr.bf16.mxu0 0
        %2088 = vmatpush2.bf16.msra.mxu0 0
        %2089 = vmatprep.subr.bf16.mxu0 0
        %2090 = vmatpush2.bf16.msra.mxu0 0
        %2091 = vmatprep.subr.bf16.mxu0 0
        %2092 = vmatpush2.bf16.msra.mxu0 0
        %2093 = vmatprep.mubr.bf16.mxu0 0
        %2094 = vmatmul.mubr.bf16.gmra.mxu0 %v2056
        %v2095 = vpop.f32.mrf.mxu0
        %v2096 = vadd.f32 0.0, %v2095
        %v2097 = vpop.f32.mrf.mxu0
        %v2098 = vpop.f32.mrf.mxu0
        %v2099 = vpop.f32.mrf.mxu0
        %2100 = vdwg.mxu0
        %v2101 = vadd.f32 %v1995, %v2096
        %v2102 = vpack.c.bf16 %v1375, %v1375
        %v2103 = vpack.c.bf16 %v1539, %v1539
        %v2104 = vpack.c.bf16 %v1703, %v1703
        %2105 = vmatprep.subr.bf16.mxu0 0
        %2106 = vmatpush1.bf16.xpose.msra.mxu0 0
        %2107 = vmatprep.subr.bf16.mxu0 0
        %2108 = vmatpush1.bf16.xpose.msra.mxu0 0
        %2109 = vmatprep.subr.bf16.mxu0 0
        %2110 = vmatpush1.bf16.xpose.msra.mxu0 0
        %2111 = vmatprep.subr.bf16.mxu0 0
        %2112 = vmatpush1.bf16.xpose.msra.mxu0 0
        %2113 = vmatprep.subr.bf16.mxu0 0
        %2114 = vmatpush1.bf16.xpose.msra.mxu0 0
        %2115 = vmatprep.subr.bf16.mxu0 0
        %2116 = vmatpush1.bf16.xpose.msra.mxu0 0
        %2117 = vmatprep.subr.bf16.mxu0 0
        %2118 = vmatpush1.bf16.xpose.msra.mxu0 0
        %2119 = vmatprep.subr.bf16.mxu0 0
        %2120 = vmatpush1.bf16.xpose.msra.mxu0 %v2103
        %2121 = vmatprep.subr.bf16.mxu0 0
        %2122 = vmatpush2.bf16.xpose.msra.mxu0 0
        %2123 = vmatprep.subr.bf16.mxu0 0
        %2124 = vmatpush2.bf16.xpose.msra.mxu0 0
        %2125 = vmatprep.subr.bf16.mxu0 0
        %2126 = vmatpush2.bf16.xpose.msra.mxu0 0
        %2127 = vmatprep.subr.bf16.mxu0 0
        %2128 = vmatpush2.bf16.xpose.msra.mxu0 0
        %2129 = vmatprep.subr.bf16.mxu0 0
        %2130 = vmatpush2.bf16.xpose.msra.mxu0 0
        %2131 = vmatprep.subr.bf16.mxu0 0
        %2132 = vmatpush2.bf16.xpose.msra.mxu0 0
        %2133 = vmatprep.subr.bf16.mxu0 0
        %2134 = vmatpush2.bf16.xpose.msra.mxu0 0
        %2135 = vmatprep.subr.bf16.mxu0 0
        %2136 = vmatpush2.bf16.xpose.msra.mxu0 0
        %2137 = vmatprep.mubr.bf16.mxu0 0
        %2138 = vmatmul.mubr.bf16.gmra.mxu0 %v2102
        %v2139 = vpop.f32.mrf.mxu0
        %v2140 = vadd.f32 %v1794, %v2139
        %v2141 = vpop.f32.mrf.mxu0
        %v2142 = vpop.f32.mrf.mxu0
        %v2143 = vpop.f32.mrf.mxu0
        %2144 = vdwg.mxu0
        %v2145 = vsel %vm1839, %v2140, -inf
        %2146 = vmax.xlane.f32.xlu0 %v2145
        %v2147 = vpop.xlane.xlu0 %2146
        %v2148 = vsub.f32 %v2140, %v2147
        %v2149 = vmul.f32 %v2148, 1.442695
        %v2150 = vpow.pop %v2149
        %v2151 = vsel %vm1839, %v2150, 0.0
        %2152 = vadd.xlane.f32.xlu0 %v2151
        %v2153 = vpop.xlane.xlu0 %2152
        %v2154 = vrcp.pop %v2153
        %v2155 = vmul.f32 %v2150, %v2154
        %v2156 = vpack.c.bf16 %v2155, %v2155
        %v2158 = vsel %vm1839, %v2156, 0
        %v2161 = vsel %vm1910, %v2104, 0
        %2163 = vmatprep.subr.bf16.mxu0 0
        %2164 = vmatpush1.bf16.msra.mxu0 0
        %2165 = vmatprep.subr.bf16.mxu0 0
        %2166 = vmatpush1.bf16.msra.mxu0 0
        %2167 = vmatprep.subr.bf16.mxu0 0
        %2168 = vmatpush1.bf16.msra.mxu0 0
        %2169 = vmatprep.subr.bf16.mxu0 0
        %2170 = vmatpush1.bf16.msra.mxu0 0
        %2171 = vmatprep.subr.bf16.mxu0 0
        %2172 = vmatpush1.bf16.msra.mxu0 0
        %2173 = vmatprep.subr.bf16.mxu0 0
        %2174 = vmatpush1.bf16.msra.mxu0 0
        %2175 = vmatprep.subr.bf16.mxu0 0
        %2176 = vmatpush1.bf16.msra.mxu0 0
        %2177 = vmatprep.subr.bf16.mxu0 0
        %2178 = vmatpush1.bf16.msra.mxu0 %v2161
        %2179 = vmatprep.subr.bf16.mxu0 0
        %2180 = vmatpush2.bf16.msra.mxu0 0
        %2181 = vmatprep.subr.bf16.mxu0 0
        %2182 = vmatpush2.bf16.msra.mxu0 0
        %2183 = vmatprep.subr.bf16.mxu0 0
        %2184 = vmatpush2.bf16.msra.mxu0 0
        %2185 = vmatprep.subr.bf16.mxu0 0
        %2186 = vmatpush2.bf16.msra.mxu0 0
        %2187 = vmatprep.subr.bf16.mxu0 0
        %2188 = vmatpush2.bf16.msra.mxu0 0
        %2189 = vmatprep.subr.bf16.mxu0 0
        %2190 = vmatpush2.bf16.msra.mxu0 0
        %2191 = vmatprep.subr.bf16.mxu0 0
        %2192 = vmatpush2.bf16.msra.mxu0 0
        %2193 = vmatprep.subr.bf16.mxu0 0
        %2194 = vmatpush2.bf16.msra.mxu0 0
        %2195 = vmatprep.mubr.bf16.mxu0 0
        %2196 = vmatmul.mubr.bf16.gmra.mxu0 %v2158
        %v2197 = vpop.f32.mrf.mxu0
        %v2198 = vadd.f32 0.0, %v2197
        %v2199 = vpop.f32.mrf.mxu0
        %v2200 = vpop.f32.mrf.mxu0
        %v2201 = vpop.f32.mrf.mxu0
        %2202 = vdwg.mxu0
        %v2203 = vadd.f32 %v2101, %v2198
        %v2204 = vpack.c.bf16 %v1414, %v1414
        %v2205 = vpack.c.bf16 %v1578, %v1578
        %v2206 = vpack.c.bf16 %v1742, %v1742
        %2207 = vmatprep.subr.bf16.mxu0 0
        %2208 = vmatpush1.bf16.xpose.msra.mxu0 0
        %2209 = vmatprep.subr.bf16.mxu0 0
        %2210 = vmatpush1.bf16.xpose.msra.mxu0 0
        %2211 = vmatprep.subr.bf16.mxu0 0
        %2212 = vmatpush1.bf16.xpose.msra.mxu0 0
        %2213 = vmatprep.subr.bf16.mxu0 0
        %2214 = vmatpush1.bf16.xpose.msra.mxu0 0
        %2215 = vmatprep.subr.bf16.mxu0 0
        %2216 = vmatpush1.bf16.xpose.msra.mxu0 0
        %2217 = vmatprep.subr.bf16.mxu0 0
        %2218 = vmatpush1.bf16.xpose.msra.mxu0 0
        %2219 = vmatprep.subr.bf16.mxu0 0
        %2220 = vmatpush1.bf16.xpose.msra.mxu0 0
        %2221 = vmatprep.subr.bf16.mxu0 0
        %2222 = vmatpush1.bf16.xpose.msra.mxu0 %v2205
        %2223 = vmatprep.subr.bf16.mxu0 0
        %2224 = vmatpush2.bf16.xpose.msra.mxu0 0
        %2225 = vmatprep.subr.bf16.mxu0 0
        %2226 = vmatpush2.bf16.xpose.msra.mxu0 0
        %2227 = vmatprep.subr.bf16.mxu0 0
        %2228 = vmatpush2.bf16.xpose.msra.mxu0 0
        %2229 = vmatprep.subr.bf16.mxu0 0
        %2230 = vmatpush2.bf16.xpose.msra.mxu0 0
        %2231 = vmatprep.subr.bf16.mxu0 0
        %2232 = vmatpush2.bf16.xpose.msra.mxu0 0
        %2233 = vmatprep.subr.bf16.mxu0 0
        %2234 = vmatpush2.bf16.xpose.msra.mxu0 0
        %2235 = vmatprep.subr.bf16.mxu0 0
        %2236 = vmatpush2.bf16.xpose.msra.mxu0 0
        %2237 = vmatprep.subr.bf16.mxu0 0
        %2238 = vmatpush2.bf16.xpose.msra.mxu0 0
        %2239 = vmatprep.mubr.bf16.mxu0 0
        %2240 = vmatmul.mubr.bf16.gmra.mxu0 %v2204
        %v2241 = vpop.f32.mrf.mxu0
        %v2242 = vadd.f32 %v1794, %v2241
        %v2243 = vpop.f32.mrf.mxu0
        %v2244 = vpop.f32.mrf.mxu0
        %v2245 = vpop.f32.mrf.mxu0
        %2246 = vdwg.mxu0
        %v2247 = vsel %vm1839, %v2242, -inf
        %2248 = vmax.xlane.f32.xlu0 %v2247
        %v2249 = vpop.xlane.xlu0 %2248
        %v2250 = vsub.f32 %v2242, %v2249
        %v2251 = vmul.f32 %v2250, 1.442695
        %v2252 = vpow.pop %v2251
        %v2253 = vsel %vm1839, %v2252, 0.0
        %2254 = vadd.xlane.f32.xlu0 %v2253
        %v2255 = vpop.xlane.xlu0 %2254
        %v2256 = vrcp.pop %v2255
        %v2257 = vmul.f32 %v2252, %v2256
        %v2258 = vpack.c.bf16 %v2257, %v2257
        %v2260 = vsel %vm1839, %v2258, 0
        %v2263 = vsel %vm1910, %v2206, 0
        %2265 = vmatprep.subr.bf16.mxu0 0
        %2266 = vmatpush1.bf16.msra.mxu0 0
        %2267 = vmatprep.subr.bf16.mxu0 0
        %2268 = vmatpush1.bf16.msra.mxu0 0
        %2269 = vmatprep.subr.bf16.mxu0 0
        %2270 = vmatpush1.bf16.msra.mxu0 0
        %2271 = vmatprep.subr.bf16.mxu0 0
        %2272 = vmatpush1.bf16.msra.mxu0 0
        %2273 = vmatprep.subr.bf16.mxu0 0
        %2274 = vmatpush1.bf16.msra.mxu0 0
        %2275 = vmatprep.subr.bf16.mxu0 0
        %2276 = vmatpush1.bf16.msra.mxu0 0
        %2277 = vmatprep.subr.bf16.mxu0 0
        %2278 = vmatpush1.bf16.msra.mxu0 0
        %2279 = vmatprep.subr.bf16.mxu0 0
        %2280 = vmatpush1.bf16.msra.mxu0 %v2263
        %2281 = vmatprep.subr.bf16.mxu0 0
        %2282 = vmatpush2.bf16.msra.mxu0 0
        %2283 = vmatprep.subr.bf16.mxu0 0
        %2284 = vmatpush2.bf16.msra.mxu0 0
        %2285 = vmatprep.subr.bf16.mxu0 0
        %2286 = vmatpush2.bf16.msra.mxu0 0
        %2287 = vmatprep.subr.bf16.mxu0 0
        %2288 = vmatpush2.bf16.msra.mxu0 0
        %2289 = vmatprep.subr.bf16.mxu0 0
        %2290 = vmatpush2.bf16.msra.mxu0 0
        %2291 = vmatprep.subr.bf16.mxu0 0
        %2292 = vmatpush2.bf16.msra.mxu0 0
        %2293 = vmatprep.subr.bf16.mxu0 0
        %2294 = vmatpush2.bf16.msra.mxu0 0
        %2295 = vmatprep.subr.bf16.mxu0 0
        %2296 = vmatpush2.bf16.msra.mxu0 0
        %2297 = vmatprep.mubr.bf16.mxu0 0
        %2298 = vmatmul.mubr.bf16.gmra.mxu0 %v2260
        %v2299 = vpop.f32.mrf.mxu0
        %v2300 = vadd.f32 0.0, %v2299
        %v2301 = vpop.f32.mrf.mxu0
        %v2302 = vpop.f32.mrf.mxu0
        %v2303 = vpop.f32.mrf.mxu0
        %2304 = vdwg.mxu0
        %v2305 = vadd.f32 %v2203, %v2300
        %v2306 = vpack.c.bf16 %v1416, %v1416
        %v2307 = vpack.c.bf16 %v1580, %v1580
        %v2308 = vpack.c.bf16 %v1744, %v1744
        %2309 = vmatprep.subr.bf16.mxu0 0
        %2310 = vmatpush1.bf16.xpose.msra.mxu0 0
        %2311 = vmatprep.subr.bf16.mxu0 0
        %2312 = vmatpush1.bf16.xpose.msra.mxu0 0
        %2313 = vmatprep.subr.bf16.mxu0 0
        %2314 = vmatpush1.bf16.xpose.msra.mxu0 0
        %2315 = vmatprep.subr.bf16.mxu0 0
        %2316 = vmatpush1.bf16.xpose.msra.mxu0 0
        %2317 = vmatprep.subr.bf16.mxu0 0
        %2318 = vmatpush1.bf16.xpose.msra.mxu0 0
        %2319 = vmatprep.subr.bf16.mxu0 0
        %2320 = vmatpush1.bf16.xpose.msra.mxu0 0
        %2321 = vmatprep.subr.bf16.mxu0 0
        %2322 = vmatpush1.bf16.xpose.msra.mxu0 0
        %2323 = vmatprep.subr.bf16.mxu0 0
        %2324 = vmatpush1.bf16.xpose.msra.mxu0 %v2307
        %2325 = vmatprep.subr.bf16.mxu0 0
        %2326 = vmatpush2.bf16.xpose.msra.mxu0 0
        %2327 = vmatprep.subr.bf16.mxu0 0
        %2328 = vmatpush2.bf16.xpose.msra.mxu0 0
        %2329 = vmatprep.subr.bf16.mxu0 0
        %2330 = vmatpush2.bf16.xpose.msra.mxu0 0
        %2331 = vmatprep.subr.bf16.mxu0 0
        %2332 = vmatpush2.bf16.xpose.msra.mxu0 0
        %2333 = vmatprep.subr.bf16.mxu0 0
        %2334 = vmatpush2.bf16.xpose.msra.mxu0 0
        %2335 = vmatprep.subr.bf16.mxu0 0
        %2336 = vmatpush2.bf16.xpose.msra.mxu0 0
        %2337 = vmatprep.subr.bf16.mxu0 0
        %2338 = vmatpush2.bf16.xpose.msra.mxu0 0
        %2339 = vmatprep.subr.bf16.mxu0 0
        %2340 = vmatpush2.bf16.xpose.msra.mxu0 0
        %2341 = vmatprep.mubr.bf16.mxu0 0
        %2342 = vmatmul.mubr.bf16.gmra.mxu0 %v2306
        %v2343 = vpop.f32.mrf.mxu0
        %v2344 = vadd.f32 %v1794, %v2343
        %v2345 = vpop.f32.mrf.mxu0
        %v2346 = vpop.f32.mrf.mxu0
        %v2347 = vpop.f32.mrf.mxu0
        %2348 = vdwg.mxu0
        %v2349 = vsel %vm1839, %v2344, -inf
        %2350 = vmax.xlane.f32.xlu0 %v2349
        %v2351 = vpop.xlane.xlu0 %2350
        %v2352 = vsub.f32 %v2344, %v2351
        %v2353 = vmul.f32 %v2352, 1.442695
        %v2354 = vpow.pop %v2353
        %v2355 = vsel %vm1839, %v2354, 0.0
        %2356 = vadd.xlane.f32.xlu0 %v2355
        %v2357 = vpop.xlane.xlu0 %2356
        %v2358 = vrcp.pop %v2357
        %v2359 = vmul.f32 %v2354, %v2358
        %v2360 = vpack.c.bf16 %v2359, %v2359
        %v2362 = vsel %vm1839, %v2360, 0
        %v2365 = vsel %vm1910, %v2308, 0
        %2367 = vmatprep.subr.bf16.mxu0 0
        %2368 = vmatpush1.bf16.msra.mxu0 0
        %2369 = vmatprep.subr.bf16.mxu0 0
        %2370 = vmatpush1.bf16.msra.mxu0 0
        %2371 = vmatprep.subr.bf16.mxu0 0
        %2372 = vmatpush1.bf16.msra.mxu0 0
        %2373 = vmatprep.subr.bf16.mxu0 0
        %2374 = vmatpush1.bf16.msra.mxu0 0
        %2375 = vmatprep.subr.bf16.mxu0 0
        %2376 = vmatpush1.bf16.msra.mxu0 0
        %2377 = vmatprep.subr.bf16.mxu0 0
        %2378 = vmatpush1.bf16.msra.mxu0 0
        %2379 = vmatprep.subr.bf16.mxu0 0
        %2380 = vmatpush1.bf16.msra.mxu0 0
        %2381 = vmatprep.subr.bf16.mxu0 0
        %2382 = vmatpush1.bf16.msra.mxu0 %v2365
        %2383 = vmatprep.subr.bf16.mxu0 0
        %2384 = vmatpush2.bf16.msra.mxu0 0
        %2385 = vmatprep.subr.bf16.mxu0 0
        %2386 = vmatpush2.bf16.msra.mxu0 0
        %2387 = vmatprep.subr.bf16.mxu0 0
        %2388 = vmatpush2.bf16.msra.mxu0 0
        %2389 = vmatprep.subr.bf16.mxu0 0
        %2390 = vmatpush2.bf16.msra.mxu0 0
        %2391 = vmatprep.subr.bf16.mxu0 0
        %2392 = vmatpush2.bf16.msra.mxu0 0
        %2393 = vmatprep.subr.bf16.mxu0 0
        %2394 = vmatpush2.bf16.msra.mxu0 0
        %2395 = vmatprep.subr.bf16.mxu0 0
        %2396 = vmatpush2.bf16.msra.mxu0 0
        %2397 = vmatprep.subr.bf16.mxu0 0
        %2398 = vmatpush2.bf16.msra.mxu0 0
        %2399 = vmatprep.mubr.bf16.mxu0 0
        %2400 = vmatmul.mubr.bf16.gmra.mxu0 %v2362
        %v2401 = vpop.f32.mrf.mxu0
        %v2402 = vadd.f32 0.0, %v2401
        %v2403 = vpop.f32.mrf.mxu0
        %v2404 = vpop.f32.mrf.mxu0
        %v2405 = vpop.f32.mrf.mxu0
        %2406 = vdwg.mxu0
        %v2407 = vadd.f32 %v2305, %v2402
        %v2408 = vpack.c.bf16 %v1455, %v1455
        %v2409 = vpack.c.bf16 %v1619, %v1619
        %v2410 = vpack.c.bf16 %v1783, %v1783
        %2411 = vmatprep.subr.bf16.mxu0 0
        %2412 = vmatpush1.bf16.xpose.msra.mxu0 0
        %2413 = vmatprep.subr.bf16.mxu0 0
        %2414 = vmatpush1.bf16.xpose.msra.mxu0 0
        %2415 = vmatprep.subr.bf16.mxu0 0
        %2416 = vmatpush1.bf16.xpose.msra.mxu0 0
        %2417 = vmatprep.subr.bf16.mxu0 0
        %2418 = vmatpush1.bf16.xpose.msra.mxu0 0
        %2419 = vmatprep.subr.bf16.mxu0 0
        %2420 = vmatpush1.bf16.xpose.msra.mxu0 0
        %2421 = vmatprep.subr.bf16.mxu0 0
        %2422 = vmatpush1.bf16.xpose.msra.mxu0 0
        %2423 = vmatprep.subr.bf16.mxu0 0
        %2424 = vmatpush1.bf16.xpose.msra.mxu0 0
        %2425 = vmatprep.subr.bf16.mxu0 0
        %2426 = vmatpush1.bf16.xpose.msra.mxu0 %v2409
        %2427 = vmatprep.subr.bf16.mxu0 0
        %2428 = vmatpush2.bf16.xpose.msra.mxu0 0
        %2429 = vmatprep.subr.bf16.mxu0 0
        %2430 = vmatpush2.bf16.xpose.msra.mxu0 0
        %2431 = vmatprep.subr.bf16.mxu0 0
        %2432 = vmatpush2.bf16.xpose.msra.mxu0 0
        %2433 = vmatprep.subr.bf16.mxu0 0
        %2434 = vmatpush2.bf16.xpose.msra.mxu0 0
        %2435 = vmatprep.subr.bf16.mxu0 0
        %2436 = vmatpush2.bf16.xpose.msra.mxu0 0
        %2437 = vmatprep.subr.bf16.mxu0 0
        %2438 = vmatpush2.bf16.xpose.msra.mxu0 0
        %2439 = vmatprep.subr.bf16.mxu0 0
        %2440 = vmatpush2.bf16.xpose.msra.mxu0 0
        %2441 = vmatprep.subr.bf16.mxu0 0
        %2442 = vmatpush2.bf16.xpose.msra.mxu0 0
        %2443 = vmatprep.mubr.bf16.mxu0 0
        %2444 = vmatmul.mubr.bf16.gmra.mxu0 %v2408
        %v2445 = vpop.f32.mrf.mxu0
        %v2446 = vadd.f32 %v1794, %v2445
        %v2447 = vpop.f32.mrf.mxu0
        %v2448 = vpop.f32.mrf.mxu0
        %v2449 = vpop.f32.mrf.mxu0
        %2450 = vdwg.mxu0
        %v2451 = vsel %vm1839, %v2446, -inf
        %2452 = vmax.xlane.f32.xlu0 %v2451
        %v2453 = vpop.xlane.xlu0 %2452
        %v2454 = vsub.f32 %v2446, %v2453
        %v2455 = vmul.f32 %v2454, 1.442695
        %v2456 = vpow.pop %v2455
        %v2457 = vsel %vm1839, %v2456, 0.0
        %2458 = vadd.xlane.f32.xlu0 %v2457
        %v2459 = vpop.xlane.xlu0 %2458
        %v2460 = vrcp.pop %v2459
        %v2461 = vmul.f32 %v2456, %v2460
        %v2462 = vpack.c.bf16 %v2461, %v2461
        %v2464 = vsel %vm1839, %v2462, 0
        %v2467 = vsel %vm1910, %v2410, 0
        %2469 = vmatprep.subr.bf16.mxu0 0
        %2470 = vmatpush1.bf16.msra.mxu0 0
        %2471 = vmatprep.subr.bf16.mxu0 0
        %2472 = vmatpush1.bf16.msra.mxu0 0
        %2473 = vmatprep.subr.bf16.mxu0 0
        %2474 = vmatpush1.bf16.msra.mxu0 0
        %2475 = vmatprep.subr.bf16.mxu0 0
        %2476 = vmatpush1.bf16.msra.mxu0 0
        %2477 = vmatprep.subr.bf16.mxu0 0
        %2478 = vmatpush1.bf16.msra.mxu0 0
        %2479 = vmatprep.subr.bf16.mxu0 0
        %2480 = vmatpush1.bf16.msra.mxu0 0
        %2481 = vmatprep.subr.bf16.mxu0 0
        %2482 = vmatpush1.bf16.msra.mxu0 0
        %2483 = vmatprep.subr.bf16.mxu0 0
        %2484 = vmatpush1.bf16.msra.mxu0 %v2467
        %2485 = vmatprep.subr.bf16.mxu0 0
        %2486 = vmatpush2.bf16.msra.mxu0 0
        %2487 = vmatprep.subr.bf16.mxu0 0
        %2488 = vmatpush2.bf16.msra.mxu0 0
        %2489 = vmatprep.subr.bf16.mxu0 0
        %2490 = vmatpush2.bf16.msra.mxu0 0
        %2491 = vmatprep.subr.bf16.mxu0 0
        %2492 = vmatpush2.bf16.msra.mxu0 0
        %2493 = vmatprep.subr.bf16.mxu0 0
        %2494 = vmatpush2.bf16.msra.mxu0 0
        %2495 = vmatprep.subr.bf16.mxu0 0
        %2496 = vmatpush2.bf16.msra.mxu0 0
        %2497 = vmatprep.subr.bf16.mxu0 0
        %2498 = vmatpush2.bf16.msra.mxu0 0
        %2499 = vmatprep.subr.bf16.mxu0 0
        %2500 = vmatpush2.bf16.msra.mxu0 0
        %2501 = vmatprep.mubr.bf16.mxu0 0
        %2502 = vmatmul.mubr.bf16.gmra.mxu0 %v2464
        %v2503 = vpop.f32.mrf.mxu0
        %v2504 = vadd.f32 0.0, %v2503
        %v2505 = vpop.f32.mrf.mxu0
        %v2506 = vpop.f32.mrf.mxu0
        %v2507 = vpop.f32.mrf.mxu0
        %2508 = vdwg.mxu0
        %v2509 = vadd.f32 %v2407, %v2504
        %v2510 = vpack.c.bf16 %v1457, %v1457
        %v2511 = vpack.c.bf16 %v1621, %v1621
        %v2512 = vpack.c.bf16 %v1785, %v1785
        %2513 = vmatprep.subr.bf16.mxu0 0
        %2514 = vmatpush1.bf16.xpose.msra.mxu0 0
        %2515 = vmatprep.subr.bf16.mxu0 0
        %2516 = vmatpush1.bf16.xpose.msra.mxu0 0
        %2517 = vmatprep.subr.bf16.mxu0 0
        %2518 = vmatpush1.bf16.xpose.msra.mxu0 0
        %2519 = vmatprep.subr.bf16.mxu0 0
        %2520 = vmatpush1.bf16.xpose.msra.mxu0 0
        %2521 = vmatprep.subr.bf16.mxu0 0
        %2522 = vmatpush1.bf16.xpose.msra.mxu0 0
        %2523 = vmatprep.subr.bf16.mxu0 0
        %2524 = vmatpush1.bf16.xpose.msra.mxu0 0
        %2525 = vmatprep.subr.bf16.mxu0 0
        %2526 = vmatpush1.bf16.xpose.msra.mxu0 0
        %2527 = vmatprep.subr.bf16.mxu0 0
        %2528 = vmatpush1.bf16.xpose.msra.mxu0 %v2511
        %2529 = vmatprep.subr.bf16.mxu0 0
        %2530 = vmatpush2.bf16.xpose.msra.mxu0 0
        %2531 = vmatprep.subr.bf16.mxu0 0
        %2532 = vmatpush2.bf16.xpose.msra.mxu0 0
        %2533 = vmatprep.subr.bf16.mxu0 0
        %2534 = vmatpush2.bf16.xpose.msra.mxu0 0
        %2535 = vmatprep.subr.bf16.mxu0 0
        %2536 = vmatpush2.bf16.xpose.msra.mxu0 0
        %2537 = vmatprep.subr.bf16.mxu0 0
        %2538 = vmatpush2.bf16.xpose.msra.mxu0 0
        %2539 = vmatprep.subr.bf16.mxu0 0
        %2540 = vmatpush2.bf16.xpose.msra.mxu0 0
        %2541 = vmatprep.subr.bf16.mxu0 0
        %2542 = vmatpush2.bf16.xpose.msra.mxu0 0
        %2543 = vmatprep.subr.bf16.mxu0 0
        %2544 = vmatpush2.bf16.xpose.msra.mxu0 0
        %2545 = vmatprep.mubr.bf16.mxu0 0
        %2546 = vmatmul.mubr.bf16.gmra.mxu0 %v2510
        %v2547 = vpop.f32.mrf.mxu0
        %v2548 = vadd.f32 %v1794, %v2547
        %v2549 = vpop.f32.mrf.mxu0
        %v2550 = vpop.f32.mrf.mxu0
        %v2551 = vpop.f32.mrf.mxu0
        %2552 = vdwg.mxu0
        %v2553 = vsel %vm1839, %v2548, -inf
        %2554 = vmax.xlane.f32.xlu0 %v2553
        %v2555 = vpop.xlane.xlu0 %2554
        %v2556 = vsub.f32 %v2548, %v2555
        %v2557 = vmul.f32 %v2556, 1.442695
        %v2558 = vpow.pop %v2557
        %v2559 = vsel %vm1839, %v2558, 0.0
        %2560 = vadd.xlane.f32.xlu0 %v2559
        %v2561 = vpop.xlane.xlu0 %2560
        %v2562 = vrcp.pop %v2561
        %v2563 = vmul.f32 %v2558, %v2562
        %v2564 = vpack.c.bf16 %v2563, %v2563
        %v2566 = vsel %vm1839, %v2564, 0
        %v2569 = vsel %vm1910, %v2512, 0
        %2571 = vmatprep.subr.bf16.mxu0 0
        %2572 = vmatpush1.bf16.msra.mxu0 0
        %2573 = vmatprep.subr.bf16.mxu0 0
        %2574 = vmatpush1.bf16.msra.mxu0 0
        %2575 = vmatprep.subr.bf16.mxu0 0
        %2576 = vmatpush1.bf16.msra.mxu0 0
        %2577 = vmatprep.subr.bf16.mxu0 0
        %2578 = vmatpush1.bf16.msra.mxu0 0
        %2579 = vmatprep.subr.bf16.mxu0 0
        %2580 = vmatpush1.bf16.msra.mxu0 0
        %2581 = vmatprep.subr.bf16.mxu0 0
        %2582 = vmatpush1.bf16.msra.mxu0 0
        %2583 = vmatprep.subr.bf16.mxu0 0
        %2584 = vmatpush1.bf16.msra.mxu0 0
        %2585 = vmatprep.subr.bf16.mxu0 0
        %2586 = vmatpush1.bf16.msra.mxu0 %v2569
        %2587 = vmatprep.subr.bf16.mxu0 0
        %2588 = vmatpush2.bf16.msra.mxu0 0
        %2589 = vmatprep.subr.bf16.mxu0 0
        %2590 = vmatpush2.bf16.msra.mxu0 0
        %2591 = vmatprep.subr.bf16.mxu0 0
        %2592 = vmatpush2.bf16.msra.mxu0 0
        %2593 = vmatprep.subr.bf16.mxu0 0
        %2594 = vmatpush2.bf16.msra.mxu0 0
        %2595 = vmatprep.subr.bf16.mxu0 0
        %2596 = vmatpush2.bf16.msra.mxu0 0
        %2597 = vmatprep.subr.bf16.mxu0 0
        %2598 = vmatpush2.bf16.msra.mxu0 0
        %2599 = vmatprep.subr.bf16.mxu0 0
        %2600 = vmatpush2.bf16.msra.mxu0 0
        %2601 = vmatprep.subr.bf16.mxu0 0
        %2602 = vmatpush2.bf16.msra.mxu0 0
        %2603 = vmatprep.mubr.bf16.mxu0 0
        %2604 = vmatmul.mubr.bf16.gmra.mxu0 %v2566
        %v2605 = vpop.f32.mrf.mxu0
        %v2606 = vadd.f32 0.0, %v2605
        %v2607 = vpop.f32.mrf.mxu0
        %v2608 = vpop.f32.mrf.mxu0
        %v2609 = vpop.f32.mrf.mxu0
        %2610 = vdwg.mxu0
        %v2611 = vadd.f32 %v2509, %v2606
        %v2612 = vld [vmem:[%s4] sm:$0x1]
        %v2614 = vlaneseq
        %v2615 = vshrl.u32 %v2614, 7
        %v2616 = vsub.s32 0, %v2615
        %v2617 = vrot.slane %v2612, %v2616
        %v2619 = vadd.f32 %v2611, %v2617
        %2620 = vst.msk [vmem:[%s300] sm:$0xff] %vm1293, %v2619
        %s2621 = sand.u32 %s149, 1
        %s2622 = scalar_lea.sflag [#allocation4], %s2621
        %s2623 = sand.u32 %s149, 1
        %s2624 = smul.addr %s2623, 8
        %s2625 = scalar_lea.vmem [#allocation10], %s2624
        // Predicated region
        $region57: #{tpu_custom_call.1} parent=39 // pred_check
          %p2626 = pneg %p159
        $region58: #{tpu_custom_call.1} parent=39 // pred_check_branch
          %2628 = sbr.rel (%p2626) target = $region60
        $region59: #{tpu_custom_call.1} parent=39 // pred_region
          %s2630 = ssub.s32 128, 128
          %2631 = vsyncadd %s2622, %s2630
          %s2632 = smul.addr %s26, 128
          %s2633 = scalar_lea.hbm %s5, %s2632
          %s2635 = sshll.u32 %s2625, 4
          %s2636 = int_to_ptr.vmem [resolvable:$true] %s2635
          %2638 = dma.vmem_to_hbm [thread:$0]  %s2636, 128, %s2633, %s2622
        $region60: #{tpu_custom_call.1} parent=39 // pred_fallthru
          _
      $region40: #{tpu_custom_call.1} parent=5 // pred_fallthru
        _
      %p2639 = scmp.le.s32.totalorder 2, %s21
      // Predicated region
      $region61: #{tpu_custom_call.1} parent=5 // pred_check
        %p2640 = pneg %p2639
      $region62: #{tpu_custom_call.1} parent=5 // pred_check_branch
        %2642 = sbr.rel (%p2640) target = $region64
      $region63: #{tpu_custom_call.1} parent=5 // pred_region
        %s2643 = ssub.s32 %s21, 2
        // Predicated region
        $region65: #{tpu_custom_call.1} parent=63 // pred_check
          %p2644 = pneg %p165
        $region66: #{tpu_custom_call.1} parent=63 // pred_check_branch
          %2646 = sbr.rel (%p2644) target = $region68
        $region67: #{tpu_custom_call.1} parent=63 // pred_region
          %s2647 = sand.u32 %s150, 1
          %s2648 = scalar_lea.sflag [#allocation4], %s2647
          %s2649 = sand.u32 %s150, 1
          %s2650 = smul.addr %s2649, 8
          %s2651 = scalar_lea.vmem [#allocation10], %s2650
          %2652 = dma.done %s2648, 128
        $region68: #{tpu_custom_call.1} parent=63 // pred_fallthru
          _
      $region64: #{tpu_custom_call.1} parent=5 // pred_fallthru
        _
    $region6: #{tpu_custom_call.1} parent=1 // loop_footer
      %s25 = sadd.s32 1, %s21
    $region7: #{tpu_custom_call.1} parent=1 // loop_footer_branch
      %20 = sbr.rel target = $region3
    $region8: #{tpu_custom_call.1} parent=1 // loop_exit
      _
    %2653 = vsyncpa [#allocation3], 1
    %s2654 = scalar_lea.sflag [#allocation3], 1
    %2655 = vsyncpa %s2654, 1
    %2656 = vsyncpa [#allocation6], 1
    %s2657 = scalar_lea.sflag [#allocation6], 1
    %2658 = vsyncpa %s2657, 1
    %2659 = vsyncpa [#allocation9], 1
    %2660 = vsyncpa [#allocation4], 1
    %s2661 = scalar_lea.sflag [#allocation4], 1
    %2662 = vsyncpa %s2661, 1

// kernel: tpu_custom_call.1
$region0: #{tpu_custom_call.1}
  #allocation0 [shape = 'u32[]', space=smem, size = 0x4, offset = 0x4, fixed_abs, tag = 'smem constant byte address 0x4 - core index']
  #allocation1 [shape = 'u32[144,128]{1,0:T(1,128)}', space=vmem, size = 0x12000, scoped, tag = 'internal scratch']
  %s0 = inlined_call_operand.hbm [shape: bf16[2,8,96], index: 0, kind: input, shape index: {}]
  %s1 = inlined_call_operand.hbm [shape: f32[2,1,8], index: 1, kind: input, shape index: {}]
  %s2 = inlined_call_operand.hbm [shape: bf16[96,3072], index: 2, kind: input, shape index: {}]
  %s3 = inlined_call_operand.hbm [shape: f32[1,3072], index: 3, kind: input, shape index: {}]
  %s4 = inlined_call_operand.vmem [shape: f32[1,96], index: 4, kind: input, shape index: {}]
  %s5 = inlined_call_operand.hbm [shape: f32[2,8,96], index: 5, kind: output, shape index: {}]
  %s6 = sld [smem:[#allocation0]]
  $region69: #{tpu_custom_call.1} parent=0
    _
  %s8 = ssub.s32 1, %s6
  %s9 = scalar_select 0, %s8, %s6
  $region1: #{tpu_custom_call.1} parent=0
    #allocation2 [shape = 'u8[4096]{0}', space=vmem, size = 0x1000, scoped, tag = 'input window, operand 0']
    #allocation3 [shape = 's32[2]{0}', space=sflag, size = 0x8, scoped, tag = 'scoped memory for tpu_custom_call.1']
    #allocation4 [shape = 's32[2]{0}', space=sflag, size = 0x8, scoped, tag = 'scoped memory for tpu_custom_call.1']
    #allocation5 [shape = 'u8[1024]{0}', space=vmem, size = 0x400, scoped, tag = 'input window, operand 1']
    #allocation6 [shape = 's32[2]{0}', space=sflag, size = 0x8, scoped, tag = 'scoped memory for tpu_custom_call.1']
    #allocation7 [shape = 'u8[589824]{0}', space=vmem, size = 0x90000, scoped, tag = 'input window, operand 2, single buffered']
    #allocation8 [shape = 'u8[12288]{0}', space=vmem, size = 0x3000, scoped, tag = 'input window, operand 3, single buffered']
    #allocation9 [shape = 's32[1]{0}', space=sflag, size = 0x4, scoped, tag = 'scoped memory for tpu_custom_call.1']
    #allocation10 [shape = 'u8[8192]{0}', space=vmem, size = 0x2000, scoped, tag = 'output window, operand 0']
    %10 = vsyncpa [#allocation3], 0
    %s11 = scalar_lea.sflag [#allocation3], 1
    %12 = vsyncpa %s11, 0
    %13 = vsyncpa [#allocation6], 0
    %s14 = scalar_lea.sflag [#allocation6], 1
    %15 = vsyncpa %s14, 0
    %16 = vsyncpa [#allocation9], 0
    %17 = vsyncpa [#allocation4], 0
    %s18 = scalar_lea.sflag [#allocation4], 1
    %19 = vsyncpa %s18, 0
    loop: start=0, step=1, limit=4
    $region2: #{tpu_custom_call.1} parent=1 // loop_pre_header
      _
    $region3: #{tpu_custom_call.1} parent=1 // loop_header
      %s21 = sphi 0, %s25
      %p22 = scmp.ge.s32.totalorder %s21, 4
      %s31 = sphi 0, %s33
      %s34 = sphi 0, %s31
      %s35 = sphi 0, %s34
      %s51 = sphi 0, %s35
      %s57 = sphi 0, %s59
      %s60 = sphi 0, %s57
      %s61 = sphi 0, %s60
      %s77 = sphi 0, %s61
      %s81 = sphi 0, %s81
      %s83 = sphi 0, %s81
      %s84 = sphi 0, %s83
      %s98 = sphi 0, %s84
      %s102 = sphi 0, %s102
      %s104 = sphi 0, %s102
      %s105 = sphi 0, %s104
      %s119 = sphi 0, %s105
      %s123 = sphi 0, %s123
      %s125 = sphi 0, %s123
      %s126 = sphi 0, %s125
      %s140 = sphi 0, %s126
      %s146 = sphi 0, %s148
      %s149 = sphi 0, %s146
      %s150 = sphi 0, %s149
      %s166 = sphi 0, %s150
    $region4: #{tpu_custom_call.1} parent=1 // loop_header_branch
      %24 = sbr.rel (%p22) target = $region8
    $region5: #{tpu_custom_call.1} parent=1 // loop_body
      %s26 = ssub.s32 %s21, 1
      %s27 = ssub.s32 %s21, 2
      %s28 = sadd.s32 %s21, 1
      %s29 = ssub.s32 %s21, %s28
      %p30 = scmp.eq.s32.totalorder %s29, 0
      %s32 = sadd.s32 %s31, 1
      %s33 = scalar_select %p30, %s31, %s32
      %p36 = pneg %p30
      %p37 = scmp.eq.s32.totalorder %s21, 1
      %p38 = por %p36, %p37
      %p39 = scmp.ne.s32.totalorder %s31, %s34
      %p40 = scmp.eq.s32.totalorder %s21, 0
      %p41 = por %p39, %p40
      %p42 = scmp.ne.s32.totalorder %s31, %s34
      %p43 = scmp.eq.s32.totalorder %s26, 1
      %p44 = por %p42, %p43
      %p45 = scmp.ne.s32.totalorder %s34, %s35
      %p46 = scmp.eq.s32.totalorder %s26, 0
      %p47 = por %p45, %p46
      %p48 = scmp.ne.s32.totalorder %s34, %s35
      %p49 = scmp.eq.s32.totalorder %s27, 1
      %p50 = por %p48, %p49
      %p52 = scmp.ne.s32.totalorder %s35, %s51
      %p53 = scmp.eq.s32.totalorder %s27, 0
      %p54 = por %p52, %p53
      %s55 = ssub.s32 %s21, %s28
      %p56 = scmp.eq.s32.totalorder %s55, 0
      %s58 = sadd.s32 %s57, 1
      %s59 = scalar_select %p56, %s57, %s58
      %p62 = pneg %p56
      %p63 = scmp.eq.s32.totalorder %s21, 1
      %p64 = por %p62, %p63
      %p65 = scmp.ne.s32.totalorder %s57, %s60
      %p66 = scmp.eq.s32.totalorder %s21, 0
      %p67 = por %p65, %p66
      %p68 = scmp.ne.s32.totalorder %s57, %s60
      %p69 = scmp.eq.s32.totalorder %s26, 1
      %p70 = por %p68, %p69
      %p71 = scmp.ne.s32.totalorder %s60, %s61
      %p72 = scmp.eq.s32.totalorder %s26, 0
      %p73 = por %p71, %p72
      %p74 = scmp.ne.s32.totalorder %s60, %s61
      %p75 = scmp.eq.s32.totalorder %s27, 1
      %p76 = por %p74, %p75
      %p78 = scmp.ne.s32.totalorder %s61, %s77
      %p79 = scmp.eq.s32.totalorder %s27, 0
      %p80 = por %p78, %p79
      %s82 = sadd.s32 %s81, 1
      %p85 = scmp.eq.s32.totalorder %s21, 1
      %p86 = scmp.ne.s32.totalorder %s81, %s83
      %p87 = scmp.eq.s32.totalorder %s21, 0
      %p88 = por %p86, %p87
      %p89 = scmp.ne.s32.totalorder %s81, %s83
      %p90 = scmp.eq.s32.totalorder %s26, 1
      %p91 = por %p89, %p90
      %p92 = scmp.ne.s32.totalorder %s83, %s84
      %p93 = scmp.eq.s32.totalorder %s26, 0
      %p94 = por %p92, %p93
      %p95 = scmp.ne.s32.totalorder %s83, %s84
      %p96 = scmp.eq.s32.totalorder %s27, 1
      %p97 = por %p95, %p96
      %p99 = scmp.ne.s32.totalorder %s84, %s98
      %p100 = scmp.eq.s32.totalorder %s27, 0
      %p101 = por %p99, %p100
      %s103 = sadd.s32 %s102, 1
      %p106 = scmp.eq.s32.totalorder %s21, 1
      %p107 = scmp.ne.s32.totalorder %s102, %s104
      %p108 = scmp.eq.s32.totalorder %s21, 0
      %p109 = por %p107, %p108
      %p110 = scmp.ne.s32.totalorder %s102, %s104
      %p111 = scmp.eq.s32.totalorder %s26, 1
      %p112 = por %p110, %p111
      %p113 = scmp.ne.s32.totalorder %s104, %s105
      %p114 = scmp.eq.s32.totalorder %s26, 0
      %p115 = por %p113, %p114
      %p116 = scmp.ne.s32.totalorder %s104, %s105
      %p117 = scmp.eq.s32.totalorder %s27, 1
      %p118 = por %p116, %p117
      %p120 = scmp.ne.s32.totalorder %s105, %s119
      %p121 = scmp.eq.s32.totalorder %s27, 0
      %p122 = por %p120, %p121
      %s124 = sadd.s32 %s123, 1
      %p127 = scmp.eq.s32.totalorder %s21, 1
      %p128 = scmp.ne.s32.totalorder %s123, %s125
      %p129 = scmp.eq.s32.totalorder %s21, 0
      %p130 = por %p128, %p129
      %p131 = scmp.ne.s32.totalorder %s123, %s125
      %p132 = scmp.eq.s32.totalorder %s26, 1
      %p133 = por %p131, %p132
      %p134 = scmp.ne.s32.totalorder %s125, %s126
      %p135 = scmp.eq.s32.totalorder %s26, 0
      %p136 = por %p134, %p135
      %p137 = scmp.ne.s32.totalorder %s125, %s126
      %p138 = scmp.eq.s32.totalorder %s27, 1
      %p139 = por %p137, %p138
      %p141 = scmp.ne.s32.totalorder %s126, %s140
      %p142 = scmp.eq.s32.totalorder %s27, 0
      %p143 = por %p141, %p142
      %s144 = ssub.s32 %s21, %s28
      %p145 = scmp.eq.s32.totalorder %s144, 0
      %s147 = sadd.s32 %s146, 1
      %s148 = scalar_select %p145, %s146, %s147
      %p151 = pneg %p145
      %p152 = scmp.eq.s32.totalorder %s21, 1
      %p153 = por %p151, %p152
      %p154 = scmp.ne.s32.totalorder %s146, %s149
      %p155 = scmp.eq.s32.totalorder %s21, 0
      %p156 = por %p154, %p155
      %p157 = scmp.ne.s32.totalorder %s146, %s149
      %p158 = scmp.eq.s32.totalorder %s26, 1
      %p159 = por %p157, %p158
      %p160 = scmp.ne.s32.totalorder %s149, %s150
      %p161 = scmp.eq.s32.totalorder %s26, 0
      %p162 = por %p160, %p161
      %p163 = scmp.ne.s32.totalorder %s149, %s150
      %p164 = scmp.eq.s32.totalorder %s27, 1
      %p165 = por %p163, %p164
      %p167 = scmp.ne.s32.totalorder %s150, %s166
      %p168 = scmp.eq.s32.totalorder %s27, 0
      %p169 = por %p167, %p168
      %p170 = scmp.le.s32.totalorder 1, %s21
      %p171 = scmp.lt.s32.totalorder %s21, 3
      %p172 = pnand %p170, %p171
      %p173 = pneg %p172
      // Predicated region
      $region9: #{tpu_custom_call.1} parent=5 // pred_check
        _
      $region10: #{tpu_custom_call.1} parent=5 // pred_check_branch
        %175 = sbr.rel (%p172) target = $region12
      $region11: #{tpu_custom_call.1} parent=5 // pred_region
        %s176 = ssub.s32 %s21, 1
        // Predicated region
        $region13: #{tpu_custom_call.1} parent=11 // pred_check
          %p177 = pneg %p94
        $region14: #{tpu_custom_call.1} parent=11 // pred_check_branch
          %179 = sbr.rel (%p177) target = $region16
        $region15: #{tpu_custom_call.1} parent=11 // pred_region
          %s181 = ssub.s32 18432, 18432
          %182 = vsyncadd [#allocation6], %s181
          %s183 = sshll.u32 [#allocation7], 4
          %s184 = int_to_ptr.vmem [resolvable:$true] %s183
          %189 = dma.hbm_to_vmem [thread:$0]  %s2, 18432, %s184, [#allocation6], 1536, 1536, 96
        $region16: #{tpu_custom_call.1} parent=11 // pred_fallthru
          _
        // Predicated region
        $region17: #{tpu_custom_call.1} parent=11 // pred_check
          %p190 = pneg %p115
        $region18: #{tpu_custom_call.1} parent=11 // pred_check_branch
          %192 = sbr.rel (%p190) target = $region20
        $region19: #{tpu_custom_call.1} parent=11 // pred_region
          %s194 = ssub.s32 384, 384
          %195 = vsyncadd [#allocation9], %s194
          %s197 = sshll.u32 [#allocation8], 4
          %s198 = int_to_ptr.vmem [resolvable:$true] %s197
          %200 = dma.hbm_to_vmem [thread:$0]  %s3, 384, %s198, [#allocation9]
        $region20: #{tpu_custom_call.1} parent=11 // pred_fallthru
          _
        // Predicated region
        $region21: #{tpu_custom_call.1} parent=11 // pred_check
          %p201 = pneg %p136
        $region22: #{tpu_custom_call.1} parent=11 // pred_check_branch
          %203 = sbr.rel (%p201) target = $region24
        $region23: #{tpu_custom_call.1} parent=11 // pred_region
          _
        $region24: #{tpu_custom_call.1} parent=11 // pred_fallthru
          _
      $region12: #{tpu_custom_call.1} parent=5 // pred_fallthru
        _
      %p204 = scmp.lt.s32.totalorder %s21, 2
      // Predicated region
      $region25: #{tpu_custom_call.1} parent=5 // pred_check
        %p205 = pneg %p204
      $region26: #{tpu_custom_call.1} parent=5 // pred_check_branch
        %207 = sbr.rel (%p205) target = $region28
      $region27: #{tpu_custom_call.1} parent=5 // pred_region
        // Predicated region
        $region29: #{tpu_custom_call.1} parent=27 // pred_check
          %p208 = pneg %p41
        $region30: #{tpu_custom_call.1} parent=27 // pred_check_branch
          %210 = sbr.rel (%p208) target = $region32
        $region31: #{tpu_custom_call.1} parent=27 // pred_region
          %s211 = sand.u32 %s31, 1
          %s212 = scalar_lea.sflag [#allocation3], %s211
          %s213 = sand.u32 %s31, 1
          %s214 = smul.addr %s213, 4
          %s215 = scalar_lea.vmem [#allocation2], %s214
          %s217 = ssub.s32 64, 64
          %218 = vsyncadd %s212, %s217
          %s219 = smul.addr %s21, 64
          %s220 = scalar_lea.hbm %s0, %s219
          %s222 = sshll.u32 %s215, 4
          %s223 = int_to_ptr.vmem [resolvable:$true] %s222
          %225 = dma.hbm_to_vmem [thread:$0]  %s220, 64, %s223, %s212
        $region32: #{tpu_custom_call.1} parent=27 // pred_fallthru
          _
        // Predicated region
        $region33: #{tpu_custom_call.1} parent=27 // pred_check
          %p226 = pneg %p67
        $region34: #{tpu_custom_call.1} parent=27 // pred_check_branch
          %228 = sbr.rel (%p226) target = $region36
        $region35: #{tpu_custom_call.1} parent=27 // pred_region
          %s229 = sand.u32 %s21, 1
          %s230 = scalar_lea.sflag [#allocation6], %s229
          %s231 = sand.u32 %s57, 1
          %s232 = scalar_lea.vmem [#allocation5], %s231
          %s234 = ssub.s32 16, 16
          %235 = vsyncadd %s230, %s234
          %s236 = smul.addr %s21, 16
          %s237 = scalar_lea.hbm %s1, %s236
          %s239 = sshll.u32 %s232, 4
          %s240 = int_to_ptr.vmem [resolvable:$true] %s239
          %242 = dma.hbm_to_vmem [thread:$0]  %s237, 16, %s240, %s230
        $region36: #{tpu_custom_call.1} parent=27 // pred_fallthru
          _
      $region28: #{tpu_custom_call.1} parent=5 // pred_fallthru
        _
      %p243 = scmp.le.s32.totalorder 1, %s21
      %p244 = scmp.lt.s32.totalorder %s21, 3
      %p245 = pnand %p243, %p244
      %p246 = pneg %p245
      // Predicated region
      $region37: #{tpu_custom_call.1} parent=5 // pred_check
        _
      $region38: #{tpu_custom_call.1} parent=5 // pred_check_branch
        %248 = sbr.rel (%p245) target = $region40
      $region39: #{tpu_custom_call.1} parent=5 // pred_region
        %s249 = ssub.s32 %s21, 1
        %s250 = sand.u32 %s34, 1
        %s251 = scalar_lea.sflag [#allocation3], %s250
        %s252 = sand.u32 %s34, 1
        %s253 = smul.addr %s252, 4
        %s254 = scalar_lea.vmem [#allocation2], %s253
        // Predicated region
        $region41: #{tpu_custom_call.1} parent=39 // pred_check
          %p255 = pneg %p47
        $region42: #{tpu_custom_call.1} parent=39 // pred_check_branch
          %257 = sbr.rel (%p255) target = $region44
        $region43: #{tpu_custom_call.1} parent=39 // pred_region
          %258 = dma.done %s251, 64
        $region44: #{tpu_custom_call.1} parent=39 // pred_fallthru
          _
        %s259 = sand.u32 %s26, 1
        %s260 = scalar_lea.sflag [#allocation6], %s259
        %s261 = sand.u32 %s60, 1
        %s262 = scalar_lea.vmem [#allocation5], %s261
        // Predicated region
        $region45: #{tpu_custom_call.1} parent=39 // pred_check
          %p263 = pneg %p73
        $region46: #{tpu_custom_call.1} parent=39 // pred_check_branch
          %265 = sbr.rel (%p263) target = $region48
        $region47: #{tpu_custom_call.1} parent=39 // pred_region
          %266 = dma.done %s260, 16
        $region48: #{tpu_custom_call.1} parent=39 // pred_fallthru
          _
        // Predicated region
        $region49: #{tpu_custom_call.1} parent=39 // pred_check
          %p267 = pneg %p94
        $region50: #{tpu_custom_call.1} parent=39 // pred_check_branch
          %269 = sbr.rel (%p267) target = $region52
        $region51: #{tpu_custom_call.1} parent=39 // pred_region
          %270 = dma.done [#allocation6], 18432
        $region52: #{tpu_custom_call.1} parent=39 // pred_fallthru
          _
        // Predicated region
        $region53: #{tpu_custom_call.1} parent=39 // pred_check
          %p271 = pneg %p115
        $region54: #{tpu_custom_call.1} parent=39 // pred_check_branch
          %273 = sbr.rel (%p271) target = $region56
        $region55: #{tpu_custom_call.1} parent=39 // pred_region
          %274 = dma.done [#allocation9], 384
        $region56: #{tpu_custom_call.1} parent=39 // pred_fallthru
          _
        %s275 = sand.u32 %s34, 1
        %s276 = scalar_lea.sflag [#allocation3], %s275
        %s277 = sand.u32 %s34, 1
        %s278 = smul.addr %s277, 4
        %s279 = scalar_lea.vmem [#allocation2], %s278
        %p280 = pneg %p47
        %p281 = pneg %p44
        %s282 = sand.u32 %s26, 1
        %s283 = scalar_lea.sflag [#allocation6], %s282
        %s284 = sand.u32 %s60, 1
        %s285 = scalar_lea.vmem [#allocation5], %s284
        %p286 = pneg %p73
        %p287 = pneg %p70
        %p288 = pneg %p94
        %p289 = pneg %p91
        %p290 = pneg %p115
        %p291 = pneg %p112
        %p292 = pneg %p136
        %p293 = pneg %p133
        %p294 = pneg %p162
        %p295 = pneg %p159
        %s296 = sand.u32 %s149, 1
        %s297 = scalar_lea.sflag [#allocation4], %s296
        %s298 = sand.u32 %s149, 1
        %s299 = smul.addr %s298, 8
        %s300 = scalar_lea.vmem [#allocation10], %s299
        %v302 = vld [vmem:[%s254] sm:$0xf]
        %v303 = vld [vmem:[#allocation7] sm:$0xff]
        %v304 = vld [vmem:[#allocation7 + $0x8] sm:$0xff]
        %v305 = vld [vmem:[#allocation7 + $0x10] sm:$0xff]
        %v306 = vld [vmem:[#allocation7 + $0x18] sm:$0xff]
        %v307 = vld [vmem:[#allocation7 + $0x20] sm:$0xff]
        %v308 = vld [vmem:[#allocation7 + $0x28] sm:$0xff]
        %v309 = vld [vmem:[#allocation7 + $0x30] sm:$0xff]
        %v310 = vld [vmem:[#allocation7 + $0x38] sm:$0xff]
        %v311 = vld [vmem:[#allocation7 + $0x40] sm:$0xff]
        %v312 = vld [vmem:[#allocation7 + $0x48] sm:$0xff]
        %v313 = vld [vmem:[#allocation7 + $0x50] sm:$0xff]
        %v314 = vld [vmem:[#allocation7 + $0x58] sm:$0xff]
        %v315 = vld [vmem:[#allocation7 + $0x60] sm:$0xff]
        %v316 = vld [vmem:[#allocation7 + $0x68] sm:$0xff]
        %v317 = vld [vmem:[#allocation7 + $0x70] sm:$0xff]
        %v318 = vld [vmem:[#allocation7 + $0x78] sm:$0xff]
        %v319 = vld [vmem:[#allocation7 + $0x80] sm:$0xff]
        %v320 = vld [vmem:[#allocation7 + $0x88] sm:$0xff]
        %v321 = vld [vmem:[#allocation7 + $0x90] sm:$0xff]
        %v322 = vld [vmem:[#allocation7 + $0x98] sm:$0xff]
        %v323 = vld [vmem:[#allocation7 + $0xa0] sm:$0xff]
        %v324 = vld [vmem:[#allocation7 + $0xa8] sm:$0xff]
        %v325 = vld [vmem:[#allocation7 + $0xb0] sm:$0xff]
        %v326 = vld [vmem:[#allocation7 + $0xb8] sm:$0xff]
        %v327 = vld [vmem:[#allocation7 + $0xc0] sm:$0xff]
        %v328 = vld [vmem:[#allocation7 + $0xc8] sm:$0xff]
        %v329 = vld [vmem:[#allocation7 + $0xd0] sm:$0xff]
        %v330 = vld [vmem:[#allocation7 + $0xd8] sm:$0xff]
        %v331 = vld [vmem:[#allocation7 + $0xe0] sm:$0xff]
        %v332 = vld [vmem:[#allocation7 + $0xe8] sm:$0xff]
        %v333 = vld [vmem:[#allocation7 + $0xf0] sm:$0xff]
        %v334 = vld [vmem:[#allocation7 + $0xf8] sm:$0xff]
        %v335 = vld [vmem:[#allocation7 + $0x100] sm:$0xff]
        %v336 = vld [vmem:[#allocation7 + $0x108] sm:$0xff]
        %v337 = vld [vmem:[#allocation7 + $0x110] sm:$0xff]
        %v338 = vld [vmem:[#allocation7 + $0x118] sm:$0xff]
        %v339 = vld [vmem:[#allocation7 + $0x120] sm:$0xff]
        %v340 = vld [vmem:[#allocation7 + $0x128] sm:$0xff]
        %v341 = vld [vmem:[#allocation7 + $0x130] sm:$0xff]
        %v342 = vld [vmem:[#allocation7 + $0x138] sm:$0xff]
        %v343 = vld [vmem:[#allocation7 + $0x140] sm:$0xff]
        %v344 = vld [vmem:[#allocation7 + $0x148] sm:$0xff]
        %v345 = vld [vmem:[#allocation7 + $0x150] sm:$0xff]
        %v346 = vld [vmem:[#allocation7 + $0x158] sm:$0xff]
        %v347 = vld [vmem:[#allocation7 + $0x160] sm:$0xff]
        %v348 = vld [vmem:[#allocation7 + $0x168] sm:$0xff]
        %v349 = vld [vmem:[#allocation7 + $0x170] sm:$0xff]
        %v350 = vld [vmem:[#allocation7 + $0x178] sm:$0xff]
        %v351 = vld [vmem:[#allocation7 + $0x180] sm:$0xff]
        %v352 = vld [vmem:[#allocation7 + $0x188] sm:$0xff]
        %v353 = vld [vmem:[#allocation7 + $0x190] sm:$0xff]
        %v354 = vld [vmem:[#allocation7 + $0x198] sm:$0xff]
        %v355 = vld [vmem:[#allocation7 + $0x1a0] sm:$0xff]
        %v356 = vld [vmem:[#allocation7 + $0x1a8] sm:$0xff]
        %v357 = vld [vmem:[#allocation7 + $0x1b0] sm:$0xff]
        %v358 = vld [vmem:[#allocation7 + $0x1b8] sm:$0xff]
        %v359 = vld [vmem:[#allocation7 + $0x1c0] sm:$0xff]
        %v360 = vld [vmem:[#allocation7 + $0x1c8] sm:$0xff]
        %v361 = vld [vmem:[#allocation7 + $0x1d0] sm:$0xff]
        %v362 = vld [vmem:[#allocation7 + $0x1d8] sm:$0xff]
        %v363 = vld [vmem:[#allocation7 + $0x1e0] sm:$0xff]
        %v364 = vld [vmem:[#allocation7 + $0x1e8] sm:$0xff]
        %v365 = vld [vmem:[#allocation7 + $0x1f0] sm:$0xff]
        %v366 = vld [vmem:[#allocation7 + $0x1f8] sm:$0xff]
        %v367 = vld [vmem:[#allocation7 + $0x200] sm:$0xff]
        %v368 = vld [vmem:[#allocation7 + $0x208] sm:$0xff]
        %v369 = vld [vmem:[#allocation7 + $0x210] sm:$0xff]
        %v370 = vld [vmem:[#allocation7 + $0x218] sm:$0xff]
        %v371 = vld [vmem:[#allocation7 + $0x220] sm:$0xff]
        %v372 = vld [vmem:[#allocation7 + $0x228] sm:$0xff]
        %v373 = vld [vmem:[#allocation7 + $0x230] sm:$0xff]
        %v374 = vld [vmem:[#allocation7 + $0x238] sm:$0xff]
        %v375 = vld [vmem:[#allocation7 + $0x240] sm:$0xff]
        %v376 = vld [vmem:[#allocation7 + $0x248] sm:$0xff]
        %v377 = vld [vmem:[#allocation7 + $0x250] sm:$0xff]
        %v378 = vld [vmem:[#allocation7 + $0x258] sm:$0xff]
        %v379 = vld [vmem:[#allocation7 + $0x260] sm:$0xff]
        %v380 = vld [vmem:[#allocation7 + $0x268] sm:$0xff]
        %v381 = vld [vmem:[#allocation7 + $0x270] sm:$0xff]
        %v382 = vld [vmem:[#allocation7 + $0x278] sm:$0xff]
        %v383 = vld [vmem:[#allocation7 + $0x280] sm:$0xff]
        %v384 = vld [vmem:[#allocation7 + $0x288] sm:$0xff]
        %v385 = vld [vmem:[#allocation7 + $0x290] sm:$0xff]
        %v386 = vld [vmem:[#allocation7 + $0x298] sm:$0xff]
        %v387 = vld [vmem:[#allocation7 + $0x2a0] sm:$0xff]
        %v388 = vld [vmem:[#allocation7 + $0x2a8] sm:$0xff]
        %v389 = vld [vmem:[#allocation7 + $0x2b0] sm:$0xff]
        %v390 = vld [vmem:[#allocation7 + $0x2b8] sm:$0xff]
        %v391 = vld [vmem:[#allocation7 + $0x2c0] sm:$0xff]
        %v392 = vld [vmem:[#allocation7 + $0x2c8] sm:$0xff]
        %v393 = vld [vmem:[#allocation7 + $0x2d0] sm:$0xff]
        %v394 = vld [vmem:[#allocation7 + $0x2d8] sm:$0xff]
        %v395 = vld [vmem:[#allocation7 + $0x2e0] sm:$0xff]
        %v396 = vld [vmem:[#allocation7 + $0x2e8] sm:$0xff]
        %v397 = vld [vmem:[#allocation7 + $0x2f0] sm:$0xff]
        %v398 = vld [vmem:[#allocation7 + $0x2f8] sm:$0xff]
        %v399 = vld [vmem:[#allocation7 + $0x300] sm:$0xff]
        %v400 = vld [vmem:[#allocation7 + $0x308] sm:$0xff]
        %v401 = vld [vmem:[#allocation7 + $0x310] sm:$0xff]
        %v402 = vld [vmem:[#allocation7 + $0x318] sm:$0xff]
        %v403 = vld [vmem:[#allocation7 + $0x320] sm:$0xff]
        %v404 = vld [vmem:[#allocation7 + $0x328] sm:$0xff]
        %v405 = vld [vmem:[#allocation7 + $0x330] sm:$0xff]
        %v406 = vld [vmem:[#allocation7 + $0x338] sm:$0xff]
        %v407 = vld [vmem:[#allocation7 + $0x340] sm:$0xff]
        %v408 = vld [vmem:[#allocation7 + $0x348] sm:$0xff]
        %v409 = vld [vmem:[#allocation7 + $0x350] sm:$0xff]
        %v410 = vld [vmem:[#allocation7 + $0x358] sm:$0xff]
        %v411 = vld [vmem:[#allocation7 + $0x360] sm:$0xff]
        %v412 = vld [vmem:[#allocation7 + $0x368] sm:$0xff]
        %v413 = vld [vmem:[#allocation7 + $0x370] sm:$0xff]
        %v414 = vld [vmem:[#allocation7 + $0x378] sm:$0xff]
        %v415 = vld [vmem:[#allocation7 + $0x380] sm:$0xff]
        %v416 = vld [vmem:[#allocation7 + $0x388] sm:$0xff]
        %v417 = vld [vmem:[#allocation7 + $0x390] sm:$0xff]
        %v418 = vld [vmem:[#allocation7 + $0x398] sm:$0xff]
        %v419 = vld [vmem:[#allocation7 + $0x3a0] sm:$0xff]
        %v420 = vld [vmem:[#allocation7 + $0x3a8] sm:$0xff]
        %v421 = vld [vmem:[#allocation7 + $0x3b0] sm:$0xff]
        %v422 = vld [vmem:[#allocation7 + $0x3b8] sm:$0xff]
        %v423 = vld [vmem:[#allocation7 + $0x3c0] sm:$0xff]
        %v424 = vld [vmem:[#allocation7 + $0x3c8] sm:$0xff]
        %v425 = vld [vmem:[#allocation7 + $0x3d0] sm:$0xff]
        %v426 = vld [vmem:[#allocation7 + $0x3d8] sm:$0xff]
        %v427 = vld [vmem:[#allocation7 + $0x3e0] sm:$0xff]
        %v428 = vld [vmem:[#allocation7 + $0x3e8] sm:$0xff]
        %v429 = vld [vmem:[#allocation7 + $0x3f0] sm:$0xff]
        %v430 = vld [vmem:[#allocation7 + $0x3f8] sm:$0xff]
        %v431 = vld [vmem:[#allocation7 + $0x400] sm:$0xff]
        %v432 = vld [vmem:[#allocation7 + $0x408] sm:$0xff]
        %v433 = vld [vmem:[#allocation7 + $0x410] sm:$0xff]
        %v434 = vld [vmem:[#allocation7 + $0x418] sm:$0xff]
        %v435 = vld [vmem:[#allocation7 + $0x420] sm:$0xff]
        %v436 = vld [vmem:[#allocation7 + $0x428] sm:$0xff]
        %v437 = vld [vmem:[#allocation7 + $0x430] sm:$0xff]
        %v438 = vld [vmem:[#allocation7 + $0x438] sm:$0xff]
        %v439 = vld [vmem:[#allocation7 + $0x440] sm:$0xff]
        %v440 = vld [vmem:[#allocation7 + $0x448] sm:$0xff]
        %v441 = vld [vmem:[#allocation7 + $0x450] sm:$0xff]
        %v442 = vld [vmem:[#allocation7 + $0x458] sm:$0xff]
        %v443 = vld [vmem:[#allocation7 + $0x460] sm:$0xff]
        %v444 = vld [vmem:[#allocation7 + $0x468] sm:$0xff]
        %v445 = vld [vmem:[#allocation7 + $0x470] sm:$0xff]
        %v446 = vld [vmem:[#allocation7 + $0x478] sm:$0xff]
        %v447 = vld [vmem:[#allocation8] sm:$0xff]
        %v448 = vld [vmem:[#allocation8 + $0x8] sm:$0xff]
        %v449 = vld [vmem:[#allocation8 + $0x10] sm:$0xff]
        %v453 = vlaneseq
        %v454 = vshrl.u32 %v453, 7
        %v455 = vsub.s32 0, %v454
        %v456 = vrot.slane %v447, %v455
        %v457 = vlaneseq
        %v458 = vshrl.u32 %v457, 7
        %v459 = vsub.s32 1, %v458
        %v460 = vrot.slane %v447, %v459
        %v461 = vlaneseq
        %v462 = vshrl.u32 %v461, 7
        %v463 = vsub.s32 2, %v462
        %v464 = vrot.slane %v447, %v463
        %v465 = vlaneseq
        %v466 = vshrl.u32 %v465, 7
        %v467 = vsub.s32 3, %v466
        %v468 = vrot.slane %v447, %v467
        %v469 = vlaneseq
        %v470 = vshrl.u32 %v469, 7
        %v471 = vsub.s32 4, %v470
        %v472 = vrot.slane %v447, %v471
        %v473 = vlaneseq
        %v474 = vshrl.u32 %v473, 7
        %v475 = vsub.s32 5, %v474
        %v476 = vrot.slane %v447, %v475
        %v477 = vlaneseq
        %v478 = vshrl.u32 %v477, 7
        %v479 = vsub.s32 6, %v478
        %v480 = vrot.slane %v447, %v479
        %v481 = vlaneseq
        %v482 = vshrl.u32 %v481, 7
        %v483 = vsub.s32 7, %v482
        %v484 = vrot.slane %v447, %v483
        %v485 = vlaneseq
        %v486 = vshrl.u32 %v485, 7
        %v487 = vsub.s32 0, %v486
        %v488 = vrot.slane %v448, %v487
        %v489 = vlaneseq
        %v490 = vshrl.u32 %v489, 7
        %v491 = vsub.s32 1, %v490
        %v492 = vrot.slane %v448, %v491
        %v493 = vlaneseq
        %v494 = vshrl.u32 %v493, 7
        %v495 = vsub.s32 2, %v494
        %v496 = vrot.slane %v448, %v495
        %v497 = vlaneseq
        %v498 = vshrl.u32 %v497, 7
        %v499 = vsub.s32 3, %v498
        %v500 = vrot.slane %v448, %v499
        %v501 = vlaneseq
        %v502 = vshrl.u32 %v501, 7
        %v503 = vsub.s32 4, %v502
        %v504 = vrot.slane %v448, %v503
        %v505 = vlaneseq
        %v506 = vshrl.u32 %v505, 7
        %v507 = vsub.s32 5, %v506
        %v508 = vrot.slane %v448, %v507
        %v509 = vlaneseq
        %v510 = vshrl.u32 %v509, 7
        %v511 = vsub.s32 6, %v510
        %v512 = vrot.slane %v448, %v511
        %v513 = vlaneseq
        %v514 = vshrl.u32 %v513, 7
        %v515 = vsub.s32 7, %v514
        %v516 = vrot.slane %v448, %v515
        %v517 = vlaneseq
        %v518 = vshrl.u32 %v517, 7
        %v519 = vsub.s32 0, %v518
        %v520 = vrot.slane %v449, %v519
        %v521 = vlaneseq
        %v522 = vshrl.u32 %v521, 7
        %v523 = vsub.s32 1, %v522
        %v524 = vrot.slane %v449, %v523
        %v525 = vlaneseq
        %v526 = vshrl.u32 %v525, 7
        %v527 = vsub.s32 2, %v526
        %v528 = vrot.slane %v449, %v527
        %v529 = vlaneseq
        %v530 = vshrl.u32 %v529, 7
        %v531 = vsub.s32 3, %v530
        %v532 = vrot.slane %v449, %v531
        %v533 = vlaneseq
        %v534 = vshrl.u32 %v533, 7
        %v535 = vsub.s32 4, %v534
        %v536 = vrot.slane %v449, %v535
        %v537 = vlaneseq
        %v538 = vshrl.u32 %v537, 7
        %v539 = vsub.s32 5, %v538
        %v540 = vrot.slane %v449, %v539
        %v541 = vlaneseq
        %v542 = vshrl.u32 %v541, 7
        %v543 = vsub.s32 6, %v542
        %v544 = vrot.slane %v449, %v543
        %v545 = vlaneseq
        %v546 = vshrl.u32 %v545, 7
        %v547 = vsub.s32 7, %v546
        %v548 = vrot.slane %v449, %v547
        %v717 = vunpack.c.l.b16 %v303
        %v718 = vunpack.c.h.b16 %v303
        %v719 = vunpack.c.l.b16 %v304
        %v720 = vunpack.c.h.b16 %v304
        %v721 = vunpack.c.l.b16 %v305
        %v722 = vunpack.c.h.b16 %v305
        %v723 = vunpack.c.l.b16 %v306
        %v724 = vunpack.c.h.b16 %v306
        %v725 = vunpack.c.l.b16 %v307
        %v726 = vunpack.c.h.b16 %v307
        %v727 = vunpack.c.l.b16 %v308
        %v728 = vunpack.c.h.b16 %v308
        %v729 = vunpack.c.l.b16 %v309
        %v730 = vunpack.c.h.b16 %v309
        %v731 = vunpack.c.l.b16 %v310
        %v732 = vunpack.c.h.b16 %v310
        %v733 = vunpack.c.l.b16 %v311
        %v734 = vunpack.c.h.b16 %v311
        %v735 = vunpack.c.l.b16 %v312
        %v736 = vunpack.c.h.b16 %v312
        %v737 = vunpack.c.l.b16 %v313
        %v738 = vunpack.c.h.b16 %v313
        %v739 = vunpack.c.l.b16 %v314
        %v740 = vunpack.c.h.b16 %v314
        %v741 = vunpack.c.l.b16 %v315
        %v742 = vunpack.c.h.b16 %v315
        %v743 = vunpack.c.l.b16 %v316
        %v744 = vunpack.c.h.b16 %v316
        %v745 = vunpack.c.l.b16 %v317
        %v746 = vunpack.c.h.b16 %v317
        %v747 = vunpack.c.l.b16 %v318
        %v748 = vunpack.c.h.b16 %v318
        %v749 = vunpack.c.l.b16 %v319
        %v750 = vunpack.c.h.b16 %v319
        %v751 = vunpack.c.l.b16 %v320
        %v752 = vunpack.c.h.b16 %v320
        %v753 = vunpack.c.l.b16 %v321
        %v754 = vunpack.c.h.b16 %v321
        %v755 = vunpack.c.l.b16 %v322
        %v756 = vunpack.c.h.b16 %v322
        %v757 = vunpack.c.l.b16 %v323
        %v758 = vunpack.c.h.b16 %v323
        %v759 = vunpack.c.l.b16 %v324
        %v760 = vunpack.c.h.b16 %v324
        %v761 = vunpack.c.l.b16 %v325
        %v762 = vunpack.c.h.b16 %v325
        %v763 = vunpack.c.l.b16 %v326
        %v764 = vunpack.c.h.b16 %v326
        %v765 = vunpack.c.l.b16 %v327
        %v766 = vunpack.c.h.b16 %v327
        %v767 = vunpack.c.l.b16 %v328
        %v768 = vunpack.c.h.b16 %v328
        %v769 = vunpack.c.l.b16 %v329
        %v770 = vunpack.c.h.b16 %v329
        %v771 = vunpack.c.l.b16 %v330
        %v772 = vunpack.c.h.b16 %v330
        %v773 = vunpack.c.l.b16 %v331
        %v774 = vunpack.c.h.b16 %v331
        %v775 = vunpack.c.l.b16 %v332
        %v776 = vunpack.c.h.b16 %v332
        %v777 = vunpack.c.l.b16 %v333
        %v778 = vunpack.c.h.b16 %v333
        %v779 = vunpack.c.l.b16 %v334
        %v780 = vunpack.c.h.b16 %v334
        %v781 = vunpack.c.l.b16 %v335
        %v782 = vunpack.c.h.b16 %v335
        %v783 = vunpack.c.l.b16 %v336
        %v784 = vunpack.c.h.b16 %v336
        %v785 = vunpack.c.l.b16 %v337
        %v786 = vunpack.c.h.b16 %v337
        %v787 = vunpack.c.l.b16 %v338
        %v788 = vunpack.c.h.b16 %v338
        %v789 = vunpack.c.l.b16 %v339
        %v790 = vunpack.c.h.b16 %v339
        %v791 = vunpack.c.l.b16 %v340
        %v792 = vunpack.c.h.b16 %v340
        %v793 = vunpack.c.l.b16 %v341
        %v794 = vunpack.c.h.b16 %v341
        %v795 = vunpack.c.l.b16 %v342
        %v796 = vunpack.c.h.b16 %v342
        %v797 = vunpack.c.l.b16 %v343
        %v798 = vunpack.c.h.b16 %v343
        %v799 = vunpack.c.l.b16 %v344
        %v800 = vunpack.c.h.b16 %v344
        %v801 = vunpack.c.l.b16 %v345
        %v802 = vunpack.c.h.b16 %v345
        %v803 = vunpack.c.l.b16 %v346
        %v804 = vunpack.c.h.b16 %v346
        %v805 = vunpack.c.l.b16 %v347
        %v806 = vunpack.c.h.b16 %v347
        %v807 = vunpack.c.l.b16 %v348
        %v808 = vunpack.c.h.b16 %v348
        %v809 = vunpack.c.l.b16 %v349
        %v810 = vunpack.c.h.b16 %v349
        %v811 = vunpack.c.l.b16 %v350
        %v812 = vunpack.c.h.b16 %v350
        %v813 = vunpack.c.l.b16 %v351
        %v814 = vunpack.c.h.b16 %v351
        %v815 = vunpack.c.l.b16 %v352
        %v816 = vunpack.c.h.b16 %v352
        %v817 = vunpack.c.l.b16 %v353
        %v818 = vunpack.c.h.b16 %v353
        %v819 = vunpack.c.l.b16 %v354
        %v820 = vunpack.c.h.b16 %v354
        %v821 = vunpack.c.l.b16 %v355
        %v822 = vunpack.c.h.b16 %v355
        %v823 = vunpack.c.l.b16 %v356
        %v824 = vunpack.c.h.b16 %v356
        %v825 = vunpack.c.l.b16 %v357
        %v826 = vunpack.c.h.b16 %v357
        %v827 = vunpack.c.l.b16 %v358
        %v828 = vunpack.c.h.b16 %v358
        %v829 = vunpack.c.l.b16 %v359
        %v830 = vunpack.c.h.b16 %v359
        %v831 = vunpack.c.l.b16 %v360
        %v832 = vunpack.c.h.b16 %v360
        %v833 = vunpack.c.l.b16 %v361
        %v834 = vunpack.c.h.b16 %v361
        %v835 = vunpack.c.l.b16 %v362
        %v836 = vunpack.c.h.b16 %v362
        %v837 = vunpack.c.l.b16 %v363
        %v838 = vunpack.c.h.b16 %v363
        %v839 = vunpack.c.l.b16 %v364
        %v840 = vunpack.c.h.b16 %v364
        %v841 = vunpack.c.l.b16 %v365
        %v842 = vunpack.c.h.b16 %v365
        %v843 = vunpack.c.l.b16 %v366
        %v844 = vunpack.c.h.b16 %v366
        %v845 = vunpack.c.l.b16 %v367
        %v846 = vunpack.c.h.b16 %v367
        %v847 = vunpack.c.l.b16 %v368
        %v848 = vunpack.c.h.b16 %v368
        %v849 = vunpack.c.l.b16 %v369
        %v850 = vunpack.c.h.b16 %v369
        %v851 = vunpack.c.l.b16 %v370
        %v852 = vunpack.c.h.b16 %v370
        %v853 = vunpack.c.l.b16 %v371
        %v854 = vunpack.c.h.b16 %v371
        %v855 = vunpack.c.l.b16 %v372
        %v856 = vunpack.c.h.b16 %v372
        %v857 = vunpack.c.l.b16 %v373
        %v858 = vunpack.c.h.b16 %v373
        %v859 = vunpack.c.l.b16 %v374
        %v860 = vunpack.c.h.b16 %v374
        %v861 = vunpack.c.l.b16 %v375
        %v862 = vunpack.c.h.b16 %v375
        %v863 = vunpack.c.l.b16 %v376
        %v864 = vunpack.c.h.b16 %v376
        %v865 = vunpack.c.l.b16 %v377
        %v866 = vunpack.c.h.b16 %v377
        %v867 = vunpack.c.l.b16 %v378
        %v868 = vunpack.c.h.b16 %v378
        %v869 = vunpack.c.l.b16 %v379
        %v870 = vunpack.c.h.b16 %v379
        %v871 = vunpack.c.l.b16 %v380
        %v872 = vunpack.c.h.b16 %v380
        %v873 = vunpack.c.l.b16 %v381
        %v874 = vunpack.c.h.b16 %v381
        %v875 = vunpack.c.l.b16 %v382
        %v876 = vunpack.c.h.b16 %v382
        %v877 = vunpack.c.l.b16 %v383
        %v878 = vunpack.c.h.b16 %v383
        %v879 = vunpack.c.l.b16 %v384
        %v880 = vunpack.c.h.b16 %v384
        %v881 = vunpack.c.l.b16 %v385
        %v882 = vunpack.c.h.b16 %v385
        %v883 = vunpack.c.l.b16 %v386
        %v884 = vunpack.c.h.b16 %v386
        %v885 = vunpack.c.l.b16 %v387
        %v886 = vunpack.c.h.b16 %v387
        %v887 = vunpack.c.l.b16 %v388
        %v888 = vunpack.c.h.b16 %v388
        %v889 = vunpack.c.l.b16 %v389
        %v890 = vunpack.c.h.b16 %v389
        %v891 = vunpack.c.l.b16 %v390
        %v892 = vunpack.c.h.b16 %v390
        %v893 = vunpack.c.l.b16 %v391
        %v894 = vunpack.c.h.b16 %v391
        %v895 = vunpack.c.l.b16 %v392
        %v896 = vunpack.c.h.b16 %v392
        %v897 = vunpack.c.l.b16 %v393
        %v898 = vunpack.c.h.b16 %v393
        %v899 = vunpack.c.l.b16 %v394
        %v900 = vunpack.c.h.b16 %v394
        %v901 = vunpack.c.l.b16 %v395
        %v902 = vunpack.c.h.b16 %v395
        %v903 = vunpack.c.l.b16 %v396
        %v904 = vunpack.c.h.b16 %v396
        %v905 = vunpack.c.l.b16 %v397
        %v906 = vunpack.c.h.b16 %v397
        %v907 = vunpack.c.l.b16 %v398
        %v908 = vunpack.c.h.b16 %v398
        %v909 = vunpack.c.l.b16 %v399
        %v910 = vunpack.c.h.b16 %v399
        %v911 = vunpack.c.l.b16 %v400
        %v912 = vunpack.c.h.b16 %v400
        %v913 = vunpack.c.l.b16 %v401
        %v914 = vunpack.c.h.b16 %v401
        %v915 = vunpack.c.l.b16 %v402
        %v916 = vunpack.c.h.b16 %v402
        %v917 = vunpack.c.l.b16 %v403
        %v918 = vunpack.c.h.b16 %v403
        %v919 = vunpack.c.l.b16 %v404
        %v920 = vunpack.c.h.b16 %v404
        %v921 = vunpack.c.l.b16 %v405
        %v922 = vunpack.c.h.b16 %v405
        %v923 = vunpack.c.l.b16 %v406
        %v924 = vunpack.c.h.b16 %v406
        %v925 = vunpack.c.l.b16 %v407
        %v926 = vunpack.c.h.b16 %v407
        %v927 = vunpack.c.l.b16 %v408
        %v928 = vunpack.c.h.b16 %v408
        %v929 = vunpack.c.l.b16 %v409
        %v930 = vunpack.c.h.b16 %v409
        %v931 = vunpack.c.l.b16 %v410
        %v932 = vunpack.c.h.b16 %v410
        %v933 = vunpack.c.l.b16 %v411
        %v934 = vunpack.c.h.b16 %v411
        %v935 = vunpack.c.l.b16 %v412
        %v936 = vunpack.c.h.b16 %v412
        %v937 = vunpack.c.l.b16 %v413
        %v938 = vunpack.c.h.b16 %v413
        %v939 = vunpack.c.l.b16 %v414
        %v940 = vunpack.c.h.b16 %v414
        %v941 = vunpack.c.l.b16 %v415
        %v942 = vunpack.c.h.b16 %v415
        %v943 = vunpack.c.l.b16 %v416
        %v944 = vunpack.c.h.b16 %v416
        %v945 = vunpack.c.l.b16 %v417
        %v946 = vunpack.c.h.b16 %v417
        %v947 = vunpack.c.l.b16 %v418
        %v948 = vunpack.c.h.b16 %v418
        %v949 = vunpack.c.l.b16 %v419
        %v950 = vunpack.c.h.b16 %v419
        %v951 = vunpack.c.l.b16 %v420
        %v952 = vunpack.c.h.b16 %v420
        %v953 = vunpack.c.l.b16 %v421
        %v954 = vunpack.c.h.b16 %v421
        %v955 = vunpack.c.l.b16 %v422
        %v956 = vunpack.c.h.b16 %v422
        %v957 = vunpack.c.l.b16 %v423
        %v958 = vunpack.c.h.b16 %v423
        %v959 = vunpack.c.l.b16 %v424
        %v960 = vunpack.c.h.b16 %v424
        %v961 = vunpack.c.l.b16 %v425
        %v962 = vunpack.c.h.b16 %v425
        %v963 = vunpack.c.l.b16 %v426
        %v964 = vunpack.c.h.b16 %v426
        %v965 = vunpack.c.l.b16 %v427
        %v966 = vunpack.c.h.b16 %v427
        %v967 = vunpack.c.l.b16 %v428
        %v968 = vunpack.c.h.b16 %v428
        %v969 = vunpack.c.l.b16 %v429
        %v970 = vunpack.c.h.b16 %v429
        %v971 = vunpack.c.l.b16 %v430
        %v972 = vunpack.c.h.b16 %v430
        %v973 = vunpack.c.l.b16 %v431
        %v974 = vunpack.c.h.b16 %v431
        %v975 = vunpack.c.l.b16 %v432
        %v976 = vunpack.c.h.b16 %v432
        %v977 = vunpack.c.l.b16 %v433
        %v978 = vunpack.c.h.b16 %v433
        %v979 = vunpack.c.l.b16 %v434
        %v980 = vunpack.c.h.b16 %v434
        %v981 = vunpack.c.l.b16 %v435
        %v982 = vunpack.c.h.b16 %v435
        %v983 = vunpack.c.l.b16 %v436
        %v984 = vunpack.c.h.b16 %v436
        %v985 = vunpack.c.l.b16 %v437
        %v986 = vunpack.c.h.b16 %v437
        %v987 = vunpack.c.l.b16 %v438
        %v988 = vunpack.c.h.b16 %v438
        %v989 = vunpack.c.l.b16 %v439
        %v990 = vunpack.c.h.b16 %v439
        %v991 = vunpack.c.l.b16 %v440
        %v992 = vunpack.c.h.b16 %v440
        %v993 = vunpack.c.l.b16 %v441
        %v994 = vunpack.c.h.b16 %v441
        %v995 = vunpack.c.l.b16 %v442
        %v996 = vunpack.c.h.b16 %v442
        %v997 = vunpack.c.l.b16 %v443
        %v998 = vunpack.c.h.b16 %v443
        %v999 = vunpack.c.l.b16 %v444
        %v1000 = vunpack.c.h.b16 %v444
        %v1001 = vunpack.c.l.b16 %v445
        %v1002 = vunpack.c.h.b16 %v445
        %v1003 = vunpack.c.l.b16 %v446
        %v1004 = vunpack.c.h.b16 %v446
        %v1005 = vpack.c.b16 %v741, %v717
        %v1006 = vpack.c.b16 %v742, %v718
        %v1007 = vpack.c.b16 %v743, %v719
        %v1008 = vpack.c.b16 %v744, %v720
        %v1009 = vpack.c.b16 %v745, %v721
        %v1010 = vpack.c.b16 %v746, %v722
        %v1011 = vpack.c.b16 %v747, %v723
        %v1012 = vpack.c.b16 %v748, %v724
        %v1013 = vpack.c.b16 %v749, %v725
        %v1014 = vpack.c.b16 %v750, %v726
        %v1015 = vpack.c.b16 %v751, %v727
        %v1016 = vpack.c.b16 %v752, %v728
        %v1017 = vpack.c.b16 %v753, %v729
        %v1018 = vpack.c.b16 %v754, %v730
        %v1019 = vpack.c.b16 %v755, %v731
        %v1020 = vpack.c.b16 %v756, %v732
        %v1021 = vpack.c.b16 %v757, %v733
        %v1022 = vpack.c.b16 %v758, %v734
        %v1023 = vpack.c.b16 %v759, %v735
        %v1024 = vpack.c.b16 %v760, %v736
        %v1025 = vpack.c.b16 %v761, %v737
        %v1026 = vpack.c.b16 %v762, %v738
        %v1027 = vpack.c.b16 %v763, %v739
        %v1028 = vpack.c.b16 %v764, %v740
        %v1029 = vpack.c.b16 %v789, %v765
        %v1030 = vpack.c.b16 %v790, %v766
        %v1031 = vpack.c.b16 %v791, %v767
        %v1032 = vpack.c.b16 %v792, %v768
        %v1033 = vpack.c.b16 %v793, %v769
        %v1034 = vpack.c.b16 %v794, %v770
        %v1035 = vpack.c.b16 %v795, %v771
        %v1036 = vpack.c.b16 %v796, %v772
        %v1037 = vpack.c.b16 %v797, %v773
        %v1038 = vpack.c.b16 %v798, %v774
        %v1039 = vpack.c.b16 %v799, %v775
        %v1040 = vpack.c.b16 %v800, %v776
        %v1041 = vpack.c.b16 %v801, %v777
        %v1042 = vpack.c.b16 %v802, %v778
        %v1043 = vpack.c.b16 %v803, %v779
        %v1044 = vpack.c.b16 %v804, %v780
        %v1045 = vpack.c.b16 %v805, %v781
        %v1046 = vpack.c.b16 %v806, %v782
        %v1047 = vpack.c.b16 %v807, %v783
        %v1048 = vpack.c.b16 %v808, %v784
        %v1049 = vpack.c.b16 %v809, %v785
        %v1050 = vpack.c.b16 %v810, %v786
        %v1051 = vpack.c.b16 %v811, %v787
        %v1052 = vpack.c.b16 %v812, %v788
        %v1053 = vpack.c.b16 %v837, %v813
        %v1054 = vpack.c.b16 %v838, %v814
        %v1055 = vpack.c.b16 %v839, %v815
        %v1056 = vpack.c.b16 %v840, %v816
        %v1057 = vpack.c.b16 %v841, %v817
        %v1058 = vpack.c.b16 %v842, %v818
        %v1059 = vpack.c.b16 %v843, %v819
        %v1060 = vpack.c.b16 %v844, %v820
        %v1061 = vpack.c.b16 %v845, %v821
        %v1062 = vpack.c.b16 %v846, %v822
        %v1063 = vpack.c.b16 %v847, %v823
        %v1064 = vpack.c.b16 %v848, %v824
        %v1065 = vpack.c.b16 %v849, %v825
        %v1066 = vpack.c.b16 %v850, %v826
        %v1067 = vpack.c.b16 %v851, %v827
        %v1068 = vpack.c.b16 %v852, %v828
        %v1069 = vpack.c.b16 %v853, %v829
        %v1070 = vpack.c.b16 %v854, %v830
        %v1071 = vpack.c.b16 %v855, %v831
        %v1072 = vpack.c.b16 %v856, %v832
        %v1073 = vpack.c.b16 %v857, %v833
        %v1074 = vpack.c.b16 %v858, %v834
        %v1075 = vpack.c.b16 %v859, %v835
        %v1076 = vpack.c.b16 %v860, %v836
        %v1077 = vpack.c.b16 %v885, %v861
        %v1078 = vpack.c.b16 %v886, %v862
        %v1079 = vpack.c.b16 %v887, %v863
        %v1080 = vpack.c.b16 %v888, %v864
        %v1081 = vpack.c.b16 %v889, %v865
        %v1082 = vpack.c.b16 %v890, %v866
        %v1083 = vpack.c.b16 %v891, %v867
        %v1084 = vpack.c.b16 %v892, %v868
        %v1085 = vpack.c.b16 %v893, %v869
        %v1086 = vpack.c.b16 %v894, %v870
        %v1087 = vpack.c.b16 %v895, %v871
        %v1088 = vpack.c.b16 %v896, %v872
        %v1089 = vpack.c.b16 %v897, %v873
        %v1090 = vpack.c.b16 %v898, %v874
        %v1091 = vpack.c.b16 %v899, %v875
        %v1092 = vpack.c.b16 %v900, %v876
        %v1093 = vpack.c.b16 %v901, %v877
        %v1094 = vpack.c.b16 %v902, %v878
        %v1095 = vpack.c.b16 %v903, %v879
        %v1096 = vpack.c.b16 %v904, %v880
        %v1097 = vpack.c.b16 %v905, %v881
        %v1098 = vpack.c.b16 %v906, %v882
        %v1099 = vpack.c.b16 %v907, %v883
        %v1100 = vpack.c.b16 %v908, %v884
        %v1101 = vpack.c.b16 %v933, %v909
        %v1102 = vpack.c.b16 %v934, %v910
        %v1103 = vpack.c.b16 %v935, %v911
        %v1104 = vpack.c.b16 %v936, %v912
        %v1105 = vpack.c.b16 %v937, %v913
        %v1106 = vpack.c.b16 %v938, %v914
        %v1107 = vpack.c.b16 %v939, %v915
        %v1108 = vpack.c.b16 %v940, %v916
        %v1109 = vpack.c.b16 %v941, %v917
        %v1110 = vpack.c.b16 %v942, %v918
        %v1111 = vpack.c.b16 %v943, %v919
        %v1112 = vpack.c.b16 %v944, %v920
        %v1113 = vpack.c.b16 %v945, %v921
        %v1114 = vpack.c.b16 %v946, %v922
        %v1115 = vpack.c.b16 %v947, %v923
        %v1116 = vpack.c.b16 %v948, %v924
        %v1117 = vpack.c.b16 %v949, %v925
        %v1118 = vpack.c.b16 %v950, %v926
        %v1119 = vpack.c.b16 %v951, %v927
        %v1120 = vpack.c.b16 %v952, %v928
        %v1121 = vpack.c.b16 %v953, %v929
        %v1122 = vpack.c.b16 %v954, %v930
        %v1123 = vpack.c.b16 %v955, %v931
        %v1124 = vpack.c.b16 %v956, %v932
        %v1125 = vpack.c.b16 %v981, %v957
        %v1126 = vpack.c.b16 %v982, %v958
        %v1127 = vpack.c.b16 %v983, %v959
        %v1128 = vpack.c.b16 %v984, %v960
        %v1129 = vpack.c.b16 %v985, %v961
        %v1130 = vpack.c.b16 %v986, %v962
        %v1131 = vpack.c.b16 %v987, %v963
        %v1132 = vpack.c.b16 %v988, %v964
        %v1133 = vpack.c.b16 %v989, %v965
        %v1134 = vpack.c.b16 %v990, %v966
        %v1135 = vpack.c.b16 %v991, %v967
        %v1136 = vpack.c.b16 %v992, %v968
        %v1137 = vpack.c.b16 %v993, %v969
        %v1138 = vpack.c.b16 %v994, %v970
        %v1139 = vpack.c.b16 %v995, %v971
        %v1140 = vpack.c.b16 %v996, %v972
        %v1141 = vpack.c.b16 %v997, %v973
        %v1142 = vpack.c.b16 %v998, %v974
        %v1143 = vpack.c.b16 %v999, %v975
        %v1144 = vpack.c.b16 %v1000, %v976
        %v1145 = vpack.c.b16 %v1001, %v977
        %v1146 = vpack.c.b16 %v1002, %v978
        %v1147 = vpack.c.b16 %v1003, %v979
        %v1148 = vpack.c.b16 %v1004, %v980
        %vm1293 = vcmask 785408
        %v1295 = vsel %vm1293, %v302, 0
        %1297 = vmatprep.subr.bf16.mxu0 0
        %1298 = vmatpush1.bf16.msra.mxu0 0
        %1299 = vmatprep.subr.bf16.mxu0 0
        %1300 = vmatpush1.bf16.msra.mxu0 0
        %1301 = vmatprep.subr.bf16.mxu0 %v1126
        %1302 = vmatpush1.bf16.msra.mxu0 %v1125
        %1303 = vmatprep.subr.bf16.mxu0 %v1102
        %1304 = vmatpush1.bf16.msra.mxu0 %v1101
        %1305 = vmatprep.subr.bf16.mxu0 %v1078
        %1306 = vmatpush1.bf16.msra.mxu0 %v1077
        %1307 = vmatprep.subr.bf16.mxu0 %v1054
        %1308 = vmatpush1.bf16.msra.mxu0 %v1053
        %1309 = vmatprep.subr.bf16.mxu0 %v1030
        %1310 = vmatpush1.bf16.msra.mxu0 %v1029
        %1311 = vmatprep.subr.bf16.mxu0 %v1006
        %1312 = vmatpush1.bf16.msra.mxu0 %v1005
        %1313 = vmatprep.subr.bf16.mxu0 0
        %1314 = vmatpush2.bf16.msra.mxu0 0
        %1315 = vmatprep.subr.bf16.mxu0 0
        %1316 = vmatpush2.bf16.msra.mxu0 0
        %1317 = vmatprep.subr.bf16.mxu0 0
        %1318 = vmatpush2.bf16.msra.mxu0 0
        %1319 = vmatprep.subr.bf16.mxu0 0
        %1320 = vmatpush2.bf16.msra.mxu0 0
        %1321 = vmatprep.subr.bf16.mxu0 0
        %1322 = vmatpush2.bf16.msra.mxu0 0
        %1323 = vmatprep.subr.bf16.mxu0 0
        %1324 = vmatpush2.bf16.msra.mxu0 0
        %1325 = vmatprep.subr.bf16.mxu0 0
        %1326 = vmatpush2.bf16.msra.mxu0 0
        %1327 = vmatprep.subr.bf16.mxu0 0
        %1328 = vmatpush2.bf16.msra.mxu0 0
        %1329 = vmatprep.mubr.bf16.mxu0 0
        %1330 = vmatmul.mubr.bf16.gmra.mxu0 %v1295
        %v1331 = vpop.f32.mrf.mxu0
        %v1332 = vadd.f32 %v456, %v1331
        %v1333 = vpop.f32.mrf.mxu0
        %v1334 = vadd.f32 %v460, %v1333
        %v1335 = vpop.f32.mrf.mxu0
        %v1336 = vpop.f32.mrf.mxu0
        %1337 = vdwg.mxu0
        %1338 = vmatprep.subr.bf16.mxu0 0
        %1339 = vmatpush1.bf16.msra.mxu0 0
        %1340 = vmatprep.subr.bf16.mxu0 0
        %1341 = vmatpush1.bf16.msra.mxu0 0
        %1342 = vmatprep.subr.bf16.mxu0 %v1128
        %1343 = vmatpush1.bf16.msra.mxu0 %v1127
        %1344 = vmatprep.subr.bf16.mxu0 %v1104
        %1345 = vmatpush1.bf16.msra.mxu0 %v1103
        %1346 = vmatprep.subr.bf16.mxu0 %v1080
        %1347 = vmatpush1.bf16.msra.mxu0 %v1079
        %1348 = vmatprep.subr.bf16.mxu0 %v1056
        %1349 = vmatpush1.bf16.msra.mxu0 %v1055
        %1350 = vmatprep.subr.bf16.mxu0 %v1032
        %1351 = vmatpush1.bf16.msra.mxu0 %v1031
        %1352 = vmatprep.subr.bf16.mxu0 %v1008
        %1353 = vmatpush1.bf16.msra.mxu0 %v1007
        %1354 = vmatprep.subr.bf16.mxu0 0
        %1355 = vmatpush2.bf16.msra.mxu0 0
        %1356 = vmatprep.subr.bf16.mxu0 0
        %1357 = vmatpush2.bf16.msra.mxu0 0
        %1358 = vmatprep.subr.bf16.mxu0 0
        %1359 = vmatpush2.bf16.msra.mxu0 0
        %1360 = vmatprep.subr.bf16.mxu0 0
        %1361 = vmatpush2.bf16.msra.mxu0 0
        %1362 = vmatprep.subr.bf16.mxu0 0
        %1363 = vmatpush2.bf16.msra.mxu0 0
        %1364 = vmatprep.subr.bf16.mxu0 0
        %1365 = vmatpush2.bf16.msra.mxu0 0
        %1366 = vmatprep.subr.bf16.mxu0 0
        %1367 = vmatpush2.bf16.msra.mxu0 0
        %1368 = vmatprep.subr.bf16.mxu0 0
        %1369 = vmatpush2.bf16.msra.mxu0 0
        %1370 = vmatprep.mubr.bf16.mxu0 0
        %1371 = vmatmul.mubr.bf16.gmra.mxu0 %v1295
        %v1372 = vpop.f32.mrf.mxu0
        %v1373 = vadd.f32 %v464, %v1372
        %v1374 = vpop.f32.mrf.mxu0
        %v1375 = vadd.f32 %v468, %v1374
        %v1376 = vpop.f32.mrf.mxu0
        %v1377 = vpop.f32.mrf.mxu0
        %1378 = vdwg.mxu0
        %1379 = vmatprep.subr.bf16.mxu0 0
        %1380 = vmatpush1.bf16.msra.mxu0 0
        %1381 = vmatprep.subr.bf16.mxu0 0
        %1382 = vmatpush1.bf16.msra.mxu0 0
        %1383 = vmatprep.subr.bf16.mxu0 %v1130
        %1384 = vmatpush1.bf16.msra.mxu0 %v1129
        %1385 = vmatprep.subr.bf16.mxu0 %v1106
        %1386 = vmatpush1.bf16.msra.mxu0 %v1105
        %1387 = vmatprep.subr.bf16.mxu0 %v1082
        %1388 = vmatpush1.bf16.msra.mxu0 %v1081
        %1389 = vmatprep.subr.bf16.mxu0 %v1058
        %1390 = vmatpush1.bf16.msra.mxu0 %v1057
        %1391 = vmatprep.subr.bf16.mxu0 %v1034
        %1392 = vmatpush1.bf16.msra.mxu0 %v1033
        %1393 = vmatprep.subr.bf16.mxu0 %v1010
        %1394 = vmatpush1.bf16.msra.mxu0 %v1009
        %1395 = vmatprep.subr.bf16.mxu0 0
        %1396 = vmatpush2.bf16.msra.mxu0 0
        %1397 = vmatprep.subr.bf16.mxu0 0
        %1398 = vmatpush2.bf16.msra.mxu0 0
        %1399 = vmatprep.subr.bf16.mxu0 0
        %1400 = vmatpush2.bf16.msra.mxu0 0
        %1401 = vmatprep.subr.bf16.mxu0 0
        %1402 = vmatpush2.bf16.msra.mxu0 0
        %1403 = vmatprep.subr.bf16.mxu0 0
        %1404 = vmatpush2.bf16.msra.mxu0 0
        %1405 = vmatprep.subr.bf16.mxu0 0
        %1406 = vmatpush2.bf16.msra.mxu0 0
        %1407 = vmatprep.subr.bf16.mxu0 0
        %1408 = vmatpush2.bf16.msra.mxu0 0
        %1409 = vmatprep.subr.bf16.mxu0 0
        %1410 = vmatpush2.bf16.msra.mxu0 0
        %1411 = vmatprep.mubr.bf16.mxu0 0
        %1412 = vmatmul.mubr.bf16.gmra.mxu0 %v1295
        %v1413 = vpop.f32.mrf.mxu0
        %v1414 = vadd.f32 %v472, %v1413
        %v1415 = vpop.f32.mrf.mxu0
        %v1416 = vadd.f32 %v476, %v1415
        %v1417 = vpop.f32.mrf.mxu0
        %v1418 = vpop.f32.mrf.mxu0
        %1419 = vdwg.mxu0
        %1420 = vmatprep.subr.bf16.mxu0 0
        %1421 = vmatpush1.bf16.msra.mxu0 0
        %1422 = vmatprep.subr.bf16.mxu0 0
        %1423 = vmatpush1.bf16.msra.mxu0 0
        %1424 = vmatprep.subr.bf16.mxu0 %v1132
        %1425 = vmatpush1.bf16.msra.mxu0 %v1131
        %1426 = vmatprep.subr.bf16.mxu0 %v1108
        %1427 = vmatpush1.bf16.msra.mxu0 %v1107
        %1428 = vmatprep.subr.bf16.mxu0 %v1084
        %1429 = vmatpush1.bf16.msra.mxu0 %v1083
        %1430 = vmatprep.subr.bf16.mxu0 %v1060
        %1431 = vmatpush1.bf16.msra.mxu0 %v1059
        %1432 = vmatprep.subr.bf16.mxu0 %v1036
        %1433 = vmatpush1.bf16.msra.mxu0 %v1035
        %1434 = vmatprep.subr.bf16.mxu0 %v1012
        %1435 = vmatpush1.bf16.msra.mxu0 %v1011
        %1436 = vmatprep.subr.bf16.mxu0 0
        %1437 = vmatpush2.bf16.msra.mxu0 0
        %1438 = vmatprep.subr.bf16.mxu0 0
        %1439 = vmatpush2.bf16.msra.mxu0 0
        %1440 = vmatprep.subr.bf16.mxu0 0
        %1441 = vmatpush2.bf16.msra.mxu0 0
        %1442 = vmatprep.subr.bf16.mxu0 0
        %1443 = vmatpush2.bf16.msra.mxu0 0
        %1444 = vmatprep.subr.bf16.mxu0 0
        %1445 = vmatpush2.bf16.msra.mxu0 0
        %1446 = vmatprep.subr.bf16.mxu0 0
        %1447 = vmatpush2.bf16.msra.mxu0 0
        %1448 = vmatprep.subr.bf16.mxu0 0
        %1449 = vmatpush2.bf16.msra.mxu0 0
        %1450 = vmatprep.subr.bf16.mxu0 0
        %1451 = vmatpush2.bf16.msra.mxu0 0
        %1452 = vmatprep.mubr.bf16.mxu0 0
        %1453 = vmatmul.mubr.bf16.gmra.mxu0 %v1295
        %v1454 = vpop.f32.mrf.mxu0
        %v1455 = vadd.f32 %v480, %v1454
        %v1456 = vpop.f32.mrf.mxu0
        %v1457 = vadd.f32 %v484, %v1456
        %v1458 = vpop.f32.mrf.mxu0
        %v1459 = vpop.f32.mrf.mxu0
        %1460 = vdwg.mxu0
        %1461 = vmatprep.subr.bf16.mxu0 0
        %1462 = vmatpush1.bf16.msra.mxu0 0
        %1463 = vmatprep.subr.bf16.mxu0 0
        %1464 = vmatpush1.bf16.msra.mxu0 0
        %1465 = vmatprep.subr.bf16.mxu0 %v1134
        %1466 = vmatpush1.bf16.msra.mxu0 %v1133
        %1467 = vmatprep.subr.bf16.mxu0 %v1110
        %1468 = vmatpush1.bf16.msra.mxu0 %v1109
        %1469 = vmatprep.subr.bf16.mxu0 %v1086
        %1470 = vmatpush1.bf16.msra.mxu0 %v1085
        %1471 = vmatprep.subr.bf16.mxu0 %v1062
        %1472 = vmatpush1.bf16.msra.mxu0 %v1061
        %1473 = vmatprep.subr.bf16.mxu0 %v1038
        %1474 = vmatpush1.bf16.msra.mxu0 %v1037
        %1475 = vmatprep.subr.bf16.mxu0 %v1014
        %1476 = vmatpush1.bf16.msra.mxu0 %v1013
        %1477 = vmatprep.subr.bf16.mxu0 0
        %1478 = vmatpush2.bf16.msra.mxu0 0
        %1479 = vmatprep.subr.bf16.mxu0 0
        %1480 = vmatpush2.bf16.msra.mxu0 0
        %1481 = vmatprep.subr.bf16.mxu0 0
        %1482 = vmatpush2.bf16.msra.mxu0 0
        %1483 = vmatprep.subr.bf16.mxu0 0
        %1484 = vmatpush2.bf16.msra.mxu0 0
        %1485 = vmatprep.subr.bf16.mxu0 0
        %1486 = vmatpush2.bf16.msra.mxu0 0
        %1487 = vmatprep.subr.bf16.mxu0 0
        %1488 = vmatpush2.bf16.msra.mxu0 0
        %1489 = vmatprep.subr.bf16.mxu0 0
        %1490 = vmatpush2.bf16.msra.mxu0 0
        %1491 = vmatprep.subr.bf16.mxu0 0
        %1492 = vmatpush2.bf16.msra.mxu0 0
        %1493 = vmatprep.mubr.bf16.mxu0 0
        %1494 = vmatmul.mubr.bf16.gmra.mxu0 %v1295
        %v1495 = vpop.f32.mrf.mxu0
        %v1496 = vadd.f32 %v488, %v1495
        %v1497 = vpop.f32.mrf.mxu0
        %v1498 = vadd.f32 %v492, %v1497
        %v1499 = vpop.f32.mrf.mxu0
        %v1500 = vpop.f32.mrf.mxu0
        %1501 = vdwg.mxu0
        %1502 = vmatprep.subr.bf16.mxu0 0
        %1503 = vmatpush1.bf16.msra.mxu0 0
        %1504 = vmatprep.subr.bf16.mxu0 0
        %1505 = vmatpush1.bf16.msra.mxu0 0
        %1506 = vmatprep.subr.bf16.mxu0 %v1136
        %1507 = vmatpush1.bf16.msra.mxu0 %v1135
        %1508 = vmatprep.subr.bf16.mxu0 %v1112
        %1509 = vmatpush1.bf16.msra.mxu0 %v1111
        %1510 = vmatprep.subr.bf16.mxu0 %v1088
        %1511 = vmatpush1.bf16.msra.mxu0 %v1087
        %1512 = vmatprep.subr.bf16.mxu0 %v1064
        %1513 = vmatpush1.bf16.msra.mxu0 %v1063
        %1514 = vmatprep.subr.bf16.mxu0 %v1040
        %1515 = vmatpush1.bf16.msra.mxu0 %v1039
        %1516 = vmatprep.subr.bf16.mxu0 %v1016
        %1517 = vmatpush1.bf16.msra.mxu0 %v1015
        %1518 = vmatprep.subr.bf16.mxu0 0
        %1519 = vmatpush2.bf16.msra.mxu0 0
        %1520 = vmatprep.subr.bf16.mxu0 0
        %1521 = vmatpush2.bf16.msra.mxu0 0
        %1522 = vmatprep.subr.bf16.mxu0 0
        %1523 = vmatpush2.bf16.msra.mxu0 0
        %1524 = vmatprep.subr.bf16.mxu0 0
        %1525 = vmatpush2.bf16.msra.mxu0 0
        %1526 = vmatprep.subr.bf16.mxu0 0
        %1527 = vmatpush2.bf16.msra.mxu0 0
        %1528 = vmatprep.subr.bf16.mxu0 0
        %1529 = vmatpush2.bf16.msra.mxu0 0
        %1530 = vmatprep.subr.bf16.mxu0 0
        %1531 = vmatpush2.bf16.msra.mxu0 0
        %1532 = vmatprep.subr.bf16.mxu0 0
        %1533 = vmatpush2.bf16.msra.mxu0 0
        %1534 = vmatprep.mubr.bf16.mxu0 0
        %1535 = vmatmul.mubr.bf16.gmra.mxu0 %v1295
        %v1536 = vpop.f32.mrf.mxu0
        %v1537 = vadd.f32 %v496, %v1536
        %v1538 = vpop.f32.mrf.mxu0
        %v1539 = vadd.f32 %v500, %v1538
        %v1540 = vpop.f32.mrf.mxu0
        %v1541 = vpop.f32.mrf.mxu0
        %1542 = vdwg.mxu0
        %1543 = vmatprep.subr.bf16.mxu0 0
        %1544 = vmatpush1.bf16.msra.mxu0 0
        %1545 = vmatprep.subr.bf16.mxu0 0
        %1546 = vmatpush1.bf16.msra.mxu0 0
        %1547 = vmatprep.subr.bf16.mxu0 %v1138
        %1548 = vmatpush1.bf16.msra.mxu0 %v1137
        %1549 = vmatprep.subr.bf16.mxu0 %v1114
        %1550 = vmatpush1.bf16.msra.mxu0 %v1113
        %1551 = vmatprep.subr.bf16.mxu0 %v1090
        %1552 = vmatpush1.bf16.msra.mxu0 %v1089
        %1553 = vmatprep.subr.bf16.mxu0 %v1066
        %1554 = vmatpush1.bf16.msra.mxu0 %v1065
        %1555 = vmatprep.subr.bf16.mxu0 %v1042
        %1556 = vmatpush1.bf16.msra.mxu0 %v1041
        %1557 = vmatprep.subr.bf16.mxu0 %v1018
        %1558 = vmatpush1.bf16.msra.mxu0 %v1017
        %1559 = vmatprep.subr.bf16.mxu0 0
        %1560 = vmatpush2.bf16.msra.mxu0 0
        %1561 = vmatprep.subr.bf16.mxu0 0
        %1562 = vmatpush2.bf16.msra.mxu0 0
        %1563 = vmatprep.subr.bf16.mxu0 0
        %1564 = vmatpush2.bf16.msra.mxu0 0
        %1565 = vmatprep.subr.bf16.mxu0 0
        %1566 = vmatpush2.bf16.msra.mxu0 0
        %1567 = vmatprep.subr.bf16.mxu0 0
        %1568 = vmatpush2.bf16.msra.mxu0 0
        %1569 = vmatprep.subr.bf16.mxu0 0
        %1570 = vmatpush2.bf16.msra.mxu0 0
        %1571 = vmatprep.subr.bf16.mxu0 0
        %1572 = vmatpush2.bf16.msra.mxu0 0
        %1573 = vmatprep.subr.bf16.mxu0 0
        %1574 = vmatpush2.bf16.msra.mxu0 0
        %1575 = vmatprep.mubr.bf16.mxu0 0
        %1576 = vmatmul.mubr.bf16.gmra.mxu0 %v1295
        %v1577 = vpop.f32.mrf.mxu0
        %v1578 = vadd.f32 %v504, %v1577
        %v1579 = vpop.f32.mrf.mxu0
        %v1580 = vadd.f32 %v508, %v1579
        %v1581 = vpop.f32.mrf.mxu0
        %v1582 = vpop.f32.mrf.mxu0
        %1583 = vdwg.mxu0
        %1584 = vmatprep.subr.bf16.mxu0 0
        %1585 = vmatpush1.bf16.msra.mxu0 0
        %1586 = vmatprep.subr.bf16.mxu0 0
        %1587 = vmatpush1.bf16.msra.mxu0 0
        %1588 = vmatprep.subr.bf16.mxu0 %v1140
        %1589 = vmatpush1.bf16.msra.mxu0 %v1139
        %1590 = vmatprep.subr.bf16.mxu0 %v1116
        %1591 = vmatpush1.bf16.msra.mxu0 %v1115
        %1592 = vmatprep.subr.bf16.mxu0 %v1092
        %1593 = vmatpush1.bf16.msra.mxu0 %v1091
        %1594 = vmatprep.subr.bf16.mxu0 %v1068
        %1595 = vmatpush1.bf16.msra.mxu0 %v1067
        %1596 = vmatprep.subr.bf16.mxu0 %v1044
        %1597 = vmatpush1.bf16.msra.mxu0 %v1043
        %1598 = vmatprep.subr.bf16.mxu0 %v1020
        %1599 = vmatpush1.bf16.msra.mxu0 %v1019
        %1600 = vmatprep.subr.bf16.mxu0 0
        %1601 = vmatpush2.bf16.msra.mxu0 0
        %1602 = vmatprep.subr.bf16.mxu0 0
        %1603 = vmatpush2.bf16.msra.mxu0 0
        %1604 = vmatprep.subr.bf16.mxu0 0
        %1605 = vmatpush2.bf16.msra.mxu0 0
        %1606 = vmatprep.subr.bf16.mxu0 0
        %1607 = vmatpush2.bf16.msra.mxu0 0
        %1608 = vmatprep.subr.bf16.mxu0 0
        %1609 = vmatpush2.bf16.msra.mxu0 0
        %1610 = vmatprep.subr.bf16.mxu0 0
        %1611 = vmatpush2.bf16.msra.mxu0 0
        %1612 = vmatprep.subr.bf16.mxu0 0
        %1613 = vmatpush2.bf16.msra.mxu0 0
        %1614 = vmatprep.subr.bf16.mxu0 0
        %1615 = vmatpush2.bf16.msra.mxu0 0
        %1616 = vmatprep.mubr.bf16.mxu0 0
        %1617 = vmatmul.mubr.bf16.gmra.mxu0 %v1295
        %v1618 = vpop.f32.mrf.mxu0
        %v1619 = vadd.f32 %v512, %v1618
        %v1620 = vpop.f32.mrf.mxu0
        %v1621 = vadd.f32 %v516, %v1620
        %v1622 = vpop.f32.mrf.mxu0
        %v1623 = vpop.f32.mrf.mxu0
        %1624 = vdwg.mxu0
        %1625 = vmatprep.subr.bf16.mxu0 0
        %1626 = vmatpush1.bf16.msra.mxu0 0
        %1627 = vmatprep.subr.bf16.mxu0 0
        %1628 = vmatpush1.bf16.msra.mxu0 0
        %1629 = vmatprep.subr.bf16.mxu0 %v1142
        %1630 = vmatpush1.bf16.msra.mxu0 %v1141
        %1631 = vmatprep.subr.bf16.mxu0 %v1118
        %1632 = vmatpush1.bf16.msra.mxu0 %v1117
        %1633 = vmatprep.subr.bf16.mxu0 %v1094
        %1634 = vmatpush1.bf16.msra.mxu0 %v1093
        %1635 = vmatprep.subr.bf16.mxu0 %v1070
        %1636 = vmatpush1.bf16.msra.mxu0 %v1069
        %1637 = vmatprep.subr.bf16.mxu0 %v1046
        %1638 = vmatpush1.bf16.msra.mxu0 %v1045
        %1639 = vmatprep.subr.bf16.mxu0 %v1022
        %1640 = vmatpush1.bf16.msra.mxu0 %v1021
        %1641 = vmatprep.subr.bf16.mxu0 0
        %1642 = vmatpush2.bf16.msra.mxu0 0
        %1643 = vmatprep.subr.bf16.mxu0 0
        %1644 = vmatpush2.bf16.msra.mxu0 0
        %1645 = vmatprep.subr.bf16.mxu0 0
        %1646 = vmatpush2.bf16.msra.mxu0 0
        %1647 = vmatprep.subr.bf16.mxu0 0
        %1648 = vmatpush2.bf16.msra.mxu0 0
        %1649 = vmatprep.subr.bf16.mxu0 0
        %1650 = vmatpush2.bf16.msra.mxu0 0
        %1651 = vmatprep.subr.bf16.mxu0 0
        %1652 = vmatpush2.bf16.msra.mxu0 0
        %1653 = vmatprep.subr.bf16.mxu0 0
        %1654 = vmatpush2.bf16.msra.mxu0 0
        %1655 = vmatprep.subr.bf16.mxu0 0
        %1656 = vmatpush2.bf16.msra.mxu0 0
        %1657 = vmatprep.mubr.bf16.mxu0 0
        %1658 = vmatmul.mubr.bf16.gmra.mxu0 %v1295
        %v1659 = vpop.f32.mrf.mxu0
        %v1660 = vadd.f32 %v520, %v1659
        %v1661 = vpop.f32.mrf.mxu0
        %v1662 = vadd.f32 %v524, %v1661
        %v1663 = vpop.f32.mrf.mxu0
        %v1664 = vpop.f32.mrf.mxu0
        %1665 = vdwg.mxu0
        %1666 = vmatprep.subr.bf16.mxu0 0
        %1667 = vmatpush1.bf16.msra.mxu0 0
        %1668 = vmatprep.subr.bf16.mxu0 0
        %1669 = vmatpush1.bf16.msra.mxu0 0
        %1670 = vmatprep.subr.bf16.mxu0 %v1144
        %1671 = vmatpush1.bf16.msra.mxu0 %v1143
        %1672 = vmatprep.subr.bf16.mxu0 %v1120
        %1673 = vmatpush1.bf16.msra.mxu0 %v1119
        %1674 = vmatprep.subr.bf16.mxu0 %v1096
        %1675 = vmatpush1.bf16.msra.mxu0 %v1095
        %1676 = vmatprep.subr.bf16.mxu0 %v1072
        %1677 = vmatpush1.bf16.msra.mxu0 %v1071
        %1678 = vmatprep.subr.bf16.mxu0 %v1048
        %1679 = vmatpush1.bf16.msra.mxu0 %v1047
        %1680 = vmatprep.subr.bf16.mxu0 %v1024
        %1681 = vmatpush1.bf16.msra.mxu0 %v1023
        %1682 = vmatprep.subr.bf16.mxu0 0
        %1683 = vmatpush2.bf16.msra.mxu0 0
        %1684 = vmatprep.subr.bf16.mxu0 0
        %1685 = vmatpush2.bf16.msra.mxu0 0
        %1686 = vmatprep.subr.bf16.mxu0 0
        %1687 = vmatpush2.bf16.msra.mxu0 0
        %1688 = vmatprep.subr.bf16.mxu0 0
        %1689 = vmatpush2.bf16.msra.mxu0 0
        %1690 = vmatprep.subr.bf16.mxu0 0
        %1691 = vmatpush2.bf16.msra.mxu0 0
        %1692 = vmatprep.subr.bf16.mxu0 0
        %1693 = vmatpush2.bf16.msra.mxu0 0
        %1694 = vmatprep.subr.bf16.mxu0 0
        %1695 = vmatpush2.bf16.msra.mxu0 0
        %1696 = vmatprep.subr.bf16.mxu0 0
        %1697 = vmatpush2.bf16.msra.mxu0 0
        %1698 = vmatprep.mubr.bf16.mxu0 0
        %1699 = vmatmul.mubr.bf16.gmra.mxu0 %v1295
        %v1700 = vpop.f32.mrf.mxu0
        %v1701 = vadd.f32 %v528, %v1700
        %v1702 = vpop.f32.mrf.mxu0
        %v1703 = vadd.f32 %v532, %v1702
        %v1704 = vpop.f32.mrf.mxu0
        %v1705 = vpop.f32.mrf.mxu0
        %1706 = vdwg.mxu0
        %1707 = vmatprep.subr.bf16.mxu0 0
        %1708 = vmatpush1.bf16.msra.mxu0 0
        %1709 = vmatprep.subr.bf16.mxu0 0
        %1710 = vmatpush1.bf16.msra.mxu0 0
        %1711 = vmatprep.subr.bf16.mxu0 %v1146
        %1712 = vmatpush1.bf16.msra.mxu0 %v1145
        %1713 = vmatprep.subr.bf16.mxu0 %v1122
        %1714 = vmatpush1.bf16.msra.mxu0 %v1121
        %1715 = vmatprep.subr.bf16.mxu0 %v1098
        %1716 = vmatpush1.bf16.msra.mxu0 %v1097
        %1717 = vmatprep.subr.bf16.mxu0 %v1074
        %1718 = vmatpush1.bf16.msra.mxu0 %v1073
        %1719 = vmatprep.subr.bf16.mxu0 %v1050
        %1720 = vmatpush1.bf16.msra.mxu0 %v1049
        %1721 = vmatprep.subr.bf16.mxu0 %v1026
        %1722 = vmatpush1.bf16.msra.mxu0 %v1025
        %1723 = vmatprep.subr.bf16.mxu0 0
        %1724 = vmatpush2.bf16.msra.mxu0 0
        %1725 = vmatprep.subr.bf16.mxu0 0
        %1726 = vmatpush2.bf16.msra.mxu0 0
        %1727 = vmatprep.subr.bf16.mxu0 0
        %1728 = vmatpush2.bf16.msra.mxu0 0
        %1729 = vmatprep.subr.bf16.mxu0 0
        %1730 = vmatpush2.bf16.msra.mxu0 0
        %1731 = vmatprep.subr.bf16.mxu0 0
        %1732 = vmatpush2.bf16.msra.mxu0 0
        %1733 = vmatprep.subr.bf16.mxu0 0
        %1734 = vmatpush2.bf16.msra.mxu0 0
        %1735 = vmatprep.subr.bf16.mxu0 0
        %1736 = vmatpush2.bf16.msra.mxu0 0
        %1737 = vmatprep.subr.bf16.mxu0 0
        %1738 = vmatpush2.bf16.msra.mxu0 0
        %1739 = vmatprep.mubr.bf16.mxu0 0
        %1740 = vmatmul.mubr.bf16.gmra.mxu0 %v1295
        %v1741 = vpop.f32.mrf.mxu0
        %v1742 = vadd.f32 %v536, %v1741
        %v1743 = vpop.f32.mrf.mxu0
        %v1744 = vadd.f32 %v540, %v1743
        %v1745 = vpop.f32.mrf.mxu0
        %v1746 = vpop.f32.mrf.mxu0
        %1747 = vdwg.mxu0
        %1748 = vmatprep.subr.bf16.mxu0 0
        %1749 = vmatpush1.bf16.msra.mxu0 0
        %1750 = vmatprep.subr.bf16.mxu0 0
        %1751 = vmatpush1.bf16.msra.mxu0 0
        %1752 = vmatprep.subr.bf16.mxu0 %v1148
        %1753 = vmatpush1.bf16.msra.mxu0 %v1147
        %1754 = vmatprep.subr.bf16.mxu0 %v1124
        %1755 = vmatpush1.bf16.msra.mxu0 %v1123
        %1756 = vmatprep.subr.bf16.mxu0 %v1100
        %1757 = vmatpush1.bf16.msra.mxu0 %v1099
        %1758 = vmatprep.subr.bf16.mxu0 %v1076
        %1759 = vmatpush1.bf16.msra.mxu0 %v1075
        %1760 = vmatprep.subr.bf16.mxu0 %v1052
        %1761 = vmatpush1.bf16.msra.mxu0 %v1051
        %1762 = vmatprep.subr.bf16.mxu0 %v1028
        %1763 = vmatpush1.bf16.msra.mxu0 %v1027
        %1764 = vmatprep.subr.bf16.mxu0 0
        %1765 = vmatpush2.bf16.msra.mxu0 0
        %1766 = vmatprep.subr.bf16.mxu0 0
        %1767 = vmatpush2.bf16.msra.mxu0 0
        %1768 = vmatprep.subr.bf16.mxu0 0
        %1769 = vmatpush2.bf16.msra.mxu0 0
        %1770 = vmatprep.subr.bf16.mxu0 0
        %1771 = vmatpush2.bf16.msra.mxu0 0
        %1772 = vmatprep.subr.bf16.mxu0 0
        %1773 = vmatpush2.bf16.msra.mxu0 0
        %1774 = vmatprep.subr.bf16.mxu0 0
        %1775 = vmatpush2.bf16.msra.mxu0 0
        %1776 = vmatprep.subr.bf16.mxu0 0
        %1777 = vmatpush2.bf16.msra.mxu0 0
        %1778 = vmatprep.subr.bf16.mxu0 0
        %1779 = vmatpush2.bf16.msra.mxu0 0
        %1780 = vmatprep.mubr.bf16.mxu0 0
        %1781 = vmatmul.mubr.bf16.gmra.mxu0 %v1295
        %v1782 = vpop.f32.mrf.mxu0
        %v1783 = vadd.f32 %v544, %v1782
        %v1784 = vpop.f32.mrf.mxu0
        %v1785 = vadd.f32 %v548, %v1784
        %v1786 = vpop.f32.mrf.mxu0
        %v1787 = vpop.f32.mrf.mxu0
        %1788 = vdwg.mxu0
        %v1789 = vld [vmem:[%s262] sm:$0x1]
        %v1791 = vlaneseq
        %v1792 = vshrl.u32 %v1791, 7
        %v1793 = vsub.s32 0, %v1792
        %v1794 = vrot.slane %v1789, %v1793
        %v1796 = vpack.c.bf16 %v1332, %v1332
        %v1797 = vpack.c.bf16 %v1496, %v1496
        %v1798 = vpack.c.bf16 %v1660, %v1660
        %1799 = vmatprep.subr.bf16.mxu0 0
        %1800 = vmatpush1.bf16.xpose.msra.mxu0 0
        %1801 = vmatprep.subr.bf16.mxu0 0
        %1802 = vmatpush1.bf16.xpose.msra.mxu0 0
        %1803 = vmatprep.subr.bf16.mxu0 0
        %1804 = vmatpush1.bf16.xpose.msra.mxu0 0
        %1805 = vmatprep.subr.bf16.mxu0 0
        %1806 = vmatpush1.bf16.xpose.msra.mxu0 0
        %1807 = vmatprep.subr.bf16.mxu0 0
        %1808 = vmatpush1.bf16.xpose.msra.mxu0 0
        %1809 = vmatprep.subr.bf16.mxu0 0
        %1810 = vmatpush1.bf16.xpose.msra.mxu0 0
        %1811 = vmatprep.subr.bf16.mxu0 0
        %1812 = vmatpush1.bf16.xpose.msra.mxu0 0
        %1813 = vmatprep.subr.bf16.mxu0 0
        %1814 = vmatpush1.bf16.xpose.msra.mxu0 %v1797
        %1815 = vmatprep.subr.bf16.mxu0 0
        %1816 = vmatpush2.bf16.xpose.msra.mxu0 0
        %1817 = vmatprep.subr.bf16.mxu0 0
        %1818 = vmatpush2.bf16.xpose.msra.mxu0 0
        %1819 = vmatprep.subr.bf16.mxu0 0
        %1820 = vmatpush2.bf16.xpose.msra.mxu0 0
        %1821 = vmatprep.subr.bf16.mxu0 0
        %1822 = vmatpush2.bf16.xpose.msra.mxu0 0
        %1823 = vmatprep.subr.bf16.mxu0 0
        %1824 = vmatpush2.bf16.xpose.msra.mxu0 0
        %1825 = vmatprep.subr.bf16.mxu0 0
        %1826 = vmatpush2.bf16.xpose.msra.mxu0 0
        %1827 = vmatprep.subr.bf16.mxu0 0
        %1828 = vmatpush2.bf16.xpose.msra.mxu0 0
        %1829 = vmatprep.subr.bf16.mxu0 0
        %1830 = vmatpush2.bf16.xpose.msra.mxu0 0
        %1831 = vmatprep.mubr.bf16.mxu0 0
        %1832 = vmatmul.mubr.bf16.gmra.mxu0 %v1796
        %v1833 = vpop.f32.mrf.mxu0
        %v1834 = vadd.f32 %v1794, %v1833
        %v1835 = vpop.f32.mrf.mxu0
        %v1836 = vpop.f32.mrf.mxu0
        %v1837 = vpop.f32.mrf.mxu0
        %1838 = vdwg.mxu0
        %vm1839 = vcmask 64512
        %v1840 = vsel %vm1839, %v1834, -inf
        %1841 = vmax.xlane.f32.xlu0 %v1840
        %v1842 = vpop.xlane.xlu0 %1841
        %v1843 = vsub.f32 %v1834, %v1842
        %v1844 = vmul.f32 %v1843, 1.442695
        %v1845 = vpow.pop %v1844
        %v1846 = vsel %vm1839, %v1845, 0.0
        %1847 = vadd.xlane.f32.xlu0 %v1846
        %v1848 = vpop.xlane.xlu0 %1847
        %v1849 = vrcp.pop %v1848
        %v1850 = vmul.f32 %v1845, %v1849
        %v1851 = vpack.c.bf16 %v1850, %v1850
        %v1852 = vpack.c.bf16 %v1334, %v1334
        %v1853 = vpack.c.bf16 %v1498, %v1498
        %v1854 = vpack.c.bf16 %v1662, %v1662
        %1855 = vmatprep.subr.bf16.mxu0 0
        %1856 = vmatpush1.bf16.xpose.msra.mxu0 0
        %1857 = vmatprep.subr.bf16.mxu0 0
        %1858 = vmatpush1.bf16.xpose.msra.mxu0 0
        %1859 = vmatprep.subr.bf16.mxu0 0
        %1860 = vmatpush1.bf16.xpose.msra.mxu0 0
        %1861 = vmatprep.subr.bf16.mxu0 0
        %1862 = vmatpush1.bf16.xpose.msra.mxu0 0
        %1863 = vmatprep.subr.bf16.mxu0 0
        %1864 = vmatpush1.bf16.xpose.msra.mxu0 0
        %1865 = vmatprep.subr.bf16.mxu0 0
        %1866 = vmatpush1.bf16.xpose.msra.mxu0 0
        %1867 = vmatprep.subr.bf16.mxu0 0
        %1868 = vmatpush1.bf16.xpose.msra.mxu0 0
        %1869 = vmatprep.subr.bf16.mxu0 0
        %1870 = vmatpush1.bf16.xpose.msra.mxu0 %v1853
        %1871 = vmatprep.subr.bf16.mxu0 0
        %1872 = vmatpush2.bf16.xpose.msra.mxu0 0
        %1873 = vmatprep.subr.bf16.mxu0 0
        %1874 = vmatpush2.bf16.xpose.msra.mxu0 0
        %1875 = vmatprep.subr.bf16.mxu0 0
        %1876 = vmatpush2.bf16.xpose.msra.mxu0 0
        %1877 = vmatprep.subr.bf16.mxu0 0
        %1878 = vmatpush2.bf16.xpose.msra.mxu0 0
        %1879 = vmatprep.subr.bf16.mxu0 0
        %1880 = vmatpush2.bf16.xpose.msra.mxu0 0
        %1881 = vmatprep.subr.bf16.mxu0 0
        %1882 = vmatpush2.bf16.xpose.msra.mxu0 0
        %1883 = vmatprep.subr.bf16.mxu0 0
        %1884 = vmatpush2.bf16.xpose.msra.mxu0 0
        %1885 = vmatprep.subr.bf16.mxu0 0
        %1886 = vmatpush2.bf16.xpose.msra.mxu0 0
        %1887 = vmatprep.mubr.bf16.mxu0 0
        %1888 = vmatmul.mubr.bf16.gmra.mxu0 %v1852
        %v1889 = vpop.f32.mrf.mxu0
        %v1890 = vadd.f32 %v1794, %v1889
        %v1891 = vpop.f32.mrf.mxu0
        %v1892 = vpop.f32.mrf.mxu0
        %v1893 = vpop.f32.mrf.mxu0
        %1894 = vdwg.mxu0
        %v1895 = vsel %vm1839, %v1890, -inf
        %1896 = vmax.xlane.f32.xlu0 %v1895
        %v1897 = vpop.xlane.xlu0 %1896
        %v1898 = vsub.f32 %v1890, %v1897
        %v1899 = vmul.f32 %v1898, 1.442695
        %v1900 = vpow.pop %v1899
        %v1901 = vsel %vm1839, %v1900, 0.0
        %1902 = vadd.xlane.f32.xlu0 %v1901
        %v1903 = vpop.xlane.xlu0 %1902
        %v1904 = vrcp.pop %v1903
        %v1905 = vmul.f32 %v1900, %v1904
        %v1906 = vpack.c.bf16 %v1905, %v1905
        %v1908 = vsel %vm1839, %v1906, 0
        %vm1910 = vcmask 1043456
        %v1912 = vsel %vm1910, %v1854, 0
        %1914 = vmatprep.subr.bf16.mxu0 0
        %1915 = vmatpush1.bf16.msra.mxu0 0
        %1916 = vmatprep.subr.bf16.mxu0 0
        %1917 = vmatpush1.bf16.msra.mxu0 0
        %1918 = vmatprep.subr.bf16.mxu0 0
        %1919 = vmatpush1.bf16.msra.mxu0 0
        %1920 = vmatprep.subr.bf16.mxu0 0
        %1921 = vmatpush1.bf16.msra.mxu0 0
        %1922 = vmatprep.subr.bf16.mxu0 0
        %1923 = vmatpush1.bf16.msra.mxu0 0
        %1924 = vmatprep.subr.bf16.mxu0 0
        %1925 = vmatpush1.bf16.msra.mxu0 0
        %1926 = vmatprep.subr.bf16.mxu0 0
        %1927 = vmatpush1.bf16.msra.mxu0 0
        %1928 = vmatprep.subr.bf16.mxu0 0
        %1929 = vmatpush1.bf16.msra.mxu0 %v1912
        %1930 = vmatprep.subr.bf16.mxu0 0
        %1931 = vmatpush2.bf16.msra.mxu0 0
        %1932 = vmatprep.subr.bf16.mxu0 0
        %1933 = vmatpush2.bf16.msra.mxu0 0
        %1934 = vmatprep.subr.bf16.mxu0 0
        %1935 = vmatpush2.bf16.msra.mxu0 0
        %1936 = vmatprep.subr.bf16.mxu0 0
        %1937 = vmatpush2.bf16.msra.mxu0 0
        %1938 = vmatprep.subr.bf16.mxu0 0
        %1939 = vmatpush2.bf16.msra.mxu0 0
        %1940 = vmatprep.subr.bf16.mxu0 0
        %1941 = vmatpush2.bf16.msra.mxu0 0
        %1942 = vmatprep.subr.bf16.mxu0 0
        %1943 = vmatpush2.bf16.msra.mxu0 0
        %1944 = vmatprep.subr.bf16.mxu0 0
        %1945 = vmatpush2.bf16.msra.mxu0 0
        %1946 = vmatprep.mubr.bf16.mxu0 0
        %1947 = vmatmul.mubr.bf16.gmra.mxu0 %v1908
        %v1948 = vpop.f32.mrf.mxu0
        %v1949 = vadd.f32 0.0, %v1948
        %v1950 = vpop.f32.mrf.mxu0
        %v1951 = vpop.f32.mrf.mxu0
        %v1952 = vpop.f32.mrf.mxu0
        %1953 = vdwg.mxu0
        %v1955 = vsel %vm1839, %v1851, 0
        %v1958 = vsel %vm1910, %v1798, 0
        %1960 = vmatprep.subr.bf16.mxu0 0
        %1961 = vmatpush1.bf16.msra.mxu0 0
        %1962 = vmatprep.subr.bf16.mxu0 0
        %1963 = vmatpush1.bf16.msra.mxu0 0
        %1964 = vmatprep.subr.bf16.mxu0 0
        %1965 = vmatpush1.bf16.msra.mxu0 0
        %1966 = vmatprep.subr.bf16.mxu0 0
        %1967 = vmatpush1.bf16.msra.mxu0 0
        %1968 = vmatprep.subr.bf16.mxu0 0
        %1969 = vmatpush1.bf16.msra.mxu0 0
        %1970 = vmatprep.subr.bf16.mxu0 0
        %1971 = vmatpush1.bf16.msra.mxu0 0
        %1972 = vmatprep.subr.bf16.mxu0 0
        %1973 = vmatpush1.bf16.msra.mxu0 0
        %1974 = vmatprep.subr.bf16.mxu0 0
        %1975 = vmatpush1.bf16.msra.mxu0 %v1958
        %1976 = vmatprep.subr.bf16.mxu0 0
        %1977 = vmatpush2.bf16.msra.mxu0 0
        %1978 = vmatprep.subr.bf16.mxu0 0
        %1979 = vmatpush2.bf16.msra.mxu0 0
        %1980 = vmatprep.subr.bf16.mxu0 0
        %1981 = vmatpush2.bf16.msra.mxu0 0
        %1982 = vmatprep.subr.bf16.mxu0 0
        %1983 = vmatpush2.bf16.msra.mxu0 0
        %1984 = vmatprep.subr.bf16.mxu0 0
        %1985 = vmatpush2.bf16.msra.mxu0 0
        %1986 = vmatprep.subr.bf16.mxu0 0
        %1987 = vmatpush2.bf16.msra.mxu0 0
        %1988 = vmatprep.subr.bf16.mxu0 0
        %1989 = vmatpush2.bf16.msra.mxu0 0
        %1990 = vmatprep.subr.bf16.mxu0 0
        %1991 = vmatpush2.bf16.msra.mxu0 0
        %1992 = vmatprep.mubr.bf16.mxu0 0
        %1993 = vmatmul.mubr.bf16.gmra.mxu0 %v1955
        %v1994 = vpop.f32.mrf.mxu0
        %v1995 = vadd.f32 %v1949, %v1994
        %v1996 = vpop.f32.mrf.mxu0
        %v1997 = vpop.f32.mrf.mxu0
        %v1998 = vpop.f32.mrf.mxu0
        %1999 = vdwg.mxu0
        %v2000 = vpack.c.bf16 %v1373, %v1373
        %v2001 = vpack.c.bf16 %v1537, %v1537
        %v2002 = vpack.c.bf16 %v1701, %v1701
        %2003 = vmatprep.subr.bf16.mxu0 0
        %2004 = vmatpush1.bf16.xpose.msra.mxu0 0
        %2005 = vmatprep.subr.bf16.mxu0 0
        %2006 = vmatpush1.bf16.xpose.msra.mxu0 0
        %2007 = vmatprep.subr.bf16.mxu0 0
        %2008 = vmatpush1.bf16.xpose.msra.mxu0 0
        %2009 = vmatprep.subr.bf16.mxu0 0
        %2010 = vmatpush1.bf16.xpose.msra.mxu0 0
        %2011 = vmatprep.subr.bf16.mxu0 0
        %2012 = vmatpush1.bf16.xpose.msra.mxu0 0
        %2013 = vmatprep.subr.bf16.mxu0 0
        %2014 = vmatpush1.bf16.xpose.msra.mxu0 0
        %2015 = vmatprep.subr.bf16.mxu0 0
        %2016 = vmatpush1.bf16.xpose.msra.mxu0 0
        %2017 = vmatprep.subr.bf16.mxu0 0
        %2018 = vmatpush1.bf16.xpose.msra.mxu0 %v2001
        %2019 = vmatprep.subr.bf16.mxu0 0
        %2020 = vmatpush2.bf16.xpose.msra.mxu0 0
        %2021 = vmatprep.subr.bf16.mxu0 0
        %2022 = vmatpush2.bf16.xpose.msra.mxu0 0
        %2023 = vmatprep.subr.bf16.mxu0 0
        %2024 = vmatpush2.bf16.xpose.msra.mxu0 0
        %2025 = vmatprep.subr.bf16.mxu0 0
        %2026 = vmatpush2.bf16.xpose.msra.mxu0 0
        %2027 = vmatprep.subr.bf16.mxu0 0
        %2028 = vmatpush2.bf16.xpose.msra.mxu0 0
        %2029 = vmatprep.subr.bf16.mxu0 0
        %2030 = vmatpush2.bf16.xpose.msra.mxu0 0
        %2031 = vmatprep.subr.bf16.mxu0 0
        %2032 = vmatpush2.bf16.xpose.msra.mxu0 0
        %2033 = vmatprep.subr.bf16.mxu0 0
        %2034 = vmatpush2.bf16.xpose.msra.mxu0 0
        %2035 = vmatprep.mubr.bf16.mxu0 0
        %2036 = vmatmul.mubr.bf16.gmra.mxu0 %v2000
        %v2037 = vpop.f32.mrf.mxu0
        %v2038 = vadd.f32 %v1794, %v2037
        %v2039 = vpop.f32.mrf.mxu0
        %v2040 = vpop.f32.mrf.mxu0
        %v2041 = vpop.f32.mrf.mxu0
        %2042 = vdwg.mxu0
        %v2043 = vsel %vm1839, %v2038, -inf
        %2044 = vmax.xlane.f32.xlu0 %v2043
        %v2045 = vpop.xlane.xlu0 %2044
        %v2046 = vsub.f32 %v2038, %v2045
        %v2047 = vmul.f32 %v2046, 1.442695
        %v2048 = vpow.pop %v2047
        %v2049 = vsel %vm1839, %v2048, 0.0
        %2050 = vadd.xlane.f32.xlu0 %v2049
        %v2051 = vpop.xlane.xlu0 %2050
        %v2052 = vrcp.pop %v2051
        %v2053 = vmul.f32 %v2048, %v2052
        %v2054 = vpack.c.bf16 %v2053, %v2053
        %v2056 = vsel %vm1839, %v2054, 0
        %v2059 = vsel %vm1910, %v2002, 0
        %2061 = vmatprep.subr.bf16.mxu0 0
        %2062 = vmatpush1.bf16.msra.mxu0 0
        %2063 = vmatprep.subr.bf16.mxu0 0
        %2064 = vmatpush1.bf16.msra.mxu0 0
        %2065 = vmatprep.subr.bf16.mxu0 0
        %2066 = vmatpush1.bf16.msra.mxu0 0
        %2067 = vmatprep.subr.bf16.mxu0 0
        %2068 = vmatpush1.bf16.msra.mxu0 0
        %2069 = vmatprep.subr.bf16.mxu0 0
        %2070 = vmatpush1.bf16.msra.mxu0 0
        %2071 = vmatprep.subr.bf16.mxu0 0
        %2072 = vmatpush1.bf16.msra.mxu0 0
        %2073 = vmatprep.subr.bf16.mxu0 0
        %2074 = vmatpush1.bf16.msra.mxu0 0
        %2075 = vmatprep.subr.bf16.mxu0 0
        %2076 = vmatpush1.bf16.msra.mxu0 %v2059
        %2077 = vmatprep.subr.bf16.mxu0 0
        %2078 = vmatpush2.bf16.msra.mxu0 0
        %2079 = vmatprep.subr.bf16.mxu0 0
        %2080 = vmatpush2.bf16.msra.mxu0 0
        %2081 = vmatprep.subr.bf16.mxu0 0
        %2082 = vmatpush2.bf16.msra.mxu0 0
        %2083 = vmatprep.subr.bf16.mxu0 0
        %2084 = vmatpush2.bf16.msra.mxu0 0
        %2085 = vmatprep.subr.bf16.mxu0 0
        %2086 = vmatpush2.bf16.msra.mxu0 0
        %2087 = vmatprep.subr.bf16.mxu0 0
        %2088 = vmatpush2.bf16.msra.mxu0 0
        %2089 = vmatprep.subr.bf16.mxu0 0
        %2090 = vmatpush2.bf16.msra.mxu0 0
        %2091 = vmatprep.subr.bf16.mxu0 0
        %2092 = vmatpush2.bf16.msra.mxu0 0
        %2093 = vmatprep.mubr.bf16.mxu0 0
        %2094 = vmatmul.mubr.bf16.gmra.mxu0 %v2056
        %v2095 = vpop.f32.mrf.mxu0
        %v2096 = vadd.f32 0.0, %v2095
        %v2097 = vpop.f32.mrf.mxu0
        %v2098 = vpop.f32.mrf.mxu0
        %v2099 = vpop.f32.mrf.mxu0
        %2100 = vdwg.mxu0
        %v2101 = vadd.f32 %v1995, %v2096
        %v2102 = vpack.c.bf16 %v1375, %v1375
        %v2103 = vpack.c.bf16 %v1539, %v1539
        %v2104 = vpack.c.bf16 %v1703, %v1703
        %2105 = vmatprep.subr.bf16.mxu0 0
        %2106 = vmatpush1.bf16.xpose.msra.mxu0 0
        %2107 = vmatprep.subr.bf16.mxu0 0
        %2108 = vmatpush1.bf16.xpose.msra.mxu0 0
        %2109 = vmatprep.subr.bf16.mxu0 0
        %2110 = vmatpush1.bf16.xpose.msra.mxu0 0
        %2111 = vmatprep.subr.bf16.mxu0 0
        %2112 = vmatpush1.bf16.xpose.msra.mxu0 0
        %2113 = vmatprep.subr.bf16.mxu0 0
        %2114 = vmatpush1.bf16.xpose.msra.mxu0 0
        %2115 = vmatprep.subr.bf16.mxu0 0
        %2116 = vmatpush1.bf16.xpose.msra.mxu0 0
        %2117 = vmatprep.subr.bf16.mxu0 0
        %2118 = vmatpush1.bf16.xpose.msra.mxu0 0
        %2119 = vmatprep.subr.bf16.mxu0 0
        %2120 = vmatpush1.bf16.xpose.msra.mxu0 %v2103
        %2121 = vmatprep.subr.bf16.mxu0 0
        %2122 = vmatpush2.bf16.xpose.msra.mxu0 0
        %2123 = vmatprep.subr.bf16.mxu0 0
        %2124 = vmatpush2.bf16.xpose.msra.mxu0 0
        %2125 = vmatprep.subr.bf16.mxu0 0
        %2126 = vmatpush2.bf16.xpose.msra.mxu0 0
        %2127 = vmatprep.subr.bf16.mxu0 0
        %2128 = vmatpush2.bf16.xpose.msra.mxu0 0
        %2129 = vmatprep.subr.bf16.mxu0 0
        %2130 = vmatpush2.bf16.xpose.msra.mxu0 0
        %2131 = vmatprep.subr.bf16.mxu0 0
        %2132 = vmatpush2.bf16.xpose.msra.mxu0 0
        %2133 = vmatprep.subr.bf16.mxu0 0
        %2134 = vmatpush2.bf16.xpose.msra.mxu0 0
        %2135 = vmatprep.subr.bf16.mxu0 0
        %2136 = vmatpush2.bf16.xpose.msra.mxu0 0
        %2137 = vmatprep.mubr.bf16.mxu0 0
        %2138 = vmatmul.mubr.bf16.gmra.mxu0 %v2102
        %v2139 = vpop.f32.mrf.mxu0
        %v2140 = vadd.f32 %v1794, %v2139
        %v2141 = vpop.f32.mrf.mxu0
        %v2142 = vpop.f32.mrf.mxu0
        %v2143 = vpop.f32.mrf.mxu0
        %2144 = vdwg.mxu0
        %v2145 = vsel %vm1839, %v2140, -inf
        %2146 = vmax.xlane.f32.xlu0 %v2145
        %v2147 = vpop.xlane.xlu0 %2146
        %v2148 = vsub.f32 %v2140, %v2147
        %v2149 = vmul.f32 %v2148, 1.442695
        %v2150 = vpow.pop %v2149
        %v2151 = vsel %vm1839, %v2150, 0.0
        %2152 = vadd.xlane.f32.xlu0 %v2151
        %v2153 = vpop.xlane.xlu0 %2152
        %v2154 = vrcp.pop %v2153
        %v2155 = vmul.f32 %v2150, %v2154
        %v2156 = vpack.c.bf16 %v2155, %v2155
        %v2158 = vsel %vm1839, %v2156, 0
        %v2161 = vsel %vm1910, %v2104, 0
        %2163 = vmatprep.subr.bf16.mxu0 0
        %2164 = vmatpush1.bf16.msra.mxu0 0
        %2165 = vmatprep.subr.bf16.mxu0 0
        %2166 = vmatpush1.bf16.msra.mxu0 0
        %2167 = vmatprep.subr.bf16.mxu0 0
        %2168 = vmatpush1.bf16.msra.mxu0 0
        %2169 = vmatprep.subr.bf16.mxu0 0
        %2170 = vmatpush1.bf16.msra.mxu0 0
        %2171 = vmatprep.subr.bf16.mxu0 0
        %2172 = vmatpush1.bf16.msra.mxu0 0
        %2173 = vmatprep.subr.bf16.mxu0 0
        %2174 = vmatpush1.bf16.msra.mxu0 0
        %2175 = vmatprep.subr.bf16.mxu0 0
        %2176 = vmatpush1.bf16.msra.mxu0 0
        %2177 = vmatprep.subr.bf16.mxu0 0
        %2178 = vmatpush1.bf16.msra.mxu0 %v2161
        %2179 = vmatprep.subr.bf16.mxu0 0
        %2180 = vmatpush2.bf16.msra.mxu0 0
        %2181 = vmatprep.subr.bf16.mxu0 0
        %2182 = vmatpush2.bf16.msra.mxu0 0
        %2183 = vmatprep.subr.bf16.mxu0 0
        %2184 = vmatpush2.bf16.msra.mxu0 0
        %2185 = vmatprep.subr.bf16.mxu0 0
        %2186 = vmatpush2.bf16.msra.mxu0 0
        %2187 = vmatprep.subr.bf16.mxu0 0
        %2188 = vmatpush2.bf16.msra.mxu0 0
        %2189 = vmatprep.subr.bf16.mxu0 0
        %2190 = vmatpush2.bf16.msra.mxu0 0
        %2191 = vmatprep.subr.bf16.mxu0 0
        %2192 = vmatpush2.bf16.msra.mxu0 0
        %2193 = vmatprep.subr.bf16.mxu0 0
        %2194 = vmatpush2.bf16.msra.mxu0 0
        %2195 = vmatprep.mubr.bf16.mxu0 0
        %2196 = vmatmul.mubr.bf16.gmra.mxu0 %v2158
        %v2197 = vpop.f32.mrf.mxu0
        %v2198 = vadd.f32 0.0, %v2197
        %v2199 = vpop.f32.mrf.mxu0
        %v2200 = vpop.f32.mrf.mxu0
        %v2201 = vpop.f32.mrf.mxu0
        %2202 = vdwg.mxu0
        %v2203 = vadd.f32 %v2101, %v2198
        %v2204 = vpack.c.bf16 %v1414, %v1414
        %v2205 = vpack.c.bf16 %v1578, %v1578
        %v2206 = vpack.c.bf16 %v1742, %v1742
        %2207 = vmatprep.subr.bf16.mxu0 0
        %2208 = vmatpush1.bf16.xpose.msra.mxu0 0
        %2209 = vmatprep.subr.bf16.mxu0 0
        %2210 = vmatpush1.bf16.xpose.msra.mxu0 0
        %2211 = vmatprep.subr.bf16.mxu0 0
        %2212 = vmatpush1.bf16.xpose.msra.mxu0 0
        %2213 = vmatprep.subr.bf16.mxu0 0
        %2214 = vmatpush1.bf16.xpose.msra.mxu0 0
        %2215 = vmatprep.subr.bf16.mxu0 0
        %2216 = vmatpush1.bf16.xpose.msra.mxu0 0
        %2217 = vmatprep.subr.bf16.mxu0 0
        %2218 = vmatpush1.bf16.xpose.msra.mxu0 0
        %2219 = vmatprep.subr.bf16.mxu0 0
        %2220 = vmatpush1.bf16.xpose.msra.mxu0 0
        %2221 = vmatprep.subr.bf16.mxu0 0
        %2222 = vmatpush1.bf16.xpose.msra.mxu0 %v2205
        %2223 = vmatprep.subr.bf16.mxu0 0
        %2224 = vmatpush2.bf16.xpose.msra.mxu0 0
        %2225 = vmatprep.subr.bf16.mxu0 0
        %2226 = vmatpush2.bf16.xpose.msra.mxu0 0
        %2227 = vmatprep.subr.bf16.mxu0 0
        %2228 = vmatpush2.bf16.xpose.msra.mxu0 0
        %2229 = vmatprep.subr.bf16.mxu0 0
        %2230 = vmatpush2.bf16.xpose.msra.mxu0 0
        %2231 = vmatprep.subr.bf16.mxu0 0
        %2232 = vmatpush2.bf16.xpose.msra.mxu0 0
        %2233 = vmatprep.subr.bf16.mxu0 0
        %2234 = vmatpush2.bf16.xpose.msra.mxu0 0
        %2235 = vmatprep.subr.bf16.mxu0 0
        %2236 = vmatpush2.bf16.xpose.msra.mxu0 0
        %2237 = vmatprep.subr.bf16.mxu0 0
        %2238 = vmatpush2.bf16.xpose.msra.mxu0 0
        %2239 = vmatprep.mubr.bf16.mxu0 0
        %2240 = vmatmul.mubr.bf16.gmra.mxu0 %v2204
        %v2241 = vpop.f32.mrf.mxu0
        %v2242 = vadd.f32 %v1794, %v2241
        %v2243 = vpop.f32.mrf.mxu0
        %v2244 = vpop.f32.mrf.mxu0
        %v2245 = vpop.f32.mrf.mxu0
        %2246 = vdwg.mxu0
        %v2247 = vsel %vm1839, %v2242, -inf
        %2248 = vmax.xlane.f32.xlu0 %v2247
        %v2249 = vpop.xlane.xlu0 %2248
        %v2250 = vsub.f32 %v2242, %v2249
        %v2251 = vmul.f32 %v2250, 1.442695
        %v2252 = vpow.pop %v2251
        %v2253 = vsel %vm1839, %v2252, 0.0
        %2254 = vadd.xlane.f32.xlu0 %v2253
        %v2255 = vpop.xlane.xlu0 %2254
        %v2256 = vrcp.pop %v2255
        %v2257 = vmul.f32 %v2252, %v2256
        %v2258 = vpack.c.bf16 %v2257, %v2257
        %v2260 = vsel %vm1839, %v2258, 0
        %v2263 = vsel %vm1910, %v2206, 0
        %2265 = vmatprep.subr.bf16.mxu0 0
        %2266 = vmatpush1.bf16.msra.mxu0 0
        %2267 = vmatprep.subr.bf16.mxu0 0
        %2268 = vmatpush1.bf16.msra.mxu0 0
        %2269 = vmatprep.subr.bf16.mxu0 0
        %2270 = vmatpush1.bf16.msra.mxu0 0
        %2271 = vmatprep.subr.bf16.mxu0 0
        %2272 = vmatpush1.bf16.msra.mxu0 0
        %2273 = vmatprep.subr.bf16.mxu0 0
        %2274 = vmatpush1.bf16.msra.mxu0 0
        %2275 = vmatprep.subr.bf16.mxu0 0
        %2276 = vmatpush1.bf16.msra.mxu0 0
        %2277 = vmatprep.subr.bf16.mxu0 0
        %2278 = vmatpush1.bf16.msra.mxu0 0
        %2279 = vmatprep.subr.bf16.mxu0 0
        %2280 = vmatpush1.bf16.msra.mxu0 %v2263
        %2281 = vmatprep.subr.bf16.mxu0 0
        %2282 = vmatpush2.bf16.msra.mxu0 0
        %2283 = vmatprep.subr.bf16.mxu0 0
        %2284 = vmatpush2.bf16.msra.mxu0 0
        %2285 = vmatprep.subr.bf16.mxu0 0
        %2286 = vmatpush2.bf16.msra.mxu0 0
        %2287 = vmatprep.subr.bf16.mxu0 0
        %2288 = vmatpush2.bf16.msra.mxu0 0
        %2289 = vmatprep.subr.bf16.mxu0 0
        %2290 = vmatpush2.bf16.msra.mxu0 0
        %2291 = vmatprep.subr.bf16.mxu0 0
        %2292 = vmatpush2.bf16.msra.mxu0 0
        %2293 = vmatprep.subr.bf16.mxu0 0
        %2294 = vmatpush2.bf16.msra.mxu0 0
        %2295 = vmatprep.subr.bf16.mxu0 0
        %2296 = vmatpush2.bf16.msra.mxu0 0
        %2297 = vmatprep.mubr.bf16.mxu0 0
        %2298 = vmatmul.mubr.bf16.gmra.mxu0 %v2260
        %v2299 = vpop.f32.mrf.mxu0
        %v2300 = vadd.f32 0.0, %v2299
        %v2301 = vpop.f32.mrf.mxu0
        %v2302 = vpop.f32.mrf.mxu0
        %v2303 = vpop.f32.mrf.mxu0
        %2304 = vdwg.mxu0
        %v2305 = vadd.f32 %v2203, %v2300
        %v2306 = vpack.c.bf16 %v1416, %v1416
        %v2307 = vpack.c.bf16 %v1580, %v1580
        %v2308 = vpack.c.bf16 %v1744, %v1744
        %2309 = vmatprep.subr.bf16.mxu0 0
        %2310 = vmatpush1.bf16.xpose.msra.mxu0 0
        %2311 = vmatprep.subr.bf16.mxu0 0
        %2312 = vmatpush1.bf16.xpose.msra.mxu0 0
        %2313 = vmatprep.subr.bf16.mxu0 0
        %2314 = vmatpush1.bf16.xpose.msra.mxu0 0
        %2315 = vmatprep.subr.bf16.mxu0 0
        %2316 = vmatpush1.bf16.xpose.msra.mxu0 0
        %2317 = vmatprep.subr.bf16.mxu0 0
        %2318 = vmatpush1.bf16.xpose.msra.mxu0 0
        %2319 = vmatprep.subr.bf16.mxu0 0
        %2320 = vmatpush1.bf16.xpose.msra.mxu0 0
        %2321 = vmatprep.subr.bf16.mxu0 0
        %2322 = vmatpush1.bf16.xpose.msra.mxu0 0
        %2323 = vmatprep.subr.bf16.mxu0 0
        %2324 = vmatpush1.bf16.xpose.msra.mxu0 %v2307
        %2325 = vmatprep.subr.bf16.mxu0 0
        %2326 = vmatpush2.bf16.xpose.msra.mxu0 0
        %2327 = vmatprep.subr.bf16.mxu0 0
        %2328 = vmatpush2.bf16.xpose.msra.mxu0 0
        %2329 = vmatprep.subr.bf16.mxu0 0
        %2330 = vmatpush2.bf16.xpose.msra.mxu0 0
        %2331 = vmatprep.subr.bf16.mxu0 0
        %2332 = vmatpush2.bf16.xpose.msra.mxu0 0
        %2333 = vmatprep.subr.bf16.mxu0 0
        %2334 = vmatpush2.bf16.xpose.msra.mxu0 0
        %2335 = vmatprep.subr.bf16.mxu0 0
        %2336 = vmatpush2.bf16.xpose.msra.mxu0 0
        %2337 = vmatprep.subr.bf16.mxu0 0
        %2338 = vmatpush2.bf16.xpose.msra.mxu0 0
        %2339 = vmatprep.subr.bf16.mxu0 0
        %2340 = vmatpush2.bf16.xpose.msra.mxu0 0
        %2341 = vmatprep.mubr.bf16.mxu0 0
        %2342 = vmatmul.mubr.bf16.gmra.mxu0 %v2306
        %v2343 = vpop.f32.mrf.mxu0
        %v2344 = vadd.f32 %v1794, %v2343
        %v2345 = vpop.f32.mrf.mxu0
        %v2346 = vpop.f32.mrf.mxu0
        %v2347 = vpop.f32.mrf.mxu0
        %2348 = vdwg.mxu0
        %v2349 = vsel %vm1839, %v2344, -inf
        %2350 = vmax.xlane.f32.xlu0 %v2349
        %v2351 = vpop.xlane.xlu0 %2350
        %v2352 = vsub.f32 %v2344, %v2351
        %v2353 = vmul.f32 %v2352, 1.442695
        %v2354 = vpow.pop %v2353
        %v2355 = vsel %vm1839, %v2354, 0.0
        %2356 = vadd.xlane.f32.xlu0 %v2355
        %v2357 = vpop.xlane.xlu0 %2356
        %v2358 = vrcp.pop %v2357
        %v2359 = vmul.f32 %v2354, %v2358
        %v2360 = vpack.c.bf16 %v2359, %v2359
        %v2362 = vsel %vm1839, %v2360, 0
        %v2365 = vsel %vm1910, %v2308, 0
        %2367 = vmatprep.subr.bf16.mxu0 0
        %2368 = vmatpush1.bf16.msra.mxu0 0
        %2369 = vmatprep.subr.bf16.mxu0 0
        %2370 = vmatpush1.bf16.msra.mxu0 0
        %2371 = vmatprep.subr.bf16.mxu0 0
        %2372 = vmatpush1.bf16.msra.mxu0 0
        %2373 = vmatprep.subr.bf16.mxu0 0
        %2374 = vmatpush1.bf16.msra.mxu0 0
        %2375 = vmatprep.subr.bf16.mxu0 0
        %2376 = vmatpush1.bf16.msra.mxu0 0
        %2377 = vmatprep.subr.bf16.mxu0 0
        %2378 = vmatpush1.bf16.msra.mxu0 0
        %2379 = vmatprep.subr.bf16.mxu0 0
        %2380 = vmatpush1.bf16.msra.mxu0 0
        %2381 = vmatprep.subr.bf16.mxu0 0
        %2382 = vmatpush1.bf16.msra.mxu0 %v2365
        %2383 = vmatprep.subr.bf16.mxu0 0
        %2384 = vmatpush2.bf16.msra.mxu0 0
        %2385 = vmatprep.subr.bf16.mxu0 0
        %2386 = vmatpush2.bf16.msra.mxu0 0
        %2387 = vmatprep.subr.bf16.mxu0 0
        %2388 = vmatpush2.bf16.msra.mxu0 0
        %2389 = vmatprep.subr.bf16.mxu0 0
        %2390 = vmatpush2.bf16.msra.mxu0 0
        %2391 = vmatprep.subr.bf16.mxu0 0
        %2392 = vmatpush2.bf16.msra.mxu0 0
        %2393 = vmatprep.subr.bf16.mxu0 0
        %2394 = vmatpush2.bf16.msra.mxu0 0
        %2395 = vmatprep.subr.bf16.mxu0 0
        %2396 = vmatpush2.bf16.msra.mxu0 0
        %2397 = vmatprep.subr.bf16.mxu0 0
        %2398 = vmatpush2.bf16.msra.mxu0 0
        %2399 = vmatprep.mubr.bf16.mxu0 0
        %2400 = vmatmul.mubr.bf16.gmra.mxu0 %v2362
        %v2401 = vpop.f32.mrf.mxu0
        %v2402 = vadd.f32 0.0, %v2401
        %v2403 = vpop.f32.mrf.mxu0
        %v2404 = vpop.f32.mrf.mxu0
        %v2405 = vpop.f32.mrf.mxu0
        %2406 = vdwg.mxu0
        %v2407 = vadd.f32 %v2305, %v2402
        %v2408 = vpack.c.bf16 %v1455, %v1455
        %v2409 = vpack.c.bf16 %v1619, %v1619
        %v2410 = vpack.c.bf16 %v1783, %v1783
        %2411 = vmatprep.subr.bf16.mxu0 0
        %2412 = vmatpush1.bf16.xpose.msra.mxu0 0
        %2413 = vmatprep.subr.bf16.mxu0 0
        %2414 = vmatpush1.bf16.xpose.msra.mxu0 0
        %2415 = vmatprep.subr.bf16.mxu0 0
        %2416 = vmatpush1.bf16.xpose.msra.mxu0 0
        %2417 = vmatprep.subr.bf16.mxu0 0
        %2418 = vmatpush1.bf16.xpose.msra.mxu0 0
        %2419 = vmatprep.subr.bf16.mxu0 0
        %2420 = vmatpush1.bf16.xpose.msra.mxu0 0
        %2421 = vmatprep.subr.bf16.mxu0 0
        %2422 = vmatpush1.bf16.xpose.msra.mxu0 0
        %2423 = vmatprep.subr.bf16.mxu0 0
        %2424 = vmatpush1.bf16.xpose.msra.mxu0 0
        %2425 = vmatprep.subr.bf16.mxu0 0
        %2426 = vmatpush1.bf16.xpose.msra.mxu0 %v2409
        %2427 = vmatprep.subr.bf16.mxu0 0
        %2428 = vmatpush2.bf16.xpose.msra.mxu0 0
        %2429 = vmatprep.subr.bf16.mxu0 0
        %2430 = vmatpush2.bf16.xpose.msra.mxu0 0
        %2431 = vmatprep.subr.bf16.mxu0 0
        %2432 = vmatpush2.bf16.xpose.msra.mxu0 0
        %2433 = vmatprep.subr.bf16.mxu0 0
        %2434 = vmatpush2.bf16.xpose.msra.mxu0 0
        %2435 = vmatprep.subr.bf16.mxu0 0
        %2436 = vmatpush2.bf16.xpose.msra.mxu0 0
        %2437 = vmatprep.subr.bf16.mxu0 0
        %2438 = vmatpush2.bf16.xpose.msra.mxu0 0
        %2439 = vmatprep.subr.bf16.mxu0 0
        %2440 = vmatpush2.bf16.xpose.msra.mxu0 0
        %2441 = vmatprep.subr.bf16.mxu0 0
        %2442 = vmatpush2.bf16.xpose.msra.mxu0 0
        %2443 = vmatprep.mubr.bf16.mxu0 0
        %2444 = vmatmul.mubr.bf16.gmra.mxu0 %v2408
        %v2445 = vpop.f32.mrf.mxu0
        %v2446 = vadd.f32 %v1794, %v2445
        %v2447 = vpop.f32.mrf.mxu0
        %v2448 = vpop.f32.mrf.mxu0
        %v2449 = vpop.f32.mrf.mxu0
        %2450 = vdwg.mxu0
        %v2451 = vsel %vm1839, %v2446, -inf
        %2452 = vmax.xlane.f32.xlu0 %v2451
        %v2453 = vpop.xlane.xlu0 %2452
        %v2454 = vsub.f32 %v2446, %v2453
        %v2455 = vmul.f32 %v2454, 1.442695
        %v2456 = vpow.pop %v2455
        %v2457 = vsel %vm1839, %v2456, 0.0
        %2458 = vadd.xlane.f32.xlu0 %v2457
        %v2459 = vpop.xlane.xlu0 %2458
        %v2460 = vrcp.pop %v2459
        %v2461 = vmul.f32 %v2456, %v2460
        %v2462 = vpack.c.bf16 %v2461, %v2461
        %v2464 = vsel %vm1839, %v2462, 0
        %v2467 = vsel %vm1910, %v2410, 0
        %2469 = vmatprep.subr.bf16.mxu0 0
        %2470 = vmatpush1.bf16.msra.mxu0 0
        %2471 = vmatprep.subr.bf16.mxu0 0
        %2472 = vmatpush1.bf16.msra.mxu0 0
        %2473 = vmatprep.subr.bf16.mxu0 0
        %2474 = vmatpush1.bf16.msra.mxu0 0
        %2475 = vmatprep.subr.bf16.mxu0 0
        %2476 = vmatpush1.bf16.msra.mxu0 0
        %2477 = vmatprep.subr.bf16.mxu0 0
        %2478 = vmatpush1.bf16.msra.mxu0 0
        %2479 = vmatprep.subr.bf16.mxu0 0
        %2480 = vmatpush1.bf16.msra.mxu0 0
        %2481 = vmatprep.subr.bf16.mxu0 0
        %2482 = vmatpush1.bf16.msra.mxu0 0
        %2483 = vmatprep.subr.bf16.mxu0 0
        %2484 = vmatpush1.bf16.msra.mxu0 %v2467
        %2485 = vmatprep.subr.bf16.mxu0 0
        %2486 = vmatpush2.bf16.msra.mxu0 0
        %2487 = vmatprep.subr.bf16.mxu0 0
        %2488 = vmatpush2.bf16.msra.mxu0 0
        %2489 = vmatprep.subr.bf16.mxu0 0
        %2490 = vmatpush2.bf16.msra.mxu0 0
        %2491 = vmatprep.subr.bf16.mxu0 0
        %2492 = vmatpush2.bf16.msra.mxu0 0
        %2493 = vmatprep.subr.bf16.mxu0 0
        %2494 = vmatpush2.bf16.msra.mxu0 0
        %2495 = vmatprep.subr.bf16.mxu0 0
        %2496 = vmatpush2.bf16.msra.mxu0 0
        %2497 = vmatprep.subr.bf16.mxu0 0
        %2498 = vmatpush2.bf16.msra.mxu0 0
        %2499 = vmatprep.subr.bf16.mxu0 0
        %2500 = vmatpush2.bf16.msra.mxu0 0
        %2501 = vmatprep.mubr.bf16.mxu0 0
        %2502 = vmatmul.mubr.bf16.gmra.mxu0 %v2464
        %v2503 = vpop.f32.mrf.mxu0
        %v2504 = vadd.f32 0.0, %v2503
        %v2505 = vpop.f32.mrf.mxu0
        %v2506 = vpop.f32.mrf.mxu0
        %v2507 = vpop.f32.mrf.mxu0
        %2508 = vdwg.mxu0
        %v2509 = vadd.f32 %v2407, %v2504
        %v2510 = vpack.c.bf16 %v1457, %v1457
        %v2511 = vpack.c.bf16 %v1621, %v1621
        %v2512 = vpack.c.bf16 %v1785, %v1785
        %2513 = vmatprep.subr.bf16.mxu0 0
        %2514 = vmatpush1.bf16.xpose.msra.mxu0 0
        %2515 = vmatprep.subr.bf16.mxu0 0
        %2516 = vmatpush1.bf16.xpose.msra.mxu0 0
        %2517 = vmatprep.subr.bf16.mxu0 0
        %2518 = vmatpush1.bf16.xpose.msra.mxu0 0
        %2519 = vmatprep.subr.bf16.mxu0 0
        %2520 = vmatpush1.bf16.xpose.msra.mxu0 0
        %2521 = vmatprep.subr.bf16.mxu0 0
        %2522 = vmatpush1.bf16.xpose.msra.mxu0 0
        %2523 = vmatprep.subr.bf16.mxu0 0
        %2524 = vmatpush1.bf16.xpose.msra.mxu0 0
        %2525 = vmatprep.subr.bf16.mxu0 0
        %2526 = vmatpush1.bf16.xpose.msra.mxu0 0
        %2527 = vmatprep.subr.bf16.mxu0 0
        %2528 = vmatpush1.bf16.xpose.msra.mxu0 %v2511
        %2529 = vmatprep.subr.bf16.mxu0 0
        %2530 = vmatpush2.bf16.xpose.msra.mxu0 0
        %2531 = vmatprep.subr.bf16.mxu0 0
        %2532 = vmatpush2.bf16.xpose.msra.mxu0 0
        %2533 = vmatprep.subr.bf16.mxu0 0
        %2534 = vmatpush2.bf16.xpose.msra.mxu0 0
        %2535 = vmatprep.subr.bf16.mxu0 0
        %2536 = vmatpush2.bf16.xpose.msra.mxu0 0
        %2537 = vmatprep.subr.bf16.mxu0 0
        %2538 = vmatpush2.bf16.xpose.msra.mxu0 0
        %2539 = vmatprep.subr.bf16.mxu0 0
        %2540 = vmatpush2.bf16.xpose.msra.mxu0 0
        %2541 = vmatprep.subr.bf16.mxu0 0
        %2542 = vmatpush2.bf16.xpose.msra.mxu0 0
        %2543 = vmatprep.subr.bf16.mxu0 0
        %2544 = vmatpush2.bf16.xpose.msra.mxu0 0
        %2545 = vmatprep.mubr.bf16.mxu0 0
        %2546 = vmatmul.mubr.bf16.gmra.mxu0 %v2510
        %v2547 = vpop.f32.mrf.mxu0
        %v2548 = vadd.f32 %v1794, %v2547
        %v2549 = vpop.f32.mrf.mxu0
        %v2550 = vpop.f32.mrf.mxu0
        %v2551 = vpop.f32.mrf.mxu0
        %2552 = vdwg.mxu0
        %v2553 = vsel %vm1839, %v2548, -inf
        %2554 = vmax.xlane.f32.xlu0 %v2553
        %v2555 = vpop.xlane.xlu0 %2554
        %v2556 = vsub.f32 %v2548, %v2555
        %v2557 = vmul.f32 %v2556, 1.442695
        %v2558 = vpow.pop %v2557
        %v2559 = vsel %vm1839, %v2558, 0.0
        %2560 = vadd.xlane.f32.xlu0 %v2559
        %v2561 = vpop.xlane.xlu0 %2560
        %v2562 = vrcp.pop %v2561
        %v2563 = vmul.f32 %v2558, %v2562
        %v2564 = vpack.c.bf16 %v2563, %v2563
        %v2566 = vsel %vm1839, %v2564, 0
        %v2569 = vsel %vm1910, %v2512, 0
        %2571 = vmatprep.subr.bf16.mxu0 0
        %2572 = vmatpush1.bf16.msra.mxu0 0
        %2573 = vmatprep.subr.bf16.mxu0 0
        %2574 = vmatpush1.bf16.msra.mxu0 0
        %2575 = vmatprep.subr.bf16.mxu0 0
        %2576 = vmatpush1.bf16.msra.mxu0 0
        %2577 = vmatprep.subr.bf16.mxu0 0
        %2578 = vmatpush1.bf16.msra.mxu0 0
        %2579 = vmatprep.subr.bf16.mxu0 0
        %2580 = vmatpush1.bf16.msra.mxu0 0
        %2581 = vmatprep.subr.bf16.mxu0 0
        %2582 = vmatpush1.bf16.msra.mxu0 0
        %2583 = vmatprep.subr.bf16.mxu0 0
        %2584 = vmatpush1.bf16.msra.mxu0 0
        %2585 = vmatprep.subr.bf16.mxu0 0
        %2586 = vmatpush1.bf16.msra.mxu0 %v2569
        %2587 = vmatprep.subr.bf16.mxu0 0
        %2588 = vmatpush2.bf16.msra.mxu0 0
        %2589 = vmatprep.subr.bf16.mxu0 0
        %2590 = vmatpush2.bf16.msra.mxu0 0
        %2591 = vmatprep.subr.bf16.mxu0 0
        %2592 = vmatpush2.bf16.msra.mxu0 0
        %2593 = vmatprep.subr.bf16.mxu0 0
        %2594 = vmatpush2.bf16.msra.mxu0 0
        %2595 = vmatprep.subr.bf16.mxu0 0
        %2596 = vmatpush2.bf16.msra.mxu0 0
        %2597 = vmatprep.subr.bf16.mxu0 0
        %2598 = vmatpush2.bf16.msra.mxu0 0
        %2599 = vmatprep.subr.bf16.mxu0 0
        %2600 = vmatpush2.bf16.msra.mxu0 0
        %2601 = vmatprep.subr.bf16.mxu0 0
        %2602 = vmatpush2.bf16.msra.mxu0 0
        %2603 = vmatprep.mubr.bf16.mxu0 0
        %2604 = vmatmul.mubr.bf16.gmra.mxu0 %v2566
        %v2605 = vpop.f32.mrf.mxu0
        %v2606 = vadd.f32 0.0, %v2605
        %v2607 = vpop.f32.mrf.mxu0
        %v2608 = vpop.f32.mrf.mxu0
        %v2609 = vpop.f32.mrf.mxu0
        %2610 = vdwg.mxu0
        %v2611 = vadd.f32 %v2509, %v2606
        %v2612 = vld [vmem:[%s4] sm:$0x1]
        %v2614 = vlaneseq
        %v2615 = vshrl.u32 %v2614, 7
        %v2616 = vsub.s32 0, %v2615
        %v2617 = vrot.slane %v2612, %v2616
        %v2619 = vadd.f32 %v2611, %v2617
        %2620 = vst.msk [vmem:[%s300] sm:$0xff] %vm1293, %v2619
        %s2621 = sand.u32 %s149, 1
        %s2622 = scalar_lea.sflag [#allocation4], %s2621
        %s2623 = sand.u32 %s149, 1
        %s2624 = smul.addr %s2623, 8
        %s2625 = scalar_lea.vmem [#allocation10], %s2624
        // Predicated region
        $region57: #{tpu_custom_call.1} parent=39 // pred_check
          %p2626 = pneg %p159
        $region58: #{tpu_custom_call.1} parent=39 // pred_check_branch
          %2628 = sbr.rel (%p2626) target = $region60
        $region59: #{tpu_custom_call.1} parent=39 // pred_region
          %s2630 = ssub.s32 128, 128
          %2631 = vsyncadd %s2622, %s2630
          %s2632 = smul.addr %s26, 128
          %s2633 = scalar_lea.hbm %s5, %s2632
          %s2635 = sshll.u32 %s2625, 4
          %s2636 = int_to_ptr.vmem [resolvable:$true] %s2635
          %2638 = dma.vmem_to_hbm [thread:$0]  %s2636, 128, %s2633, %s2622
        $region60: #{tpu_custom_call.1} parent=39 // pred_fallthru
          _
      $region40: #{tpu_custom_call.1} parent=5 // pred_fallthru
        _
      %p2639 = scmp.le.s32.totalorder 2, %s21
      // Predicated region
      $region61: #{tpu_custom_call.1} parent=5 // pred_check
        %p2640 = pneg %p2639
      $region62: #{tpu_custom_call.1} parent=5 // pred_check_branch
        %2642 = sbr.rel (%p2640) target = $region64
      $region63: #{tpu_custom_call.1} parent=5 // pred_region
        %s2643 = ssub.s32 %s21, 2
        // Predicated region
        $region65: #{tpu_custom_call.1} parent=63 // pred_check
          %p2644 = pneg %p165
        $region66: #{tpu_custom_call.1} parent=63 // pred_check_branch
          %2646 = sbr.rel (%p2644) target = $region68
        $region67: #{tpu_custom_call.1} parent=63 // pred_region
          %s2647 = sand.u32 %s150, 1
          %s2648 = scalar_lea.sflag [#allocation4], %s2647
          %s2649 = sand.u32 %s150, 1
          %s2650 = smul.addr %s2649, 8
          %s2651 = scalar_lea.vmem [#allocation10], %s2650
          %2652 = dma.done %s2648, 128
        $region68: #{tpu_custom_call.1} parent=63 // pred_fallthru
          _
      $region64: #{tpu_custom_call.1} parent=5 // pred_fallthru
        _
    $region6: #{tpu_custom_call.1} parent=1 // loop_footer
      %s25 = sadd.s32 1, %s21
    $region7: #{tpu_custom_call.1} parent=1 // loop_footer_branch
      %20 = sbr.rel target = $region3
    $region8: #{tpu_custom_call.1} parent=1 // loop_exit
      _
    %2653 = vsyncpa [#allocation3], 1
    %s2654 = scalar_lea.sflag [#allocation3], 1
    %2655 = vsyncpa %s2654, 1
    %2656 = vsyncpa [#allocation6], 1
    %s2657 = scalar_lea.sflag [#allocation6], 1
    %2658 = vsyncpa %s2657, 1
    %2659 = vsyncpa [#allocation9], 1
    %2660 = vsyncpa [#allocation4], 1
    %s2661 = scalar_lea.sflag [#allocation4], 1
    %2662 = vsyncpa %s2661, 1

</llo_original>
